<compile_context>
chip_gen: v6e
topology: v6e:2x2x1
jax: 0.10.0
libtpu: 0.0.40
codegen_flags: <defaults>
</compile_context>

<pallas_src>
import functools

import numpy as np
import jax
import jax.numpy as jnp
from jax.experimental import pallas as pl
from jax.experimental.pallas import tpu as pltpu


# ----------------------------------------------------------------------------
# Kernel: one grid step = TB tasks x N support rows
# ----------------------------------------------------------------------------
def _reduction_kernel(x_ref, w_emb_ref, b_emb_ref, w_red_ref, coef_ref,
                      col_ref, br_ref, out_ref):
    """
    x_ref    : (TB*N, F) f32  flattened support inputs for this task chunk
    w_emb_ref: (F, D)    f32  embedding weight (Linear weight, transposed)
    b_emb_ref: (1, D)    f32  embedding bias
    w_red_ref: (1, D)    f32  reduction weight, row layout (lane-dense)
    coef_ref : (TB*N, 1) f32  closed-form fold coefficient per support row
    col_ref  : (TB*N, 1) i32  task column (within this chunk) of each row
    br_ref   : (1,)      f32  reduction bias b_r (SMEM scalar)
    out_ref  : (1, TB)   f32  per-task fold results, tasks in the lane axis
    """
    rows = x_ref.shape[0]
    tb = out_ref.shape[1]

    # Embedding: relu(x @ W + b).  rows = TB*N >= 256 fills the MXU height
    # (256 on v6e/v7x, several full 128-row passes on v5e); f32 accumulate.
    e = jnp.dot(x_ref[...], w_emb_ref[...], preferred_element_type=jnp.float32)
    e = jnp.maximum(e + b_emb_ref[...], 0.0)                        # (rows, D)

    # Per-row reduction input  z_r = e_r . w_red  -- VPU multiply + XLU lane
    # reduce (kept off the MXU: the XLU slot is otherwise idle here).
    z = jnp.sum(e * w_red_ref[...], axis=1, keepdims=True)          # (rows, 1)

    # Closed-form serial fold: each masked row contributes coef_r * (z_r + b_r)
    # with coef_r = mask_r * w_r^(#masked rows after r), built wrapper-side.
    contrib = coef_ref[...] * (z + br_ref[0])                       # (rows, 1)

    # Scatter row contributions into their task's *lane* via an iota one-hot,
    # then reduce over sublanes.  The (1, TB) result is lane-dense, so the
    # output store / writeback is a full unmasked vector store (no vst.msk).
    cols = jax.lax.broadcasted_iota(jnp.int32, (rows, tb), 1)
    onehot = (col_ref[...] == cols).astype(jnp.float32)             # (rows, TB)
    out_ref[...] = jnp.sum(contrib * onehot, axis=0, keepdims=True)


def _batched_pallas_call(x, w_emb, b_emb, w_red_row, coef, col_of_row, b_r,
                         *, num_tasks, tasks_per_step):
    rows, feat = x.shape
    d = w_emb.shape[1]
    num_steps = num_tasks // tasks_per_step
    rows_per_step = rows // num_steps

    flops = 2 * rows * feat * d + 4 * rows * d + 3 * rows * tasks_per_step
    bytes_accessed = 4 * (x.size + w_emb.size + b_emb.size + w_red_row.size
                          + coef.size + col_of_row.size + num_tasks)

    return pl.pallas_call(
        _reduction_kernel,
        out_shape=jax.ShapeDtypeStruct((1, num_tasks), jnp.float32),
        grid_spec=pltpu.PrefetchScalarGridSpec(
            num_scalar_prefetch=0,
            grid=(num_steps,),
            in_specs=[
                pl.BlockSpec((rows_per_step, feat), lambda i: (i, 0)),  # x
                pl.BlockSpec((feat, d), lambda i: (0, 0)),              # W_emb
                pl.BlockSpec((1, d), lambda i: (0, 0)),                 # b_emb
                pl.BlockSpec((1, d), lambda i: (0, 0)),                 # w_red
                pl.BlockSpec((rows_per_step, 1), lambda i: (i, 0)),     # coef
                pl.BlockSpec((rows_per_step, 1), lambda i: (i, 0)),     # col id
                pl.BlockSpec(memory_space=pltpu.MemorySpace.SMEM),      # b_r
            ],
            out_specs=pl.BlockSpec((1, tasks_per_step), lambda i: (0, i)),
        ),
        compiler_params=pltpu.CompilerParams(
            # Distinct output blocks per step -> safe to mark parallel; on v7x
            # the two TensorCores split the task chunks.
            dimension_semantics=("parallel",),
            # Explicit VMEM budget: usage here is ~4 MiB, well inside the 16
            # MiB (v5e) / 32 MiB (v6e, v7x) scoped defaults and v7x's 64 MiB
            # physical per-core VMEM.
            vmem_limit_bytes=32 * 1024 * 1024,
        ),
        cost_estimate=pl.CostEstimate(flops=flops, transcendentals=0,
                                      bytes_accessed=bytes_accessed),
    )(x, w_emb, b_emb, w_red_row, coef, col_of_row, b_r)


# ----------------------------------------------------------------------------
# Jitted device-side wrapper (flatten, coefficients, kernel, result scatter)
# ----------------------------------------------------------------------------
@functools.partial(jax.jit, static_argnames=("max_labels",))
def _forward_core(inputs, labels, targets, out_idx, w_emb, b_emb, w_red,
                  scalars, *, max_labels):
    num_tasks, n_support = labels.shape
    rows = num_tasks * n_support

    # Flatten NCHW support inputs inside the jit (no extra dispatch, no copy).
    x = inputs.reshape(rows, -1).astype(jnp.float32)

    w_r = scalars[0]
    b_r = scalars[1]

    # Closed-form fold coefficients (bug-faithful: only the last unique
    # label's mask is used):
    #   coef[b, j] = mask[b, j] * prod_{k > j} (mask[b, k] ? w_r : 1)
    # This tiny where/cumprod/flip/concat chain fuses inside this jit; no
    # per-op dispatch and no extra pallas launch is spent on it.
    mask = labels == targets[:, None]                               # (B, N)
    f = jnp.where(mask, w_r, jnp.float32(1.0))
    suffix_incl = jnp.cumprod(f[:, ::-1], axis=1)[:, ::-1]
    suffix_excl = jnp.concatenate(
        [suffix_incl[:, 1:], jnp.ones((num_tasks, 1), jnp.float32)], axis=1)
    coef = (mask.astype(jnp.float32) * suffix_excl).reshape(rows, 1)

    # Grid layout: TB tasks per grid step -> TB*N LHS rows per matmul and a
    # lane-dense (1, TB) output block (TB = 128 when the batch allows it).
    tasks_per_step = 128 if num_tasks % 128 == 0 else num_tasks
    col_of_row = ((jnp.arange(rows, dtype=jnp.int32) // n_support)
                  % tasks_per_step).reshape(rows, 1)

    out_row = _batched_pallas_call(
        x, w_emb, b_emb, w_red.reshape(1, -1), coef, col_of_row,
        b_r.reshape(1), num_tasks=num_tasks, tasks_per_step=tasks_per_step)

    per_task = out_row[0]                                           # (B,)
    # Scatter each task's scalar into slot (num_labels - 1) of its result row
    # (single vectorized scatter, still inside this jit).
    res = jnp.zeros((num_tasks, max_labels), jnp.float32)
    res = res.at[jnp.arange(num_tasks), out_idx].set(per_task)
    return res


# ----------------------------------------------------------------------------
# Public wrappers
# ----------------------------------------------------------------------------
def reduction_forward_batch(inputs, labels_host, params):
    """Batched Reduction.forward: row b of the returned matrix is the module's
    result vector for task b, zero-padded to the max label count.

    `labels_host` must be a host (numpy) array: the ordered-unique-label scan
    fixes each task's output length and is inherently host work, so it must
    not force a device->host sync of a device array.
    """
    labels_host = np.asarray(labels_host)
    num_tasks, n_support = labels_host.shape[:2]
    labels2d = labels_host.reshape(num_tasks, n_support, -1)[:, :, 0]
    labels2d = labels2d.astype(np.int32)

    targets = np.empty((num_tasks,), np.int32)
    num_labels = np.empty((num_tasks,), np.int32)
    for b in range(num_tasks):
        uniq = []
        for lab in labels2d[b].tolist():
            if lab not in uniq:
                uniq.append(lab)
        # As-written PyTorch control flow: only the LAST unique label's mask
        # survives the loop, and only result[num_labels - 1] is written.
        targets[b] = uniq[-1]
        num_labels[b] = len(uniq)
    out_idx = num_labels - 1
    max_labels = int(num_labels.max())

    res = _forward_core(inputs, jnp.asarray(labels2d), jnp.asarray(targets),
                        jnp.asarray(out_idx), params["w_emb"],
                        params["b_emb"], params["w_red"], params["scalars"],
                        max_labels=max_labels)
    return res, num_labels


def reduction_forward(task, params):
    """Single-task Reduction.forward(task); implemented as a batch of one."""
    inputs, labels = task
    res, num_labels = reduction_forward_batch(
        jnp.asarray(inputs)[None], np.asarray(labels)[None], params)
    return res[0, :int(num_labels[0])]


def reference_forward(task, params):
    """float64 NumPy replica of the PyTorch forward (indentation bug included)."""
    inputs, labels = task
    n = inputs.shape[0]
    x = np.asarray(inputs, np.float64).reshape(n, -1)
    w_emb = np.asarray(params["w_emb"], np.float64)
    b_emb = np.asarray(params["b_emb"], np.float64)
    w_red = np.asarray(params["w_red"], np.float64)
    w_r, b_r = np.asarray(params["scalars"], np.float64)

    e = np.maximum(x @ w_emb + b_emb, 0.0)

    labels_host = np.asarray(labels)[:, 0, 0]
    unique_labels = []
    for lab in labels_host.tolist():
        if lab not in unique_labels:
            unique_labels.append(lab)
    num_labels = len(unique_labels)

    result = np.zeros((num_labels,), np.float64)
    for idx, lab in enumerate(unique_labels):
        mask = labels_host == lab
    label_tensor = e[mask]
    for idy in range(label_tensor.shape[0]):
        result[idx] = w_r * result[idx] + label_tensor[idy] @ w_red[:, 0] + b_r
    return result


if __name__ == "__main__":
    key = jax.random.PRNGKey(0)
    kx, k1, k2, k3 = jax.random.split(key, 4)

    # Small per-task shapes (8 support examples of 4x8x8), batched over many
    # tiny tasks so the kernel is matmul-bound rather than dispatch-bound.
    TASKS, N_SUP, C, H, W = 256, 8, 4, 8, 8
    F = C * H * W        # 256 flattened features
    D = 128              # embedding dim (lane-dense)

    inputs = jax.random.normal(kx, (TASKS, N_SUP, C, H, W), jnp.float32)
    # Labels live on the host: the unique-label pass must not touch the device.
    rng = np.random.default_rng(0)
    labels_host = rng.integers(0, 4, size=(TASKS, N_SUP, 1, 1)).astype(np.int32)

    params = {
        "w_emb": 0.05 * jax.random.normal(k1, (F, D), jnp.float32),  # Linear w^T
        "b_emb": 0.05 * jax.random.normal(k2, (1, D), jnp.float32),
        "w_red": 0.05 * jax.random.normal(k3, (D, 1), jnp.float32),
        "scalars": jnp.asarray([0.9, 0.1], jnp.float32),             # [w_r, b_r]
    }

    # Batched path (the optimized one).
    results, num_labels = reduction_forward_batch(inputs, labels_host, params)
    results = jax.block_until_ready(results)

    # Spot-check a handful of tasks against the float64 reference.
    inputs_host = np.asarray(inputs)
    for t in range(0, TASKS, 41):
        ref = reference_forward((inputs_host[t], labels_host[t]), params)
        got = np.asarray(results[t, :num_labels[t]])
        assert got.shape == ref.shape and got.dtype == np.float32
        assert np.allclose(got, ref, rtol=1e-3, atol=1e-3), (t, got, ref)

    # Single-task path keeps the original forward(task) signature.
    single = jax.block_until_ready(
        reduction_forward((inputs_host[0], labels_host[0]), params))
    ref0 = reference_forward((inputs_host[0], labels_host[0]), params)
    assert np.allclose(np.asarray(single), ref0, rtol=1e-3, atol=1e-3)

    print("KERNEL_OK")
</pallas_src>

<mosaic_0001>
module attributes {stable_mosaic.version = 11 : i64} {
  func.func @_reduction_kernel(%arg0: i32, %arg1: memref<1024x256xf32, #tpu.memory_space<vmem>>, %arg2: memref<256x128xf32, #tpu.memory_space<vmem>>, %arg3: memref<1x128xf32, #tpu.memory_space<vmem>>, %arg4: memref<1x128xf32, #tpu.memory_space<vmem>>, %arg5: memref<1024x1xf32, #tpu.memory_space<vmem>>, %arg6: memref<1024x1xi32, #tpu.memory_space<vmem>>, %arg7: memref<1xf32, #tpu.memory_space<smem>>, %arg8: memref<1x128xf32, #tpu.memory_space<vmem>>) attributes {dimension_semantics = [#tpu.dimension_semantics<parallel>], iteration_bounds = array<i64: 2>, scalar_prefetch = 0 : i64, scratch_operands = 0 : i64, tpu.core_type = #tpu.core_type<tc>, window_params = [{transform_indices = @transform_0, window_bounds = array<i64: 1024, 256>}, {pipeline_mode = #tpu.pipeline_mode<synchronous>, transform_indices = @transform_1, window_bounds = array<i64: 256, 128>}, {pipeline_mode = #tpu.pipeline_mode<synchronous>, transform_indices = @transform_2, window_bounds = array<i64: 1, 128>}, {pipeline_mode = #tpu.pipeline_mode<synchronous>, transform_indices = @transform_3, window_bounds = array<i64: 1, 128>}, {transform_indices = @transform_4, window_bounds = array<i64: 1024, 1>}, {transform_indices = @transform_5, window_bounds = array<i64: 1024, 1>}, {transform_indices = @transform_6, window_bounds = array<i64: 1>}, {transform_indices = @transform_7, window_bounds = array<i64: 1, 128>}]} {
    %c0 = arith.constant 0 : index
    %c0_0 = arith.constant 0 : index
    %0 = vector.load %arg1[%c0, %c0_0] : memref<1024x256xf32, #tpu.memory_space<vmem>>, vector<1024x256xf32>
    %c0_1 = arith.constant 0 : index
    %c0_2 = arith.constant 0 : index
    %1 = vector.load %arg2[%c0_1, %c0_2] : memref<256x128xf32, #tpu.memory_space<vmem>>, vector<256x128xf32>
    %cst = arith.constant dense<0.000000e+00> : vector<1024x128xf32>
    %2 = tpu.matmul %0, %1, %cst {dimension_numbers = #tpu.dot_dimension_numbers<[1], [0], [0], [1], [0, 0, 1, 1], [], []>} : vector<1024x256xf32>, vector<256x128xf32>, vector<1024x128xf32> -> vector<1024x128xf32>
    %c0_3 = arith.constant 0 : index
    %c0_4 = arith.constant 0 : index
    %3 = vector.load %arg3[%c0_3, %c0_4] : memref<1x128xf32, #tpu.memory_space<vmem>>, vector<1x128xf32>
    %4 = vector.broadcast %3 : vector<1x128xf32> to vector<1024x128xf32>
    %5 = arith.addf %2, %4 : vector<1024x128xf32>
    %cst_5 = arith.constant 0.000000e+00 : f32
    %6 = vector.broadcast %cst_5 : f32 to vector<1024x128xf32>
    %7 = arith.maximumf %5, %6 : vector<1024x128xf32>
    %c0_6 = arith.constant 0 : index
    %c0_7 = arith.constant 0 : index
    %8 = vector.load %arg4[%c0_6, %c0_7] : memref<1x128xf32, #tpu.memory_space<vmem>>, vector<1x128xf32>
    %9 = vector.broadcast %8 : vector<1x128xf32> to vector<1024x128xf32>
    %10 = arith.mulf %7, %9 : vector<1024x128xf32>
    %cst_8 = arith.constant dense<0.000000e+00> : vector<1024xf32>
    %11 = vector.multi_reduction <add>, %10, %cst_8 [1] : vector<1024x128xf32> to vector<1024xf32>
    %12 = vector.shape_cast %11 : vector<1024xf32> to vector<1024x1xf32>
    %c0_9 = arith.constant 0 : index
    %c0_10 = arith.constant 0 : index
    %13 = vector.load %arg5[%c0_9, %c0_10] : memref<1024x1xf32, #tpu.memory_space<vmem>>, vector<1024x1xf32>
    %c0_11 = arith.constant 0 : index
    %14 = memref.load %arg7[%c0_11] : memref<1xf32, #tpu.memory_space<smem>>
    %15 = vector.broadcast %14 : f32 to vector<1024x1xf32>
    %16 = arith.addf %12, %15 : vector<1024x1xf32>
    %17 = arith.mulf %13, %16 : vector<1024x1xf32>
    %18 = tpu.iota {dimensions = array<i32: 1>} : vector<1024x128xi32>
    %c0_12 = arith.constant 0 : index
    %c0_13 = arith.constant 0 : index
    %19 = vector.load %arg6[%c0_12, %c0_13] : memref<1024x1xi32, #tpu.memory_space<vmem>>, vector<1024x1xi32>
    %20 = vector.broadcast %19 : vector<1024x1xi32> to vector<1024x128xi32>
    %21 = arith.cmpi eq, %20, %18 : vector<1024x128xi32>
    %22 = arith.extui %21 : vector<1024x128xi1> to vector<1024x128xi32>
    %23 = arith.sitofp %22 : vector<1024x128xi32> to vector<1024x128xf32>
    %24 = vector.broadcast %17 : vector<1024x1xf32> to vector<1024x128xf32>
    %25 = arith.mulf %24, %23 : vector<1024x128xf32>
    %cst_14 = arith.constant dense<0.000000e+00> : vector<128xf32>
    %26 = vector.multi_reduction <add>, %25, %cst_14 [0] : vector<1024x128xf32> to vector<128xf32>
    %27 = vector.shape_cast %26 : vector<128xf32> to vector<1x128xf32>
    %c0_15 = arith.constant 0 : index
    %c0_16 = arith.constant 0 : index
    %28 = vector.load %arg8[%c0_15, %c0_16] : memref<1x128xf32, #tpu.memory_space<vmem>>, vector<1x128xf32>
    tpu.vector_store %arg8[%c0_15, %c0_16], %27 {strides = array<i32>} : memref<1x128xf32, #tpu.memory_space<vmem>>, vector<1x128xf32>,
    return
  }
  func.func @transform_0(%arg0: i32) -> (i32, i32) {
    %c0_i32 = arith.constant 0 : i32
    %c0_i32_0 = arith.constant 0 : i32
    return %arg0, %c0_i32 : i32, i32
  }
  func.func @transform_1(%arg0: i32) -> (i32, i32) {
    %c0_i32 = arith.constant 0 : i32
    %c0_i32_0 = arith.constant 0 : i32
    %c0_i32_1 = arith.constant 0 : i32
    return %c0_i32, %c0_i32_0 : i32, i32
  }
  func.func @transform_2(%arg0: i32) -> (i32, i32) {
    %c0_i32 = arith.constant 0 : i32
    %c0_i32_0 = arith.constant 0 : i32
    %c0_i32_1 = arith.constant 0 : i32
    return %c0_i32, %c0_i32_0 : i32, i32
  }
  func.func @transform_3(%arg0: i32) -> (i32, i32) {
    %c0_i32 = arith.constant 0 : i32
    %c0_i32_0 = arith.constant 0 : i32
    %c0_i32_1 = arith.constant 0 : i32
    return %c0_i32, %c0_i32_0 : i32, i32
  }
  func.func @transform_4(%arg0: i32) -> (i32, i32) {
    %c0_i32 = arith.constant 0 : i32
    %c0_i32_0 = arith.constant 0 : i32
    return %arg0, %c0_i32 : i32, i32
  }
  func.func @transform_5(%arg0: i32) -> (i32, i32) {
    %c0_i32 = arith.constant 0 : i32
    %c0_i32_0 = arith.constant 0 : i32
    return %arg0, %c0_i32 : i32, i32
  }
  func.func @transform_6(%arg0: i32) -> i32 {
    %c0_i32 = arith.constant 0 : i32
    %c0_i32_0 = arith.constant 0 : i32
    return %c0_i32 : i32
  }
  func.func @transform_7(%arg0: i32) -> (i32, i32) {
    %c0_i32 = arith.constant 0 : i32
    %c0_i32_0 = arith.constant 0 : i32
    return %c0_i32, %arg0 : i32, i32
  }
}

</mosaic_0001>

<llo_original>
// kernel: reverse
$region0: #{reverse}
  %s0 = inlined_call_operand.vmem [shape: f32[256,7], index: 0, kind: input, shape index: {}]
  %s1 = inlined_call_operand.vmem [shape: f32[256,7], index: 1, kind: output, shape index: {}]
  $region1: #{reverse} parent=0
    #allocation0 [shape = 'u8[16384]{0}', space=vmem, size = 0x4000, scoped, tag = 'operand span for operand 0']
    #allocation1 [shape = 'u8[8192]{0}', space=vmem, size = 0x2000, scoped, tag = 'operand span for operand 1']
    loop: start=0, step=1, limit=4
    $region2: #{reverse} parent=1 // loop_pre_header
      _
    $region3: #{reverse} parent=1 // loop_header
      %s3 = sphi 0, %s7
      %p4 = scmp.ge.s32.totalorder %s3, 4
      %s10 = sphi 0, %s22
      %s11 = sphi 0, %s18
      %s12 = sphi 0, %s10
      %s13 = sphi 0, %s11
      %s14 = sphi 0, %s12
      %s15 = sphi 0, %s13
    $region4: #{reverse} parent=1 // loop_header_branch
      %6 = sbr.rel (%p4) target = $region8
    $region5: #{reverse} parent=1 // loop_body
      %s8 = ssub.s32 %s3, 1
      %s9 = ssub.s32 %s3, 2
      %s16 = sadd.s32 1, %s11
      %p17 = scmp.ge.s32.totalorder %s16, 2
      %s18 = scalar_select %p17, 0, %s16
      %s19 = sadd.s32 1, %s10
      %s20 = scalar_select %p17, %s19, %s10
      %p21 = scmp.ge.s32.totalorder %s20, 1
      %s22 = scalar_select %p21, 0, %s20
      %p23 = scmp.le.s32.totalorder 1, %s3
      %p24 = scmp.lt.s32.totalorder %s3, 3
      %p25 = pnand %p23, %p24
      %p26 = pneg %p25
      // Predicated region
      $region9: #{reverse} parent=5 // pred_check
        _
      $region10: #{reverse} parent=5 // pred_check_branch
        %28 = sbr.rel (%p25) target = $region12
      $region11: #{reverse} parent=5 // pred_region
        %s29 = ssub.s32 %s3, 1
      $region12: #{reverse} parent=5 // pred_fallthru
        _
      %p30 = scmp.lt.s32.totalorder %s3, 2
      // Predicated region
      $region13: #{reverse} parent=5 // pred_check
        %p31 = pneg %p30
      $region14: #{reverse} parent=5 // pred_check_branch
        %33 = sbr.rel (%p31) target = $region16
      $region15: #{reverse} parent=5 // pred_region
        %s34 = sand.u32 %s3, 1
        %s35 = sand.u32 %s3, 1
        %s36 = smul.addr %s35, 16
        %s37 = scalar_lea.vmem [#allocation0], %s36
        %s38 = ssub.s32 0, %s10
        %s39 = ssub.s32 1, %s38
        %s40 = ssub.s32 2, %s39
        %s41 = smul.u32 128, %s40
        %p42 = scmp.ne.s32.totalorder 0, %s41
        %s43 = sadd.s32 %s38, %s39
        %s44 = ssub.s32 %s43, 1
        %s45 = smul.addr %s44, 2
        %s46 = sadd.s32 %s11, %s45
        %s47 = smul.addr %s46, 8
        %s48 = scalar_lea.vmem %s0, %s47
        %s49 = smul.addr %s39, 8
        %s50 = scalar_lea.vmem %s37, %s49 [#allocation0]
        %s51 = ssub.s32 2, %s39
        // Predicated region
        $region17: #{reverse} parent=15 // pred_check
          %p52 = pneg %p42
        $region18: #{reverse} parent=15 // pred_check_branch
          %54 = sbr.rel (%p52) target = $region20
        $region19: #{reverse} parent=15 // pred_region
          // Predicated region
          $region21: #{reverse} parent=19 // pred_check
            _
          $region22: #{reverse} parent=19 // pred_check_branch
            %56 = sbr.rel (0) target = $region24
          $region23: #{reverse} parent=19 // pred_region
            // Predicated region
            $region36: #{reverse} parent=23 // pred_check
              _
            $region37: #{reverse} parent=23 // pred_check_branch
              %80 = sbr.rel (0) target = $region39
            $region38: #{reverse} parent=23 // pred_region
              // While loop
              $region40: #{reverse} parent=38 // loop_pre_header
                _
              $region41: #{reverse} parent=38 // loop_header
                %s82 = sphi 0, %s84
                %p83 = scmp.ge.s32.totalorder %s82, %s51
                %s87 = sphi 0, %s94
                %s88 = sphi %s48, %s97
                %s89 = sphi %s50, %s98
              $region42: #{reverse} parent=38 // loop_header_branch
                %86 = sbr.rel (%p83) target = $region46
              $region43: #{reverse} parent=38 // loop_body
                %v90 = vld [vmem:[%s88] sm:$0xff]
                %91 = vst [vmem:[%s89] sm:$0xff] %v90
                %s92 = sadd.s32 1, %s87
                %p93 = scmp.ge.s32.totalorder %s92, %s51
                %s94 = scalar_select %p93, 0, %s92
                %s95 = smul.u32 %s94, 16
                %s96 = smul.u32 %s94, 8
                %s97 = scalar_lea.vmem %s48, %s95
                %s98 = scalar_lea.vmem %s50, %s96 [#allocation0]
              $region44: #{reverse} parent=38 // loop_footer
                %s84 = sadd.s32 %s82, 1
              $region45: #{reverse} parent=38 // loop_footer_branch
                %81 = sbr.rel target = $region41
              $region46: #{reverse} parent=38 // loop_exit
                _
            $region39: #{reverse} parent=23 // pred_fallthru
              _
            // Predicated region
            $region47: #{reverse} parent=23 // pred_check
              _
            $region48: #{reverse} parent=23 // pred_check_branch
              %100 = sbr.rel target = $region50
            $region49: #{reverse} parent=23 // pred_region
              _
            $region50: #{reverse} parent=23 // pred_fallthru
              _
          $region24: #{reverse} parent=19 // pred_fallthru
            _
          // Predicated region
          $region25: #{reverse} parent=19 // pred_check
            _
          $region26: #{reverse} parent=19 // pred_check_branch
            %58 = sbr.rel target = $region28
          $region27: #{reverse} parent=19 // pred_region
            %s60 = ssub.s32 256, 1
            // While loop
            $region29: #{reverse} parent=27 // loop_pre_header
              _
            $region30: #{reverse} parent=27 // loop_header
              %s62 = sphi 0, %s64
              %p63 = scmp.ge.s32.totalorder %s62, %s51
              %s67 = sphi 0, %s74
              %s68 = sphi %s48, %s77
              %s69 = sphi %s50, %s78
            $region31: #{reverse} parent=27 // loop_header_branch
              %66 = sbr.rel (%p63) target = $region35
            $region32: #{reverse} parent=27 // loop_body
              %v70 = vld [vmem:[%s68] sm:%s60]
              %71 = vst [vmem:[%s69] sm:%s60] %v70
              %s72 = sadd.s32 1, %s67
              %p73 = scmp.ge.s32.totalorder %s72, %s51
              %s74 = scalar_select %p73, 0, %s72
              %s75 = smul.u32 %s74, 16
              %s76 = smul.u32 %s74, 8
              %s77 = scalar_lea.vmem %s48, %s75
              %s78 = scalar_lea.vmem %s50, %s76 [#allocation0]
            $region33: #{reverse} parent=27 // loop_footer
              %s64 = sadd.s32 %s62, 1
            $region34: #{reverse} parent=27 // loop_footer_branch
              %61 = sbr.rel target = $region30
            $region35: #{reverse} parent=27 // loop_exit
              _
          $region28: #{reverse} parent=19 // pred_fallthru
            _
        $region20: #{reverse} parent=15 // pred_fallthru
          _
        %101 = vnop
      $region16: #{reverse} parent=5 // pred_fallthru
        _
      %p102 = scmp.le.s32.totalorder 1, %s3
      %p103 = scmp.lt.s32.totalorder %s3, 3
      %p104 = pnand %p102, %p103
      %p105 = pneg %p104
      // Predicated region
      $region51: #{reverse} parent=5 // pred_check
        _
      $region52: #{reverse} parent=5 // pred_check_branch
        %107 = sbr.rel (%p104) target = $region54
      $region53: #{reverse} parent=5 // pred_region
        %s108 = ssub.s32 %s3, 1
        %s109 = sand.u32 %s8, 1
        %s110 = sand.u32 %s8, 1
        %s111 = smul.addr %s110, 16
        %s112 = scalar_lea.vmem [#allocation0], %s111
        %s113 = sand.u32 %s8, 1
        %s114 = sand.u32 %s8, 1
        %s115 = smul.addr %s114, 16
        %s116 = scalar_lea.vmem [#allocation0], %s115
        %s117 = sand.u32 %s8, 1
        %s118 = sand.u32 %s8, 1
        %s119 = smul.addr %s118, 8
        %s120 = scalar_lea.vmem [#allocation1], %s119
        %s121 = ssub.s32 0, %s12
        %s122 = ssub.s32 1, %s121
        %s123 = ssub.s32 2, %s122
        %s124 = smul.u32 128, %s123
        %s125 = scalar_lea.vmem %s112, 7 [#allocation0]
        %v126 = vld [vmem:[%s125] ss:$-1 sm:$0xff]
        %v127 = vrot.slane %v126, 1
        %128 = vst [vmem:[%s120] sm:$0xff] %v127
        %s129 = scalar_lea.vmem %s112, 8 [#allocation0]
        %s130 = scalar_lea.vmem %s129, 7 [#allocation0]
        %v131 = vld [vmem:[%s130] ss:$-1 sm:$0xff]
        %v132 = vrot.slane %v131, 1
        %v133 = vlaneseq
        %v134 = vshrl.u32 %v133, 7
        %vm135 = vcmp.lt.s32.totalorder %v134, 7
        %136 = vst.msk [vmem:[%s120] sm:$0xff] %vm135, %v132
        %s137 = sand.u32 %s8, 1
        %s138 = sand.u32 %s8, 1
        %s139 = smul.addr %s138, 8
        %s140 = scalar_lea.vmem [#allocation1], %s139
        %s141 = smul.addr %s12, 2
        %s142 = sadd.s32 %s13, %s141
        %s143 = smul.addr %s142, 8
        %s144 = scalar_lea.vmem %s1, %s143
        // Predicated region
        $region55: #{reverse} parent=53 // pred_check
          _
        $region56: #{reverse} parent=53 // pred_check_branch
          %146 = sbr.rel (0) target = $region58
        $region57: #{reverse} parent=53 // pred_region
          // Predicated region
          $region59: #{reverse} parent=57 // pred_check
            _
          $region60: #{reverse} parent=57 // pred_check_branch
            %148 = sbr.rel (0) target = $region62
          $region61: #{reverse} parent=57 // pred_region
            // Predicated region
            $region74: #{reverse} parent=61 // pred_check
              _
            $region75: #{reverse} parent=61 // pred_check_branch
              %164 = sbr.rel (0) target = $region77
            $region76: #{reverse} parent=61 // pred_region
              loop: start=0, step=1, limit=1
              $region78: #{reverse} parent=76 // loop_pre_header
                _
              $region79: #{reverse} parent=76 // loop_header
                %s166 = sphi 0, %s170
                %p167 = scmp.ge.s32.totalorder %s166, 1
                %s171 = sphi %s140, %s140
                %s172 = sphi %s144, %s144
              $region80: #{reverse} parent=76 // loop_header_branch
                %169 = sbr.rel (%p167) target = $region84
              $region81: #{reverse} parent=76 // loop_body
                %v173 = vld [vmem:[%s171] sm:$0xff]
                %174 = vst [vmem:[%s172] sm:$0xff] %v173
              $region82: #{reverse} parent=76 // loop_footer
                %s170 = sadd.s32 1, %s166
              $region83: #{reverse} parent=76 // loop_footer_branch
                %165 = sbr.rel target = $region79
              $region84: #{reverse} parent=76 // loop_exit
                _
            $region77: #{reverse} parent=61 // pred_fallthru
              _
            // Predicated region
            $region85: #{reverse} parent=61 // pred_check
              _
            $region86: #{reverse} parent=61 // pred_check_branch
              %176 = sbr.rel target = $region88
            $region87: #{reverse} parent=61 // pred_region
              _
            $region88: #{reverse} parent=61 // pred_fallthru
              _
          $region62: #{reverse} parent=57 // pred_fallthru
            _
          // Predicated region
          $region63: #{reverse} parent=57 // pred_check
            _
          $region64: #{reverse} parent=57 // pred_check_branch
            %150 = sbr.rel target = $region66
          $region65: #{reverse} parent=57 // pred_region
            %s152 = ssub.s32 256, 1
            loop: start=0, step=1, limit=1
            $region67: #{reverse} parent=65 // loop_pre_header
              _
            $region68: #{reverse} parent=65 // loop_header
              %s154 = sphi 0, %s158
              %p155 = scmp.ge.s32.totalorder %s154, 1
              %s159 = sphi %s140, %s140
              %s160 = sphi %s144, %s144
            $region69: #{reverse} parent=65 // loop_header_branch
              %157 = sbr.rel (%p155) target = $region73
            $region70: #{reverse} parent=65 // loop_body
              %v161 = vld [vmem:[%s159] sm:%s152]
              %162 = vst [vmem:[%s160] sm:%s152] %v161
            $region71: #{reverse} parent=65 // loop_footer
              %s158 = sadd.s32 1, %s154
            $region72: #{reverse} parent=65 // loop_footer_branch
              %153 = sbr.rel target = $region68
            $region73: #{reverse} parent=65 // loop_exit
              _
          $region66: #{reverse} parent=57 // pred_fallthru
            _
        $region58: #{reverse} parent=53 // pred_fallthru
          _
        %177 = vnop
      $region54: #{reverse} parent=5 // pred_fallthru
        _
      %p178 = scmp.le.s32.totalorder 2, %s3
      // Predicated region
      $region89: #{reverse} parent=5 // pred_check
        %p179 = pneg %p178
      $region90: #{reverse} parent=5 // pred_check_branch
        %181 = sbr.rel (%p179) target = $region92
      $region91: #{reverse} parent=5 // pred_region
        %s182 = ssub.s32 %s3, 2
        %s183 = sand.u32 %s9, 1
        %s184 = sand.u32 %s9, 1
        %s185 = smul.addr %s184, 8
        %s186 = scalar_lea.vmem [#allocation1], %s185
      $region92: #{reverse} parent=5 // pred_fallthru
        _
    $region6: #{reverse} parent=1 // loop_footer
      %s7 = sadd.s32 1, %s3
    $region7: #{reverse} parent=1 // loop_footer_branch
      %2 = sbr.rel target = $region3
    $region8: #{reverse} parent=1 // loop_exit
      _

// kernel: _forward_core.1
$region0: #{_forward_core.1}
  #allocation0 [shape = 'u32[]', space=smem, size = 0x4, offset = 0x4, fixed_abs, tag = 'smem constant byte address 0x4 - core index']
  #allocation1 [shape = 'u32[144,128]{1,0:T(1,128)}', space=vmem, size = 0x12000, scoped, tag = 'internal scratch']
  #allocation2 [shape = 'f32[1]{0:T(128)S(6)}', space=smem, size = 0x200, scoped, tag = 'scoped memory for _forward_core.1']
  %s0 = inlined_call_operand.vmem [shape: f32[2048,256], index: 0, kind: input, shape index: {}]
  %s1 = inlined_call_operand.vmem [shape: f32[256,128], index: 1, kind: input, shape index: {}]
  %s2 = inlined_call_operand.vmem [shape: f32[1,128], index: 2, kind: input, shape index: {}]
  %s3 = inlined_call_operand.vmem [shape: f32[1,128], index: 3, kind: input, shape index: {}]
  %s4 = inlined_call_operand.vmem [shape: f32[2048,1], index: 4, kind: input, shape index: {}]
  %s5 = inlined_call_operand.vmem [shape: s32[2048,1], index: 5, kind: input, shape index: {}]
  %s6 = inlined_call_operand.<no memory space> [shape: f32[1], index: 6, kind: input, shape index: {}]
  %s7 = inlined_call_operand.vmem [shape: f32[1,256], index: 7, kind: output, shape index: {}]
  %s8 = sld [smem:[#allocation0]]
  $region61: #{_forward_core.1} parent=0
    _
  %s10 = ssub.s32 1, %s8
  %s11 = scalar_select 0, %s10, %s8
  %12 = sst [smem:[#allocation2]] %s6
  loop: start=0, step=1, limit=4
  $region2: #{_forward_core.1} parent=0 // loop_pre_header
    _
  $region3: #{_forward_core.1} parent=0 // loop_header
    %s14 = sphi 0, %s18
    %p15 = scmp.ge.s32.totalorder %s14, 4
    %s24 = sphi 0, %s26
    %s27 = sphi 0, %s24
    %s28 = sphi 0, %s27
    %s44 = sphi 0, %s28
    %s48 = sphi 0, %s48
    %s50 = sphi 0, %s48
    %s51 = sphi 0, %s50
    %s65 = sphi 0, %s51
    %s69 = sphi 0, %s69
    %s71 = sphi 0, %s69
    %s72 = sphi 0, %s71
    %s86 = sphi 0, %s72
    %s90 = sphi 0, %s90
    %s92 = sphi 0, %s90
    %s93 = sphi 0, %s92
    %s107 = sphi 0, %s93
    %s113 = sphi 0, %s115
    %s116 = sphi 0, %s113
    %s117 = sphi 0, %s116
    %s133 = sphi 0, %s117
    %s139 = sphi 0, %s141
    %s142 = sphi 0, %s139
    %s143 = sphi 0, %s142
    %s159 = sphi 0, %s143
    %s163 = sphi 0, %s163
    %s165 = sphi 0, %s163
    %s166 = sphi 0, %s165
    %s180 = sphi 0, %s166
    %s186 = sphi 0, %s188
    %s189 = sphi 0, %s186
    %s190 = sphi 0, %s189
    %s206 = sphi 0, %s190
  $region4: #{_forward_core.1} parent=0 // loop_header_branch
    %17 = sbr.rel (%p15) target = $region8
  $region5: #{_forward_core.1} parent=0 // loop_body
    %s19 = ssub.s32 %s14, 1
    %s20 = ssub.s32 %s14, 2
    %s21 = sadd.s32 %s14, 1
    %s22 = ssub.s32 %s14, %s21
    %p23 = scmp.eq.s32.totalorder %s22, 0
    %s25 = sadd.s32 %s24, 1
    %s26 = scalar_select %p23, %s24, %s25
    %p29 = pneg %p23
    %p30 = scmp.eq.s32.totalorder %s14, 1
    %p31 = por %p29, %p30
    %p32 = scmp.ne.s32.totalorder %s24, %s27
    %p33 = scmp.eq.s32.totalorder %s14, 0
    %p34 = por %p32, %p33
    %p35 = scmp.ne.s32.totalorder %s24, %s27
    %p36 = scmp.eq.s32.totalorder %s19, 1
    %p37 = por %p35, %p36
    %p38 = scmp.ne.s32.totalorder %s27, %s28
    %p39 = scmp.eq.s32.totalorder %s19, 0
    %p40 = por %p38, %p39
    %p41 = scmp.ne.s32.totalorder %s27, %s28
    %p42 = scmp.eq.s32.totalorder %s20, 1
    %p43 = por %p41, %p42
    %p45 = scmp.ne.s32.totalorder %s28, %s44
    %p46 = scmp.eq.s32.totalorder %s20, 0
    %p47 = por %p45, %p46
    %s49 = sadd.s32 %s48, 1
    %p52 = scmp.eq.s32.totalorder %s14, 1
    %p53 = scmp.ne.s32.totalorder %s48, %s50
    %p54 = scmp.eq.s32.totalorder %s14, 0
    %p55 = por %p53, %p54
    %p56 = scmp.ne.s32.totalorder %s48, %s50
    %p57 = scmp.eq.s32.totalorder %s19, 1
    %p58 = por %p56, %p57
    %p59 = scmp.ne.s32.totalorder %s50, %s51
    %p60 = scmp.eq.s32.totalorder %s19, 0
    %p61 = por %p59, %p60
    %p62 = scmp.ne.s32.totalorder %s50, %s51
    %p63 = scmp.eq.s32.totalorder %s20, 1
    %p64 = por %p62, %p63
    %p66 = scmp.ne.s32.totalorder %s51, %s65
    %p67 = scmp.eq.s32.totalorder %s20, 0
    %p68 = por %p66, %p67
    %s70 = sadd.s32 %s69, 1
    %p73 = scmp.eq.s32.totalorder %s14, 1
    %p74 = scmp.ne.s32.totalorder %s69, %s71
    %p75 = scmp.eq.s32.totalorder %s14, 0
    %p76 = por %p74, %p75
    %p77 = scmp.ne.s32.totalorder %s69, %s71
    %p78 = scmp.eq.s32.totalorder %s19, 1
    %p79 = por %p77, %p78
    %p80 = scmp.ne.s32.totalorder %s71, %s72
    %p81 = scmp.eq.s32.totalorder %s19, 0
    %p82 = por %p80, %p81
    %p83 = scmp.ne.s32.totalorder %s71, %s72
    %p84 = scmp.eq.s32.totalorder %s20, 1
    %p85 = por %p83, %p84
    %p87 = scmp.ne.s32.totalorder %s72, %s86
    %p88 = scmp.eq.s32.totalorder %s20, 0
    %p89 = por %p87, %p88
    %s91 = sadd.s32 %s90, 1
    %p94 = scmp.eq.s32.totalorder %s14, 1
    %p95 = scmp.ne.s32.totalorder %s90, %s92
    %p96 = scmp.eq.s32.totalorder %s14, 0
    %p97 = por %p95, %p96
    %p98 = scmp.ne.s32.totalorder %s90, %s92
    %p99 = scmp.eq.s32.totalorder %s19, 1
    %p100 = por %p98, %p99
    %p101 = scmp.ne.s32.totalorder %s92, %s93
    %p102 = scmp.eq.s32.totalorder %s19, 0
    %p103 = por %p101, %p102
    %p104 = scmp.ne.s32.totalorder %s92, %s93
    %p105 = scmp.eq.s32.totalorder %s20, 1
    %p106 = por %p104, %p105
    %p108 = scmp.ne.s32.totalorder %s93, %s107
    %p109 = scmp.eq.s32.totalorder %s20, 0
    %p110 = por %p108, %p109
    %s111 = ssub.s32 %s14, %s21
    %p112 = scmp.eq.s32.totalorder %s111, 0
    %s114 = sadd.s32 %s113, 1
    %s115 = scalar_select %p112, %s113, %s114
    %p118 = pneg %p112
    %p119 = scmp.eq.s32.totalorder %s14, 1
    %p120 = por %p118, %p119
    %p121 = scmp.ne.s32.totalorder %s113, %s116
    %p122 = scmp.eq.s32.totalorder %s14, 0
    %p123 = por %p121, %p122
    %p124 = scmp.ne.s32.totalorder %s113, %s116
    %p125 = scmp.eq.s32.totalorder %s19, 1
    %p126 = por %p124, %p125
    %p127 = scmp.ne.s32.totalorder %s116, %s117
    %p128 = scmp.eq.s32.totalorder %s19, 0
    %p129 = por %p127, %p128
    %p130 = scmp.ne.s32.totalorder %s116, %s117
    %p131 = scmp.eq.s32.totalorder %s20, 1
    %p132 = por %p130, %p131
    %p134 = scmp.ne.s32.totalorder %s117, %s133
    %p135 = scmp.eq.s32.totalorder %s20, 0
    %p136 = por %p134, %p135
    %s137 = ssub.s32 %s14, %s21
    %p138 = scmp.eq.s32.totalorder %s137, 0
    %s140 = sadd.s32 %s139, 1
    %s141 = scalar_select %p138, %s139, %s140
    %p144 = pneg %p138
    %p145 = scmp.eq.s32.totalorder %s14, 1
    %p146 = por %p144, %p145
    %p147 = scmp.ne.s32.totalorder %s139, %s142
    %p148 = scmp.eq.s32.totalorder %s14, 0
    %p149 = por %p147, %p148
    %p150 = scmp.ne.s32.totalorder %s139, %s142
    %p151 = scmp.eq.s32.totalorder %s19, 1
    %p152 = por %p150, %p151
    %p153 = scmp.ne.s32.totalorder %s142, %s143
    %p154 = scmp.eq.s32.totalorder %s19, 0
    %p155 = por %p153, %p154
    %p156 = scmp.ne.s32.totalorder %s142, %s143
    %p157 = scmp.eq.s32.totalorder %s20, 1
    %p158 = por %p156, %p157
    %p160 = scmp.ne.s32.totalorder %s143, %s159
    %p161 = scmp.eq.s32.totalorder %s20, 0
    %p162 = por %p160, %p161
    %s164 = sadd.s32 %s163, 1
    %p167 = scmp.eq.s32.totalorder %s14, 1
    %p168 = scmp.ne.s32.totalorder %s163, %s165
    %p169 = scmp.eq.s32.totalorder %s14, 0
    %p170 = por %p168, %p169
    %p171 = scmp.ne.s32.totalorder %s163, %s165
    %p172 = scmp.eq.s32.totalorder %s19, 1
    %p173 = por %p171, %p172
    %p174 = scmp.ne.s32.totalorder %s165, %s166
    %p175 = scmp.eq.s32.totalorder %s19, 0
    %p176 = por %p174, %p175
    %p177 = scmp.ne.s32.totalorder %s165, %s166
    %p178 = scmp.eq.s32.totalorder %s20, 1
    %p179 = por %p177, %p178
    %p181 = scmp.ne.s32.totalorder %s166, %s180
    %p182 = scmp.eq.s32.totalorder %s20, 0
    %p183 = por %p181, %p182
    %s184 = ssub.s32 %s14, %s21
    %p185 = scmp.eq.s32.totalorder %s184, 0
    %s187 = sadd.s32 %s186, 1
    %s188 = scalar_select %p185, %s186, %s187
    %p191 = pneg %p185
    %p192 = scmp.eq.s32.totalorder %s14, 1
    %p193 = por %p191, %p192
    %p194 = scmp.ne.s32.totalorder %s186, %s189
    %p195 = scmp.eq.s32.totalorder %s14, 0
    %p196 = por %p194, %p195
    %p197 = scmp.ne.s32.totalorder %s186, %s189
    %p198 = scmp.eq.s32.totalorder %s19, 1
    %p199 = por %p197, %p198
    %p200 = scmp.ne.s32.totalorder %s189, %s190
    %p201 = scmp.eq.s32.totalorder %s19, 0
    %p202 = por %p200, %p201
    %p203 = scmp.ne.s32.totalorder %s189, %s190
    %p204 = scmp.eq.s32.totalorder %s20, 1
    %p205 = por %p203, %p204
    %p207 = scmp.ne.s32.totalorder %s190, %s206
    %p208 = scmp.eq.s32.totalorder %s20, 0
    %p209 = por %p207, %p208
    %p210 = scmp.le.s32.totalorder 1, %s14
    %p211 = scmp.lt.s32.totalorder %s14, 3
    %p212 = pnand %p210, %p211
    %p213 = pneg %p212
    // Predicated region
    $region9: #{_forward_core.1} parent=5 // pred_check
      _
    $region10: #{_forward_core.1} parent=5 // pred_check_branch
      %215 = sbr.rel (%p212) target = $region12
    $region11: #{_forward_core.1} parent=5 // pred_region
      %s216 = ssub.s32 %s14, 1
      // Predicated region
      $region13: #{_forward_core.1} parent=11 // pred_check
        %p217 = pneg %p61
      $region14: #{_forward_core.1} parent=11 // pred_check_branch
        %219 = sbr.rel (%p217) target = $region16
      $region15: #{_forward_core.1} parent=11 // pred_region
        _
      $region16: #{_forward_core.1} parent=11 // pred_fallthru
        _
      // Predicated region
      $region17: #{_forward_core.1} parent=11 // pred_check
        %p220 = pneg %p82
      $region18: #{_forward_core.1} parent=11 // pred_check_branch
        %222 = sbr.rel (%p220) target = $region20
      $region19: #{_forward_core.1} parent=11 // pred_region
        _
      $region20: #{_forward_core.1} parent=11 // pred_fallthru
        _
      // Predicated region
      $region21: #{_forward_core.1} parent=11 // pred_check
        %p223 = pneg %p103
      $region22: #{_forward_core.1} parent=11 // pred_check_branch
        %225 = sbr.rel (%p223) target = $region24
      $region23: #{_forward_core.1} parent=11 // pred_region
        _
      $region24: #{_forward_core.1} parent=11 // pred_fallthru
        _
      // Predicated region
      $region25: #{_forward_core.1} parent=11 // pred_check
        %p226 = pneg %p176
      $region26: #{_forward_core.1} parent=11 // pred_check_branch
        %228 = sbr.rel (%p226) target = $region28
      $region27: #{_forward_core.1} parent=11 // pred_region
        _
      $region28: #{_forward_core.1} parent=11 // pred_fallthru
        _
    $region12: #{_forward_core.1} parent=5 // pred_fallthru
      _
    %p229 = scmp.lt.s32.totalorder %s14, 2
    // Predicated region
    $region29: #{_forward_core.1} parent=5 // pred_check
      %p230 = pneg %p229
    $region30: #{_forward_core.1} parent=5 // pred_check_branch
      %232 = sbr.rel (%p230) target = $region32
    $region31: #{_forward_core.1} parent=5 // pred_region
      // Predicated region
      $region33: #{_forward_core.1} parent=31 // pred_check
        %p233 = pneg %p34
      $region34: #{_forward_core.1} parent=31 // pred_check_branch
        %235 = sbr.rel (%p233) target = $region36
      $region35: #{_forward_core.1} parent=31 // pred_region
        %s236 = smul.u32 128, %s14
        %p237 = scmp.lt.s32.totalorder %s236, 255
        %s238 = scalar_select %p237, %s236, 255
        %s239 = smul.addr %s238, 2
        %s240 = smul.addr %s239, 8
        %s241 = scalar_lea.vmem %s0, %s240
        %s242 = smul.u32 128, %s14
      $region36: #{_forward_core.1} parent=31 // pred_fallthru
        _
      // Predicated region
      $region37: #{_forward_core.1} parent=31 // pred_check
        %p243 = pneg %p123
      $region38: #{_forward_core.1} parent=31 // pred_check_branch
        %245 = sbr.rel (%p243) target = $region40
      $region39: #{_forward_core.1} parent=31 // pred_region
        %s246 = smul.u32 128, %s14
        %p247 = scmp.lt.s32.totalorder %s246, 255
        %s248 = scalar_select %p247, %s246, 255
        %s249 = smul.addr %s248, 8
        %s250 = scalar_lea.vmem %s4, %s249
        %s251 = smul.u32 128, %s14
      $region40: #{_forward_core.1} parent=31 // pred_fallthru
        _
      // Predicated region
      $region41: #{_forward_core.1} parent=31 // pred_check
        %p252 = pneg %p149
      $region42: #{_forward_core.1} parent=31 // pred_check_branch
        %254 = sbr.rel (%p252) target = $region44
      $region43: #{_forward_core.1} parent=31 // pred_region
        %s255 = smul.u32 128, %s14
        %p256 = scmp.lt.s32.totalorder %s255, 255
        %s257 = scalar_select %p256, %s255, 255
        %s258 = smul.addr %s257, 8
        %s259 = scalar_lea.vmem %s5, %s258
        %s260 = smul.u32 128, %s14
      $region44: #{_forward_core.1} parent=31 // pred_fallthru
        _
    $region32: #{_forward_core.1} parent=5 // pred_fallthru
      _
    %p261 = scmp.le.s32.totalorder 1, %s14
    %p262 = scmp.lt.s32.totalorder %s14, 3
    %p263 = pnand %p261, %p262
    %p264 = pneg %p263
    // Predicated region
    $region45: #{_forward_core.1} parent=5 // pred_check
      _
    $region46: #{_forward_core.1} parent=5 // pred_check_branch
      %266 = sbr.rel (%p263) target = $region48
    $region47: #{_forward_core.1} parent=5 // pred_region
      %s267 = ssub.s32 %s14, 1
      %s268 = smul.u32 128, %s19
      %p269 = scmp.lt.s32.totalorder %s268, 255
      %s270 = scalar_select %p269, %s268, 255
      %s271 = smul.addr %s270, 2
      %s272 = smul.addr %s271, 8
      %s273 = scalar_lea.vmem %s0, %s272
      %p274 = pneg %p40
      %p275 = pneg %p37
      %p276 = pneg %p61
      %p277 = pneg %p58
      %p278 = pneg %p82
      %p279 = pneg %p79
      %p280 = pneg %p103
      %p281 = pneg %p100
      %s282 = smul.u32 128, %s19
      %p283 = scmp.lt.s32.totalorder %s282, 255
      %s284 = scalar_select %p283, %s282, 255
      %s285 = smul.addr %s284, 8
      %s286 = scalar_lea.vmem %s4, %s285
      %p287 = pneg %p129
      %p288 = pneg %p126
      %s289 = smul.u32 128, %s19
      %p290 = scmp.lt.s32.totalorder %s289, 255
      %s291 = scalar_select %p290, %s289, 255
      %s292 = smul.addr %s291, 8
      %s293 = scalar_lea.vmem %s5, %s292
      %p294 = pneg %p155
      %p295 = pneg %p152
      %p296 = pneg %p176
      %p297 = pneg %p173
      %p298 = pneg %p202
      %p299 = pneg %p199
      %p300 = scmp.lt.s32.totalorder %s19, 1
      %s301 = scalar_select %p300, %s19, 1
      %s302 = scalar_lea.vmem %s7, %s301
      %s303 = smul.u32 128, %s19
      %p304 = scmp.lt.s32.totalorder %s303, 255
      %s305 = scalar_select %p304, %s303, 255
      %s306 = smul.addr %s305, 2
      %s307 = smul.addr %s306, 8
      %s308 = scalar_lea.vmem %s0, %s307
      %s309 = smul.u32 128, %s19
      %s310 = smul.u32 128, %s19
      %p311 = scmp.lt.s32.totalorder %s310, 255
      %s312 = scalar_select %p311, %s310, 255
      %s313 = smul.addr %s312, 8
      %s314 = scalar_lea.vmem %s4, %s313
      %s315 = smul.u32 128, %s19
      %s316 = smul.u32 128, %s19
      %p317 = scmp.lt.s32.totalorder %s316, 255
      %s318 = scalar_select %p317, %s316, 255
      %s319 = smul.addr %s318, 8
      %s320 = scalar_lea.vmem %s5, %s319
      %s321 = smul.u32 128, %s19
      %p322 = scmp.lt.s32.totalorder %s19, 1
      %s323 = scalar_select %p322, %s19, 1
      %s324 = scalar_lea.vmem %s7, %s323
      %v325 = vld [vmem:[%s308] sm:$0xff]
      %v326 = vld [vmem:[%s308 + $0x8] sm:$0xff]
      %v327 = vld [vmem:[%s308 + $0x10] sm:$0xff]
      %v328 = vld [vmem:[%s308 + $0x18] sm:$0xff]
      %v329 = vld [vmem:[%s308 + $0x20] sm:$0xff]
      %v330 = vld [vmem:[%s308 + $0x28] sm:$0xff]
      %v331 = vld [vmem:[%s308 + $0x30] sm:$0xff]
      %v332 = vld [vmem:[%s308 + $0x38] sm:$0xff]
      %v333 = vld [vmem:[%s308 + $0x40] sm:$0xff]
      %v334 = vld [vmem:[%s308 + $0x48] sm:$0xff]
      %v335 = vld [vmem:[%s308 + $0x50] sm:$0xff]
      %v336 = vld [vmem:[%s308 + $0x58] sm:$0xff]
      %v337 = vld [vmem:[%s308 + $0x60] sm:$0xff]
      %v338 = vld [vmem:[%s308 + $0x68] sm:$0xff]
      %v339 = vld [vmem:[%s308 + $0x70] sm:$0xff]
      %v340 = vld [vmem:[%s308 + $0x78] sm:$0xff]
      %v341 = vld [vmem:[%s308 + $0x80] sm:$0xff]
      %v342 = vld [vmem:[%s308 + $0x88] sm:$0xff]
      %v343 = vld [vmem:[%s308 + $0x90] sm:$0xff]
      %v344 = vld [vmem:[%s308 + $0x98] sm:$0xff]
      %v345 = vld [vmem:[%s308 + $0xa0] sm:$0xff]
      %v346 = vld [vmem:[%s308 + $0xa8] sm:$0xff]
      %v347 = vld [vmem:[%s308 + $0xb0] sm:$0xff]
      %v348 = vld [vmem:[%s308 + $0xb8] sm:$0xff]
      %v349 = vld [vmem:[%s308 + $0xc0] sm:$0xff]
      %v350 = vld [vmem:[%s308 + $0xc8] sm:$0xff]
      %v351 = vld [vmem:[%s308 + $0xd0] sm:$0xff]
      %v352 = vld [vmem:[%s308 + $0xd8] sm:$0xff]
      %v353 = vld [vmem:[%s308 + $0xe0] sm:$0xff]
      %v354 = vld [vmem:[%s308 + $0xe8] sm:$0xff]
      %v355 = vld [vmem:[%s308 + $0xf0] sm:$0xff]
      %v356 = vld [vmem:[%s308 + $0xf8] sm:$0xff]
      %v357 = vld [vmem:[%s308 + $0x100] sm:$0xff]
      %v358 = vld [vmem:[%s308 + $0x108] sm:$0xff]
      %v359 = vld [vmem:[%s308 + $0x110] sm:$0xff]
      %v360 = vld [vmem:[%s308 + $0x118] sm:$0xff]
      %v361 = vld [vmem:[%s308 + $0x120] sm:$0xff]
      %v362 = vld [vmem:[%s308 + $0x128] sm:$0xff]
      %v363 = vld [vmem:[%s308 + $0x130] sm:$0xff]
      %v364 = vld [vmem:[%s308 + $0x138] sm:$0xff]
      %v365 = vld [vmem:[%s308 + $0x140] sm:$0xff]
      %v366 = vld [vmem:[%s308 + $0x148] sm:$0xff]
      %v367 = vld [vmem:[%s308 + $0x150] sm:$0xff]
      %v368 = vld [vmem:[%s308 + $0x158] sm:$0xff]
      %v369 = vld [vmem:[%s308 + $0x160] sm:$0xff]
      %v370 = vld [vmem:[%s308 + $0x168] sm:$0xff]
      %v371 = vld [vmem:[%s308 + $0x170] sm:$0xff]
      %v372 = vld [vmem:[%s308 + $0x178] sm:$0xff]
      %v373 = vld [vmem:[%s308 + $0x180] sm:$0xff]
      %v374 = vld [vmem:[%s308 + $0x188] sm:$0xff]
      %v375 = vld [vmem:[%s308 + $0x190] sm:$0xff]
      %v376 = vld [vmem:[%s308 + $0x198] sm:$0xff]
      %v377 = vld [vmem:[%s308 + $0x1a0] sm:$0xff]
      %v378 = vld [vmem:[%s308 + $0x1a8] sm:$0xff]
      %v379 = vld [vmem:[%s308 + $0x1b0] sm:$0xff]
      %v380 = vld [vmem:[%s308 + $0x1b8] sm:$0xff]
      %v381 = vld [vmem:[%s308 + $0x1c0] sm:$0xff]
      %v382 = vld [vmem:[%s308 + $0x1c8] sm:$0xff]
      %v383 = vld [vmem:[%s308 + $0x1d0] sm:$0xff]
      %v384 = vld [vmem:[%s308 + $0x1d8] sm:$0xff]
      %v385 = vld [vmem:[%s308 + $0x1e0] sm:$0xff]
      %v386 = vld [vmem:[%s308 + $0x1e8] sm:$0xff]
      %v387 = vld [vmem:[%s308 + $0x1f0] sm:$0xff]
      %v388 = vld [vmem:[%s308 + $0x1f8] sm:$0xff]
      %v389 = vld [vmem:[%s308 + $0x200] sm:$0xff]
      %v390 = vld [vmem:[%s308 + $0x208] sm:$0xff]
      %v391 = vld [vmem:[%s308 + $0x210] sm:$0xff]
      %v392 = vld [vmem:[%s308 + $0x218] sm:$0xff]
      %v393 = vld [vmem:[%s308 + $0x220] sm:$0xff]
      %v394 = vld [vmem:[%s308 + $0x228] sm:$0xff]
      %v395 = vld [vmem:[%s308 + $0x230] sm:$0xff]
      %v396 = vld [vmem:[%s308 + $0x238] sm:$0xff]
      %v397 = vld [vmem:[%s308 + $0x240] sm:$0xff]
      %v398 = vld [vmem:[%s308 + $0x248] sm:$0xff]
      %v399 = vld [vmem:[%s308 + $0x250] sm:$0xff]
      %v400 = vld [vmem:[%s308 + $0x258] sm:$0xff]
      %v401 = vld [vmem:[%s308 + $0x260] sm:$0xff]
      %v402 = vld [vmem:[%s308 + $0x268] sm:$0xff]
      %v403 = vld [vmem:[%s308 + $0x270] sm:$0xff]
      %v404 = vld [vmem:[%s308 + $0x278] sm:$0xff]
      %v405 = vld [vmem:[%s308 + $0x280] sm:$0xff]
      %v406 = vld [vmem:[%s308 + $0x288] sm:$0xff]
      %v407 = vld [vmem:[%s308 + $0x290] sm:$0xff]
      %v408 = vld [vmem:[%s308 + $0x298] sm:$0xff]
      %v409 = vld [vmem:[%s308 + $0x2a0] sm:$0xff]
      %v410 = vld [vmem:[%s308 + $0x2a8] sm:$0xff]
      %v411 = vld [vmem:[%s308 + $0x2b0] sm:$0xff]
      %v412 = vld [vmem:[%s308 + $0x2b8] sm:$0xff]
      %v413 = vld [vmem:[%s308 + $0x2c0] sm:$0xff]
      %v414 = vld [vmem:[%s308 + $0x2c8] sm:$0xff]
      %v415 = vld [vmem:[%s308 + $0x2d0] sm:$0xff]
      %v416 = vld [vmem:[%s308 + $0x2d8] sm:$0xff]
      %v417 = vld [vmem:[%s308 + $0x2e0] sm:$0xff]
      %v418 = vld [vmem:[%s308 + $0x2e8] sm:$0xff]
      %v419 = vld [vmem:[%s308 + $0x2f0] sm:$0xff]
      %v420 = vld [vmem:[%s308 + $0x2f8] sm:$0xff]
      %v421 = vld [vmem:[%s308 + $0x300] sm:$0xff]
      %v422 = vld [vmem:[%s308 + $0x308] sm:$0xff]
      %v423 = vld [vmem:[%s308 + $0x310] sm:$0xff]
      %v424 = vld [vmem:[%s308 + $0x318] sm:$0xff]
      %v425 = vld [vmem:[%s308 + $0x320] sm:$0xff]
      %v426 = vld [vmem:[%s308 + $0x328] sm:$0xff]
      %v427 = vld [vmem:[%s308 + $0x330] sm:$0xff]
      %v428 = vld [vmem:[%s308 + $0x338] sm:$0xff]
      %v429 = vld [vmem:[%s308 + $0x340] sm:$0xff]
      %v430 = vld [vmem:[%s308 + $0x348] sm:$0xff]
      %v431 = vld [vmem:[%s308 + $0x350] sm:$0xff]
      %v432 = vld [vmem:[%s308 + $0x358] sm:$0xff]
      %v433 = vld [vmem:[%s308 + $0x360] sm:$0xff]
      %v434 = vld [vmem:[%s308 + $0x368] sm:$0xff]
      %v435 = vld [vmem:[%s308 + $0x370] sm:$0xff]
      %v436 = vld [vmem:[%s308 + $0x378] sm:$0xff]
      %v437 = vld [vmem:[%s308 + $0x380] sm:$0xff]
      %v438 = vld [vmem:[%s308 + $0x388] sm:$0xff]
      %v439 = vld [vmem:[%s308 + $0x390] sm:$0xff]
      %v440 = vld [vmem:[%s308 + $0x398] sm:$0xff]
      %v441 = vld [vmem:[%s308 + $0x3a0] sm:$0xff]
      %v442 = vld [vmem:[%s308 + $0x3a8] sm:$0xff]
      %v443 = vld [vmem:[%s308 + $0x3b0] sm:$0xff]
      %v444 = vld [vmem:[%s308 + $0x3b8] sm:$0xff]
      %v445 = vld [vmem:[%s308 + $0x3c0] sm:$0xff]
      %v446 = vld [vmem:[%s308 + $0x3c8] sm:$0xff]
      %v447 = vld [vmem:[%s308 + $0x3d0] sm:$0xff]
      %v448 = vld [vmem:[%s308 + $0x3d8] sm:$0xff]
      %v449 = vld [vmem:[%s308 + $0x3e0] sm:$0xff]
      %v450 = vld [vmem:[%s308 + $0x3e8] sm:$0xff]
      %v451 = vld [vmem:[%s308 + $0x3f0] sm:$0xff]
      %v452 = vld [vmem:[%s308 + $0x3f8] sm:$0xff]
      %v453 = vld [vmem:[%s308 + $0x400] sm:$0xff]
      %v454 = vld [vmem:[%s308 + $0x408] sm:$0xff]
      %v455 = vld [vmem:[%s308 + $0x410] sm:$0xff]
      %v456 = vld [vmem:[%s308 + $0x418] sm:$0xff]
      %v457 = vld [vmem:[%s308 + $0x420] sm:$0xff]
      %v458 = vld [vmem:[%s308 + $0x428] sm:$0xff]
      %v459 = vld [vmem:[%s308 + $0x430] sm:$0xff]
      %v460 = vld [vmem:[%s308 + $0x438] sm:$0xff]
      %v461 = vld [vmem:[%s308 + $0x440] sm:$0xff]
      %v462 = vld [vmem:[%s308 + $0x448] sm:$0xff]
      %v463 = vld [vmem:[%s308 + $0x450] sm:$0xff]
      %v464 = vld [vmem:[%s308 + $0x458] sm:$0xff]
      %v465 = vld [vmem:[%s308 + $0x460] sm:$0xff]
      %v466 = vld [vmem:[%s308 + $0x468] sm:$0xff]
      %v467 = vld [vmem:[%s308 + $0x470] sm:$0xff]
      %v468 = vld [vmem:[%s308 + $0x478] sm:$0xff]
      %v469 = vld [vmem:[%s308 + $0x480] sm:$0xff]
      %v470 = vld [vmem:[%s308 + $0x488] sm:$0xff]
      %v471 = vld [vmem:[%s308 + $0x490] sm:$0xff]
      %v472 = vld [vmem:[%s308 + $0x498] sm:$0xff]
      %v473 = vld [vmem:[%s308 + $0x4a0] sm:$0xff]
      %v474 = vld [vmem:[%s308 + $0x4a8] sm:$0xff]
      %v475 = vld [vmem:[%s308 + $0x4b0] sm:$0xff]
      %v476 = vld [vmem:[%s308 + $0x4b8] sm:$0xff]
      %v477 = vld [vmem:[%s308 + $0x4c0] sm:$0xff]
      %v478 = vld [vmem:[%s308 + $0x4c8] sm:$0xff]
      %v479 = vld [vmem:[%s308 + $0x4d0] sm:$0xff]
      %v480 = vld [vmem:[%s308 + $0x4d8] sm:$0xff]
      %v481 = vld [vmem:[%s308 + $0x4e0] sm:$0xff]
      %v482 = vld [vmem:[%s308 + $0x4e8] sm:$0xff]
      %v483 = vld [vmem:[%s308 + $0x4f0] sm:$0xff]
      %v484 = vld [vmem:[%s308 + $0x4f8] sm:$0xff]
      %v485 = vld [vmem:[%s308 + $0x500] sm:$0xff]
      %v486 = vld [vmem:[%s308 + $0x508] sm:$0xff]
      %v487 = vld [vmem:[%s308 + $0x510] sm:$0xff]
      %v488 = vld [vmem:[%s308 + $0x518] sm:$0xff]
      %v489 = vld [vmem:[%s308 + $0x520] sm:$0xff]
      %v490 = vld [vmem:[%s308 + $0x528] sm:$0xff]
      %v491 = vld [vmem:[%s308 + $0x530] sm:$0xff]
      %v492 = vld [vmem:[%s308 + $0x538] sm:$0xff]
      %v493 = vld [vmem:[%s308 + $0x540] sm:$0xff]
      %v494 = vld [vmem:[%s308 + $0x548] sm:$0xff]
      %v495 = vld [vmem:[%s308 + $0x550] sm:$0xff]
      %v496 = vld [vmem:[%s308 + $0x558] sm:$0xff]
      %v497 = vld [vmem:[%s308 + $0x560] sm:$0xff]
      %v498 = vld [vmem:[%s308 + $0x568] sm:$0xff]
      %v499 = vld [vmem:[%s308 + $0x570] sm:$0xff]
      %v500 = vld [vmem:[%s308 + $0x578] sm:$0xff]
      %v501 = vld [vmem:[%s308 + $0x580] sm:$0xff]
      %v502 = vld [vmem:[%s308 + $0x588] sm:$0xff]
      %v503 = vld [vmem:[%s308 + $0x590] sm:$0xff]
      %v504 = vld [vmem:[%s308 + $0x598] sm:$0xff]
      %v505 = vld [vmem:[%s308 + $0x5a0] sm:$0xff]
      %v506 = vld [vmem:[%s308 + $0x5a8] sm:$0xff]
      %v507 = vld [vmem:[%s308 + $0x5b0] sm:$0xff]
      %v508 = vld [vmem:[%s308 + $0x5b8] sm:$0xff]
      %v509 = vld [vmem:[%s308 + $0x5c0] sm:$0xff]
      %v510 = vld [vmem:[%s308 + $0x5c8] sm:$0xff]
      %v511 = vld [vmem:[%s308 + $0x5d0] sm:$0xff]
      %v512 = vld [vmem:[%s308 + $0x5d8] sm:$0xff]
      %v513 = vld [vmem:[%s308 + $0x5e0] sm:$0xff]
      %v514 = vld [vmem:[%s308 + $0x5e8] sm:$0xff]
      %v515 = vld [vmem:[%s308 + $0x5f0] sm:$0xff]
      %v516 = vld [vmem:[%s308 + $0x5f8] sm:$0xff]
      %v517 = vld [vmem:[%s308 + $0x600] sm:$0xff]
      %v518 = vld [vmem:[%s308 + $0x608] sm:$0xff]
      %v519 = vld [vmem:[%s308 + $0x610] sm:$0xff]
      %v520 = vld [vmem:[%s308 + $0x618] sm:$0xff]
      %v521 = vld [vmem:[%s308 + $0x620] sm:$0xff]
      %v522 = vld [vmem:[%s308 + $0x628] sm:$0xff]
      %v523 = vld [vmem:[%s308 + $0x630] sm:$0xff]
      %v524 = vld [vmem:[%s308 + $0x638] sm:$0xff]
      %v525 = vld [vmem:[%s308 + $0x640] sm:$0xff]
      %v526 = vld [vmem:[%s308 + $0x648] sm:$0xff]
      %v527 = vld [vmem:[%s308 + $0x650] sm:$0xff]
      %v528 = vld [vmem:[%s308 + $0x658] sm:$0xff]
      %v529 = vld [vmem:[%s308 + $0x660] sm:$0xff]
      %v530 = vld [vmem:[%s308 + $0x668] sm:$0xff]
      %v531 = vld [vmem:[%s308 + $0x670] sm:$0xff]
      %v532 = vld [vmem:[%s308 + $0x678] sm:$0xff]
      %v533 = vld [vmem:[%s308 + $0x680] sm:$0xff]
      %v534 = vld [vmem:[%s308 + $0x688] sm:$0xff]
      %v535 = vld [vmem:[%s308 + $0x690] sm:$0xff]
      %v536 = vld [vmem:[%s308 + $0x698] sm:$0xff]
      %v537 = vld [vmem:[%s308 + $0x6a0] sm:$0xff]
      %v538 = vld [vmem:[%s308 + $0x6a8] sm:$0xff]
      %v539 = vld [vmem:[%s308 + $0x6b0] sm:$0xff]
      %v540 = vld [vmem:[%s308 + $0x6b8] sm:$0xff]
      %v541 = vld [vmem:[%s308 + $0x6c0] sm:$0xff]
      %v542 = vld [vmem:[%s308 + $0x6c8] sm:$0xff]
      %v543 = vld [vmem:[%s308 + $0x6d0] sm:$0xff]
      %v544 = vld [vmem:[%s308 + $0x6d8] sm:$0xff]
      %v545 = vld [vmem:[%s308 + $0x6e0] sm:$0xff]
      %v546 = vld [vmem:[%s308 + $0x6e8] sm:$0xff]
      %v547 = vld [vmem:[%s308 + $0x6f0] sm:$0xff]
      %v548 = vld [vmem:[%s308 + $0x6f8] sm:$0xff]
      %v549 = vld [vmem:[%s308 + $0x700] sm:$0xff]
      %v550 = vld [vmem:[%s308 + $0x708] sm:$0xff]
      %v551 = vld [vmem:[%s308 + $0x710] sm:$0xff]
      %v552 = vld [vmem:[%s308 + $0x718] sm:$0xff]
      %v553 = vld [vmem:[%s308 + $0x720] sm:$0xff]
      %v554 = vld [vmem:[%s308 + $0x728] sm:$0xff]
      %v555 = vld [vmem:[%s308 + $0x730] sm:$0xff]
      %v556 = vld [vmem:[%s308 + $0x738] sm:$0xff]
      %v557 = vld [vmem:[%s308 + $0x740] sm:$0xff]
      %v558 = vld [vmem:[%s308 + $0x748] sm:$0xff]
      %v559 = vld [vmem:[%s308 + $0x750] sm:$0xff]
      %v560 = vld [vmem:[%s308 + $0x758] sm:$0xff]
      %v561 = vld [vmem:[%s308 + $0x760] sm:$0xff]
      %v562 = vld [vmem:[%s308 + $0x768] sm:$0xff]
      %v563 = vld [vmem:[%s308 + $0x770] sm:$0xff]
      %v564 = vld [vmem:[%s308 + $0x778] sm:$0xff]
      %v565 = vld [vmem:[%s308 + $0x780] sm:$0xff]
      %v566 = vld [vmem:[%s308 + $0x788] sm:$0xff]
      %v567 = vld [vmem:[%s308 + $0x790] sm:$0xff]
      %v568 = vld [vmem:[%s308 + $0x798] sm:$0xff]
      %v569 = vld [vmem:[%s308 + $0x7a0] sm:$0xff]
      %v570 = vld [vmem:[%s308 + $0x7a8] sm:$0xff]
      %v571 = vld [vmem:[%s308 + $0x7b0] sm:$0xff]
      %v572 = vld [vmem:[%s308 + $0x7b8] sm:$0xff]
      %v573 = vld [vmem:[%s308 + $0x7c0] sm:$0xff]
      %v574 = vld [vmem:[%s308 + $0x7c8] sm:$0xff]
      %v575 = vld [vmem:[%s308 + $0x7d0] sm:$0xff]
      %v576 = vld [vmem:[%s308 + $0x7d8] sm:$0xff]
      %v577 = vld [vmem:[%s308 + $0x7e0] sm:$0xff]
      %v578 = vld [vmem:[%s308 + $0x7e8] sm:$0xff]
      %v579 = vld [vmem:[%s308 + $0x7f0] sm:$0xff]
      %v580 = vld [vmem:[%s308 + $0x7f8] sm:$0xff]
      %v581 = vld [vmem:[%s1] sm:$0xff]
      %v582 = vld [vmem:[%s1 + $0x8] sm:$0xff]
      %v583 = vld [vmem:[%s1 + $0x10] sm:$0xff]
      %v584 = vld [vmem:[%s1 + $0x18] sm:$0xff]
      %v585 = vld [vmem:[%s1 + $0x20] sm:$0xff]
      %v586 = vld [vmem:[%s1 + $0x28] sm:$0xff]
      %v587 = vld [vmem:[%s1 + $0x30] sm:$0xff]
      %v588 = vld [vmem:[%s1 + $0x38] sm:$0xff]
      %v589 = vld [vmem:[%s1 + $0x40] sm:$0xff]
      %v590 = vld [vmem:[%s1 + $0x48] sm:$0xff]
      %v591 = vld [vmem:[%s1 + $0x50] sm:$0xff]
      %v592 = vld [vmem:[%s1 + $0x58] sm:$0xff]
      %v593 = vld [vmem:[%s1 + $0x60] sm:$0xff]
      %v594 = vld [vmem:[%s1 + $0x68] sm:$0xff]
      %v595 = vld [vmem:[%s1 + $0x70] sm:$0xff]
      %v596 = vld [vmem:[%s1 + $0x78] sm:$0xff]
      %v597 = vld [vmem:[%s1 + $0x80] sm:$0xff]
      %v598 = vld [vmem:[%s1 + $0x88] sm:$0xff]
      %v599 = vld [vmem:[%s1 + $0x90] sm:$0xff]
      %v600 = vld [vmem:[%s1 + $0x98] sm:$0xff]
      %v601 = vld [vmem:[%s1 + $0xa0] sm:$0xff]
      %v602 = vld [vmem:[%s1 + $0xa8] sm:$0xff]
      %v603 = vld [vmem:[%s1 + $0xb0] sm:$0xff]
      %v604 = vld [vmem:[%s1 + $0xb8] sm:$0xff]
      %v605 = vld [vmem:[%s1 + $0xc0] sm:$0xff]
      %v606 = vld [vmem:[%s1 + $0xc8] sm:$0xff]
      %v607 = vld [vmem:[%s1 + $0xd0] sm:$0xff]
      %v608 = vld [vmem:[%s1 + $0xd8] sm:$0xff]
      %v609 = vld [vmem:[%s1 + $0xe0] sm:$0xff]
      %v610 = vld [vmem:[%s1 + $0xe8] sm:$0xff]
      %v611 = vld [vmem:[%s1 + $0xf0] sm:$0xff]
      %v612 = vld [vmem:[%s1 + $0xf8] sm:$0xff]
      %v613 = vld [vmem:[%s2] sm:$0x1]
      %v615 = vlaneseq
      %v616 = vshrl.u32 %v615, 7
      %v617 = vsub.s32 0, %v616
      %v618 = vrot.slane %v613, %v617
      %620 = vmatprep.subr.mxu0 0.0
      %621 = vmatpush1.msra.mxu0 %v596
      %622 = vmatprep.subr.mxu0 0.0
      %623 = vmatpush1.msra.mxu0 %v595
      %624 = vmatprep.subr.mxu0 0.0
      %625 = vmatpush1.msra.mxu0 %v594
      %626 = vmatprep.subr.mxu0 0.0
      %627 = vmatpush1.msra.mxu0 %v593
      %628 = vmatprep.subr.mxu0 0.0
      %629 = vmatpush1.msra.mxu0 %v592
      %630 = vmatprep.subr.mxu0 0.0
      %631 = vmatpush1.msra.mxu0 %v591
      %632 = vmatprep.subr.mxu0 0.0
      %633 = vmatpush1.msra.mxu0 %v590
      %634 = vmatprep.subr.mxu0 0.0
      %635 = vmatpush1.msra.mxu0 %v589
      %636 = vmatprep.subr.mxu0 0.0
      %637 = vmatpush1.msra.mxu0 %v588
      %638 = vmatprep.subr.mxu0 0.0
      %639 = vmatpush1.msra.mxu0 %v587
      %640 = vmatprep.subr.mxu0 0.0
      %641 = vmatpush1.msra.mxu0 %v586
      %642 = vmatprep.subr.mxu0 0.0
      %643 = vmatpush1.msra.mxu0 %v585
      %644 = vmatprep.subr.mxu0 0.0
      %645 = vmatpush1.msra.mxu0 %v584
      %646 = vmatprep.subr.mxu0 0.0
      %647 = vmatpush1.msra.mxu0 %v583
      %648 = vmatprep.subr.mxu0 0.0
      %649 = vmatpush1.msra.mxu0 %v582
      %650 = vmatprep.subr.mxu0 0.0
      %651 = vmatpush1.msra.mxu0 %v581
      %652 = vmatprep.subr.mxu0 0.0
      %653 = vmatpush2.msra.mxu0 %v612
      %654 = vmatprep.subr.mxu0 0.0
      %655 = vmatpush2.msra.mxu0 %v611
      %656 = vmatprep.subr.mxu0 0.0
      %657 = vmatpush2.msra.mxu0 %v610
      %658 = vmatprep.subr.mxu0 0.0
      %659 = vmatpush2.msra.mxu0 %v609
      %660 = vmatprep.subr.mxu0 0.0
      %661 = vmatpush2.msra.mxu0 %v608
      %662 = vmatprep.subr.mxu0 0.0
      %663 = vmatpush2.msra.mxu0 %v607
      %664 = vmatprep.subr.mxu0 0.0
      %665 = vmatpush2.msra.mxu0 %v606
      %666 = vmatprep.subr.mxu0 0.0
      %667 = vmatpush2.msra.mxu0 %v605
      %668 = vmatprep.subr.mxu0 0.0
      %669 = vmatpush2.msra.mxu0 %v604
      %670 = vmatprep.subr.mxu0 0.0
      %671 = vmatpush2.msra.mxu0 %v603
      %672 = vmatprep.subr.mxu0 0.0
      %673 = vmatpush2.msra.mxu0 %v602
      %674 = vmatprep.subr.mxu0 0.0
      %675 = vmatpush2.msra.mxu0 %v601
      %676 = vmatprep.subr.mxu0 0.0
      %677 = vmatpush2.msra.mxu0 %v600
      %678 = vmatprep.subr.mxu0 0.0
      %679 = vmatpush2.msra.mxu0 %v599
      %680 = vmatprep.subr.mxu0 0.0
      %681 = vmatpush2.msra.mxu0 %v598
      %682 = vmatprep.subr.mxu0 0.0
      %683 = vmatpush2.msra.mxu0 %v597
      %684 = vmatprep.mubr.f32.mxu0 %v326
      %685 = vmatmul.mubr.f32.gmra.mxu0 %v325
      %v686 = vpop.f32.mrf.mxu0
      %v687 = vadd.f32 %v618, %v686
      %v688 = vpop.f32.mrf.mxu0
      %689 = vmatprep.mubr.f32.mxu0 %v328
      %690 = vmatmul.mubr.f32.gmra.mxu0 %v327
      %v691 = vpop.f32.mrf.mxu0
      %v692 = vadd.f32 %v618, %v691
      %v693 = vpop.f32.mrf.mxu0
      %694 = vmatprep.mubr.f32.mxu0 %v330
      %695 = vmatmul.mubr.f32.gmra.mxu0 %v329
      %v696 = vpop.f32.mrf.mxu0
      %v697 = vadd.f32 %v618, %v696
      %v698 = vpop.f32.mrf.mxu0
      %699 = vmatprep.mubr.f32.mxu0 %v332
      %700 = vmatmul.mubr.f32.gmra.mxu0 %v331
      %v701 = vpop.f32.mrf.mxu0
      %v702 = vadd.f32 %v618, %v701
      %v703 = vpop.f32.mrf.mxu0
      %704 = vmatprep.mubr.f32.mxu0 %v334
      %705 = vmatmul.mubr.f32.gmra.mxu0 %v333
      %v706 = vpop.f32.mrf.mxu0
      %v707 = vadd.f32 %v618, %v706
      %v708 = vpop.f32.mrf.mxu0
      %709 = vmatprep.mubr.f32.mxu0 %v336
      %710 = vmatmul.mubr.f32.gmra.mxu0 %v335
      %v711 = vpop.f32.mrf.mxu0
      %v712 = vadd.f32 %v618, %v711
      %v713 = vpop.f32.mrf.mxu0
      %714 = vmatprep.mubr.f32.mxu0 %v338
      %715 = vmatmul.mubr.f32.gmra.mxu0 %v337
      %v716 = vpop.f32.mrf.mxu0
      %v717 = vadd.f32 %v618, %v716
      %v718 = vpop.f32.mrf.mxu0
      %719 = vmatprep.mubr.f32.mxu0 %v340
      %720 = vmatmul.mubr.f32.gmra.mxu0 %v339
      %v721 = vpop.f32.mrf.mxu0
      %v722 = vadd.f32 %v618, %v721
      %v723 = vpop.f32.mrf.mxu0
      %724 = vmatprep.mubr.f32.mxu0 %v342
      %725 = vmatmul.mubr.f32.gmra.mxu0 %v341
      %v726 = vpop.f32.mrf.mxu0
      %v727 = vadd.f32 %v618, %v726
      %v728 = vpop.f32.mrf.mxu0
      %729 = vmatprep.mubr.f32.mxu0 %v344
      %730 = vmatmul.mubr.f32.gmra.mxu0 %v343
      %v731 = vpop.f32.mrf.mxu0
      %v732 = vadd.f32 %v618, %v731
      %v733 = vpop.f32.mrf.mxu0
      %734 = vmatprep.mubr.f32.mxu0 %v346
      %735 = vmatmul.mubr.f32.gmra.mxu0 %v345
      %v736 = vpop.f32.mrf.mxu0
      %v737 = vadd.f32 %v618, %v736
      %v738 = vpop.f32.mrf.mxu0
      %739 = vmatprep.mubr.f32.mxu0 %v348
      %740 = vmatmul.mubr.f32.gmra.mxu0 %v347
      %v741 = vpop.f32.mrf.mxu0
      %v742 = vadd.f32 %v618, %v741
      %v743 = vpop.f32.mrf.mxu0
      %744 = vmatprep.mubr.f32.mxu0 %v350
      %745 = vmatmul.mubr.f32.gmra.mxu0 %v349
      %v746 = vpop.f32.mrf.mxu0
      %v747 = vadd.f32 %v618, %v746
      %v748 = vpop.f32.mrf.mxu0
      %749 = vmatprep.mubr.f32.mxu0 %v352
      %750 = vmatmul.mubr.f32.gmra.mxu0 %v351
      %v751 = vpop.f32.mrf.mxu0
      %v752 = vadd.f32 %v618, %v751
      %v753 = vpop.f32.mrf.mxu0
      %754 = vmatprep.mubr.f32.mxu0 %v354
      %755 = vmatmul.mubr.f32.gmra.mxu0 %v353
      %v756 = vpop.f32.mrf.mxu0
      %v757 = vadd.f32 %v618, %v756
      %v758 = vpop.f32.mrf.mxu0
      %759 = vmatprep.mubr.f32.mxu0 %v356
      %760 = vmatmul.mubr.f32.gmra.mxu0 %v355
      %v761 = vpop.f32.mrf.mxu0
      %v762 = vadd.f32 %v618, %v761
      %v763 = vpop.f32.mrf.mxu0
      %764 = vmatprep.mubr.f32.mxu0 %v358
      %765 = vmatmul.mubr.f32.gmra.mxu0 %v357
      %v766 = vpop.f32.mrf.mxu0
      %v767 = vadd.f32 %v618, %v766
      %v768 = vpop.f32.mrf.mxu0
      %769 = vmatprep.mubr.f32.mxu0 %v360
      %770 = vmatmul.mubr.f32.gmra.mxu0 %v359
      %v771 = vpop.f32.mrf.mxu0
      %v772 = vadd.f32 %v618, %v771
      %v773 = vpop.f32.mrf.mxu0
      %774 = vmatprep.mubr.f32.mxu0 %v362
      %775 = vmatmul.mubr.f32.gmra.mxu0 %v361
      %v776 = vpop.f32.mrf.mxu0
      %v777 = vadd.f32 %v618, %v776
      %v778 = vpop.f32.mrf.mxu0
      %779 = vmatprep.mubr.f32.mxu0 %v364
      %780 = vmatmul.mubr.f32.gmra.mxu0 %v363
      %v781 = vpop.f32.mrf.mxu0
      %v782 = vadd.f32 %v618, %v781
      %v783 = vpop.f32.mrf.mxu0
      %784 = vmatprep.mubr.f32.mxu0 %v366
      %785 = vmatmul.mubr.f32.gmra.mxu0 %v365
      %v786 = vpop.f32.mrf.mxu0
      %v787 = vadd.f32 %v618, %v786
      %v788 = vpop.f32.mrf.mxu0
      %789 = vmatprep.mubr.f32.mxu0 %v368
      %790 = vmatmul.mubr.f32.gmra.mxu0 %v367
      %v791 = vpop.f32.mrf.mxu0
      %v792 = vadd.f32 %v618, %v791
      %v793 = vpop.f32.mrf.mxu0
      %794 = vmatprep.mubr.f32.mxu0 %v370
      %795 = vmatmul.mubr.f32.gmra.mxu0 %v369
      %v796 = vpop.f32.mrf.mxu0
      %v797 = vadd.f32 %v618, %v796
      %v798 = vpop.f32.mrf.mxu0
      %799 = vmatprep.mubr.f32.mxu0 %v372
      %800 = vmatmul.mubr.f32.gmra.mxu0 %v371
      %v801 = vpop.f32.mrf.mxu0
      %v802 = vadd.f32 %v618, %v801
      %v803 = vpop.f32.mrf.mxu0
      %804 = vmatprep.mubr.f32.mxu0 %v374
      %805 = vmatmul.mubr.f32.gmra.mxu0 %v373
      %v806 = vpop.f32.mrf.mxu0
      %v807 = vadd.f32 %v618, %v806
      %v808 = vpop.f32.mrf.mxu0
      %809 = vmatprep.mubr.f32.mxu0 %v376
      %810 = vmatmul.mubr.f32.gmra.mxu0 %v375
      %v811 = vpop.f32.mrf.mxu0
      %v812 = vadd.f32 %v618, %v811
      %v813 = vpop.f32.mrf.mxu0
      %814 = vmatprep.mubr.f32.mxu0 %v378
      %815 = vmatmul.mubr.f32.gmra.mxu0 %v377
      %v816 = vpop.f32.mrf.mxu0
      %v817 = vadd.f32 %v618, %v816
      %v818 = vpop.f32.mrf.mxu0
      %819 = vmatprep.mubr.f32.mxu0 %v380
      %820 = vmatmul.mubr.f32.gmra.mxu0 %v379
      %v821 = vpop.f32.mrf.mxu0
      %v822 = vadd.f32 %v618, %v821
      %v823 = vpop.f32.mrf.mxu0
      %824 = vmatprep.mubr.f32.mxu0 %v382
      %825 = vmatmul.mubr.f32.gmra.mxu0 %v381
      %v826 = vpop.f32.mrf.mxu0
      %v827 = vadd.f32 %v618, %v826
      %v828 = vpop.f32.mrf.mxu0
      %829 = vmatprep.mubr.f32.mxu0 %v384
      %830 = vmatmul.mubr.f32.gmra.mxu0 %v383
      %v831 = vpop.f32.mrf.mxu0
      %v832 = vadd.f32 %v618, %v831
      %v833 = vpop.f32.mrf.mxu0
      %834 = vmatprep.mubr.f32.mxu0 %v386
      %835 = vmatmul.mubr.f32.gmra.mxu0 %v385
      %v836 = vpop.f32.mrf.mxu0
      %v837 = vadd.f32 %v618, %v836
      %v838 = vpop.f32.mrf.mxu0
      %839 = vmatprep.mubr.f32.mxu0 %v388
      %840 = vmatmul.mubr.f32.gmra.mxu0 %v387
      %v841 = vpop.f32.mrf.mxu0
      %v842 = vadd.f32 %v618, %v841
      %v843 = vpop.f32.mrf.mxu0
      %844 = vmatprep.mubr.f32.mxu0 %v390
      %845 = vmatmul.mubr.f32.gmra.mxu0 %v389
      %v846 = vpop.f32.mrf.mxu0
      %v847 = vadd.f32 %v618, %v846
      %v848 = vpop.f32.mrf.mxu0
      %849 = vmatprep.mubr.f32.mxu0 %v392
      %850 = vmatmul.mubr.f32.gmra.mxu0 %v391
      %v851 = vpop.f32.mrf.mxu0
      %v852 = vadd.f32 %v618, %v851
      %v853 = vpop.f32.mrf.mxu0
      %854 = vmatprep.mubr.f32.mxu0 %v394
      %855 = vmatmul.mubr.f32.gmra.mxu0 %v393
      %v856 = vpop.f32.mrf.mxu0
      %v857 = vadd.f32 %v618, %v856
      %v858 = vpop.f32.mrf.mxu0
      %859 = vmatprep.mubr.f32.mxu0 %v396
      %860 = vmatmul.mubr.f32.gmra.mxu0 %v395
      %v861 = vpop.f32.mrf.mxu0
      %v862 = vadd.f32 %v618, %v861
      %v863 = vpop.f32.mrf.mxu0
      %864 = vmatprep.mubr.f32.mxu0 %v398
      %865 = vmatmul.mubr.f32.gmra.mxu0 %v397
      %v866 = vpop.f32.mrf.mxu0
      %v867 = vadd.f32 %v618, %v866
      %v868 = vpop.f32.mrf.mxu0
      %869 = vmatprep.mubr.f32.mxu0 %v400
      %870 = vmatmul.mubr.f32.gmra.mxu0 %v399
      %v871 = vpop.f32.mrf.mxu0
      %v872 = vadd.f32 %v618, %v871
      %v873 = vpop.f32.mrf.mxu0
      %874 = vmatprep.mubr.f32.mxu0 %v402
      %875 = vmatmul.mubr.f32.gmra.mxu0 %v401
      %v876 = vpop.f32.mrf.mxu0
      %v877 = vadd.f32 %v618, %v876
      %v878 = vpop.f32.mrf.mxu0
      %879 = vmatprep.mubr.f32.mxu0 %v404
      %880 = vmatmul.mubr.f32.gmra.mxu0 %v403
      %v881 = vpop.f32.mrf.mxu0
      %v882 = vadd.f32 %v618, %v881
      %v883 = vpop.f32.mrf.mxu0
      %884 = vmatprep.mubr.f32.mxu0 %v406
      %885 = vmatmul.mubr.f32.gmra.mxu0 %v405
      %v886 = vpop.f32.mrf.mxu0
      %v887 = vadd.f32 %v618, %v886
      %v888 = vpop.f32.mrf.mxu0
      %889 = vmatprep.mubr.f32.mxu0 %v408
      %890 = vmatmul.mubr.f32.gmra.mxu0 %v407
      %v891 = vpop.f32.mrf.mxu0
      %v892 = vadd.f32 %v618, %v891
      %v893 = vpop.f32.mrf.mxu0
      %894 = vmatprep.mubr.f32.mxu0 %v410
      %895 = vmatmul.mubr.f32.gmra.mxu0 %v409
      %v896 = vpop.f32.mrf.mxu0
      %v897 = vadd.f32 %v618, %v896
      %v898 = vpop.f32.mrf.mxu0
      %899 = vmatprep.mubr.f32.mxu0 %v412
      %900 = vmatmul.mubr.f32.gmra.mxu0 %v411
      %v901 = vpop.f32.mrf.mxu0
      %v902 = vadd.f32 %v618, %v901
      %v903 = vpop.f32.mrf.mxu0
      %904 = vmatprep.mubr.f32.mxu0 %v414
      %905 = vmatmul.mubr.f32.gmra.mxu0 %v413
      %v906 = vpop.f32.mrf.mxu0
      %v907 = vadd.f32 %v618, %v906
      %v908 = vpop.f32.mrf.mxu0
      %909 = vmatprep.mubr.f32.mxu0 %v416
      %910 = vmatmul.mubr.f32.gmra.mxu0 %v415
      %v911 = vpop.f32.mrf.mxu0
      %v912 = vadd.f32 %v618, %v911
      %v913 = vpop.f32.mrf.mxu0
      %914 = vmatprep.mubr.f32.mxu0 %v418
      %915 = vmatmul.mubr.f32.gmra.mxu0 %v417
      %v916 = vpop.f32.mrf.mxu0
      %v917 = vadd.f32 %v618, %v916
      %v918 = vpop.f32.mrf.mxu0
      %919 = vmatprep.mubr.f32.mxu0 %v420
      %920 = vmatmul.mubr.f32.gmra.mxu0 %v419
      %v921 = vpop.f32.mrf.mxu0
      %v922 = vadd.f32 %v618, %v921
      %v923 = vpop.f32.mrf.mxu0
      %924 = vmatprep.mubr.f32.mxu0 %v422
      %925 = vmatmul.mubr.f32.gmra.mxu0 %v421
      %v926 = vpop.f32.mrf.mxu0
      %v927 = vadd.f32 %v618, %v926
      %v928 = vpop.f32.mrf.mxu0
      %929 = vmatprep.mubr.f32.mxu0 %v424
      %930 = vmatmul.mubr.f32.gmra.mxu0 %v423
      %v931 = vpop.f32.mrf.mxu0
      %v932 = vadd.f32 %v618, %v931
      %v933 = vpop.f32.mrf.mxu0
      %934 = vmatprep.mubr.f32.mxu0 %v426
      %935 = vmatmul.mubr.f32.gmra.mxu0 %v425
      %v936 = vpop.f32.mrf.mxu0
      %v937 = vadd.f32 %v618, %v936
      %v938 = vpop.f32.mrf.mxu0
      %939 = vmatprep.mubr.f32.mxu0 %v428
      %940 = vmatmul.mubr.f32.gmra.mxu0 %v427
      %v941 = vpop.f32.mrf.mxu0
      %v942 = vadd.f32 %v618, %v941
      %v943 = vpop.f32.mrf.mxu0
      %944 = vmatprep.mubr.f32.mxu0 %v430
      %945 = vmatmul.mubr.f32.gmra.mxu0 %v429
      %v946 = vpop.f32.mrf.mxu0
      %v947 = vadd.f32 %v618, %v946
      %v948 = vpop.f32.mrf.mxu0
      %949 = vmatprep.mubr.f32.mxu0 %v432
      %950 = vmatmul.mubr.f32.gmra.mxu0 %v431
      %v951 = vpop.f32.mrf.mxu0
      %v952 = vadd.f32 %v618, %v951
      %v953 = vpop.f32.mrf.mxu0
      %954 = vmatprep.mubr.f32.mxu0 %v434
      %955 = vmatmul.mubr.f32.gmra.mxu0 %v433
      %v956 = vpop.f32.mrf.mxu0
      %v957 = vadd.f32 %v618, %v956
      %v958 = vpop.f32.mrf.mxu0
      %959 = vmatprep.mubr.f32.mxu0 %v436
      %960 = vmatmul.mubr.f32.gmra.mxu0 %v435
      %v961 = vpop.f32.mrf.mxu0
      %v962 = vadd.f32 %v618, %v961
      %v963 = vpop.f32.mrf.mxu0
      %964 = vmatprep.mubr.f32.mxu0 %v438
      %965 = vmatmul.mubr.f32.gmra.mxu0 %v437
      %v966 = vpop.f32.mrf.mxu0
      %v967 = vadd.f32 %v618, %v966
      %v968 = vpop.f32.mrf.mxu0
      %969 = vmatprep.mubr.f32.mxu0 %v440
      %970 = vmatmul.mubr.f32.gmra.mxu0 %v439
      %v971 = vpop.f32.mrf.mxu0
      %v972 = vadd.f32 %v618, %v971
      %v973 = vpop.f32.mrf.mxu0
      %974 = vmatprep.mubr.f32.mxu0 %v442
      %975 = vmatmul.mubr.f32.gmra.mxu0 %v441
      %v976 = vpop.f32.mrf.mxu0
      %v977 = vadd.f32 %v618, %v976
      %v978 = vpop.f32.mrf.mxu0
      %979 = vmatprep.mubr.f32.mxu0 %v444
      %980 = vmatmul.mubr.f32.gmra.mxu0 %v443
      %v981 = vpop.f32.mrf.mxu0
      %v982 = vadd.f32 %v618, %v981
      %v983 = vpop.f32.mrf.mxu0
      %984 = vmatprep.mubr.f32.mxu0 %v446
      %985 = vmatmul.mubr.f32.gmra.mxu0 %v445
      %v986 = vpop.f32.mrf.mxu0
      %v987 = vadd.f32 %v618, %v986
      %v988 = vpop.f32.mrf.mxu0
      %989 = vmatprep.mubr.f32.mxu0 %v448
      %990 = vmatmul.mubr.f32.gmra.mxu0 %v447
      %v991 = vpop.f32.mrf.mxu0
      %v992 = vadd.f32 %v618, %v991
      %v993 = vpop.f32.mrf.mxu0
      %994 = vmatprep.mubr.f32.mxu0 %v450
      %995 = vmatmul.mubr.f32.gmra.mxu0 %v449
      %v996 = vpop.f32.mrf.mxu0
      %v997 = vadd.f32 %v618, %v996
      %v998 = vpop.f32.mrf.mxu0
      %999 = vmatprep.mubr.f32.mxu0 %v452
      %1000 = vmatmul.mubr.f32.gmra.mxu0 %v451
      %v1001 = vpop.f32.mrf.mxu0
      %v1002 = vadd.f32 %v618, %v1001
      %v1003 = vpop.f32.mrf.mxu0
      %1004 = vmatprep.mubr.f32.mxu0 %v454
      %1005 = vmatmul.mubr.f32.gmra.mxu0 %v453
      %v1006 = vpop.f32.mrf.mxu0
      %v1007 = vadd.f32 %v618, %v1006
      %v1008 = vpop.f32.mrf.mxu0
      %1009 = vmatprep.mubr.f32.mxu0 %v456
      %1010 = vmatmul.mubr.f32.gmra.mxu0 %v455
      %v1011 = vpop.f32.mrf.mxu0
      %v1012 = vadd.f32 %v618, %v1011
      %v1013 = vpop.f32.mrf.mxu0
      %1014 = vmatprep.mubr.f32.mxu0 %v458
      %1015 = vmatmul.mubr.f32.gmra.mxu0 %v457
      %v1016 = vpop.f32.mrf.mxu0
      %v1017 = vadd.f32 %v618, %v1016
      %v1018 = vpop.f32.mrf.mxu0
      %1019 = vmatprep.mubr.f32.mxu0 %v460
      %1020 = vmatmul.mubr.f32.gmra.mxu0 %v459
      %v1021 = vpop.f32.mrf.mxu0
      %v1022 = vadd.f32 %v618, %v1021
      %v1023 = vpop.f32.mrf.mxu0
      %1024 = vmatprep.mubr.f32.mxu0 %v462
      %1025 = vmatmul.mubr.f32.gmra.mxu0 %v461
      %v1026 = vpop.f32.mrf.mxu0
      %v1027 = vadd.f32 %v618, %v1026
      %v1028 = vpop.f32.mrf.mxu0
      %1029 = vmatprep.mubr.f32.mxu0 %v464
      %1030 = vmatmul.mubr.f32.gmra.mxu0 %v463
      %v1031 = vpop.f32.mrf.mxu0
      %v1032 = vadd.f32 %v618, %v1031
      %v1033 = vpop.f32.mrf.mxu0
      %1034 = vmatprep.mubr.f32.mxu0 %v466
      %1035 = vmatmul.mubr.f32.gmra.mxu0 %v465
      %v1036 = vpop.f32.mrf.mxu0
      %v1037 = vadd.f32 %v618, %v1036
      %v1038 = vpop.f32.mrf.mxu0
      %1039 = vmatprep.mubr.f32.mxu0 %v468
      %1040 = vmatmul.mubr.f32.gmra.mxu0 %v467
      %v1041 = vpop.f32.mrf.mxu0
      %v1042 = vadd.f32 %v618, %v1041
      %v1043 = vpop.f32.mrf.mxu0
      %1044 = vmatprep.mubr.f32.mxu0 %v470
      %1045 = vmatmul.mubr.f32.gmra.mxu0 %v469
      %v1046 = vpop.f32.mrf.mxu0
      %v1047 = vadd.f32 %v618, %v1046
      %v1048 = vpop.f32.mrf.mxu0
      %1049 = vmatprep.mubr.f32.mxu0 %v472
      %1050 = vmatmul.mubr.f32.gmra.mxu0 %v471
      %v1051 = vpop.f32.mrf.mxu0
      %v1052 = vadd.f32 %v618, %v1051
      %v1053 = vpop.f32.mrf.mxu0
      %1054 = vmatprep.mubr.f32.mxu0 %v474
      %1055 = vmatmul.mubr.f32.gmra.mxu0 %v473
      %v1056 = vpop.f32.mrf.mxu0
      %v1057 = vadd.f32 %v618, %v1056
      %v1058 = vpop.f32.mrf.mxu0
      %1059 = vmatprep.mubr.f32.mxu0 %v476
      %1060 = vmatmul.mubr.f32.gmra.mxu0 %v475
      %v1061 = vpop.f32.mrf.mxu0
      %v1062 = vadd.f32 %v618, %v1061
      %v1063 = vpop.f32.mrf.mxu0
      %1064 = vmatprep.mubr.f32.mxu0 %v478
      %1065 = vmatmul.mubr.f32.gmra.mxu0 %v477
      %v1066 = vpop.f32.mrf.mxu0
      %v1067 = vadd.f32 %v618, %v1066
      %v1068 = vpop.f32.mrf.mxu0
      %1069 = vmatprep.mubr.f32.mxu0 %v480
      %1070 = vmatmul.mubr.f32.gmra.mxu0 %v479
      %v1071 = vpop.f32.mrf.mxu0
      %v1072 = vadd.f32 %v618, %v1071
      %v1073 = vpop.f32.mrf.mxu0
      %1074 = vmatprep.mubr.f32.mxu0 %v482
      %1075 = vmatmul.mubr.f32.gmra.mxu0 %v481
      %v1076 = vpop.f32.mrf.mxu0
      %v1077 = vadd.f32 %v618, %v1076
      %v1078 = vpop.f32.mrf.mxu0
      %1079 = vmatprep.mubr.f32.mxu0 %v484
      %1080 = vmatmul.mubr.f32.gmra.mxu0 %v483
      %v1081 = vpop.f32.mrf.mxu0
      %v1082 = vadd.f32 %v618, %v1081
      %v1083 = vpop.f32.mrf.mxu0
      %1084 = vmatprep.mubr.f32.mxu0 %v486
      %1085 = vmatmul.mubr.f32.gmra.mxu0 %v485
      %v1086 = vpop.f32.mrf.mxu0
      %v1087 = vadd.f32 %v618, %v1086
      %v1088 = vpop.f32.mrf.mxu0
      %1089 = vmatprep.mubr.f32.mxu0 %v488
      %1090 = vmatmul.mubr.f32.gmra.mxu0 %v487
      %v1091 = vpop.f32.mrf.mxu0
      %v1092 = vadd.f32 %v618, %v1091
      %v1093 = vpop.f32.mrf.mxu0
      %1094 = vmatprep.mubr.f32.mxu0 %v490
      %1095 = vmatmul.mubr.f32.gmra.mxu0 %v489
      %v1096 = vpop.f32.mrf.mxu0
      %v1097 = vadd.f32 %v618, %v1096
      %v1098 = vpop.f32.mrf.mxu0
      %1099 = vmatprep.mubr.f32.mxu0 %v492
      %1100 = vmatmul.mubr.f32.gmra.mxu0 %v491
      %v1101 = vpop.f32.mrf.mxu0
      %v1102 = vadd.f32 %v618, %v1101
      %v1103 = vpop.f32.mrf.mxu0
      %1104 = vmatprep.mubr.f32.mxu0 %v494
      %1105 = vmatmul.mubr.f32.gmra.mxu0 %v493
      %v1106 = vpop.f32.mrf.mxu0
      %v1107 = vadd.f32 %v618, %v1106
      %v1108 = vpop.f32.mrf.mxu0
      %1109 = vmatprep.mubr.f32.mxu0 %v496
      %1110 = vmatmul.mubr.f32.gmra.mxu0 %v495
      %v1111 = vpop.f32.mrf.mxu0
      %v1112 = vadd.f32 %v618, %v1111
      %v1113 = vpop.f32.mrf.mxu0
      %1114 = vmatprep.mubr.f32.mxu0 %v498
      %1115 = vmatmul.mubr.f32.gmra.mxu0 %v497
      %v1116 = vpop.f32.mrf.mxu0
      %v1117 = vadd.f32 %v618, %v1116
      %v1118 = vpop.f32.mrf.mxu0
      %1119 = vmatprep.mubr.f32.mxu0 %v500
      %1120 = vmatmul.mubr.f32.gmra.mxu0 %v499
      %v1121 = vpop.f32.mrf.mxu0
      %v1122 = vadd.f32 %v618, %v1121
      %v1123 = vpop.f32.mrf.mxu0
      %1124 = vmatprep.mubr.f32.mxu0 %v502
      %1125 = vmatmul.mubr.f32.gmra.mxu0 %v501
      %v1126 = vpop.f32.mrf.mxu0
      %v1127 = vadd.f32 %v618, %v1126
      %v1128 = vpop.f32.mrf.mxu0
      %1129 = vmatprep.mubr.f32.mxu0 %v504
      %1130 = vmatmul.mubr.f32.gmra.mxu0 %v503
      %v1131 = vpop.f32.mrf.mxu0
      %v1132 = vadd.f32 %v618, %v1131
      %v1133 = vpop.f32.mrf.mxu0
      %1134 = vmatprep.mubr.f32.mxu0 %v506
      %1135 = vmatmul.mubr.f32.gmra.mxu0 %v505
      %v1136 = vpop.f32.mrf.mxu0
      %v1137 = vadd.f32 %v618, %v1136
      %v1138 = vpop.f32.mrf.mxu0
      %1139 = vmatprep.mubr.f32.mxu0 %v508
      %1140 = vmatmul.mubr.f32.gmra.mxu0 %v507
      %v1141 = vpop.f32.mrf.mxu0
      %v1142 = vadd.f32 %v618, %v1141
      %v1143 = vpop.f32.mrf.mxu0
      %1144 = vmatprep.mubr.f32.mxu0 %v510
      %1145 = vmatmul.mubr.f32.gmra.mxu0 %v509
      %v1146 = vpop.f32.mrf.mxu0
      %v1147 = vadd.f32 %v618, %v1146
      %v1148 = vpop.f32.mrf.mxu0
      %1149 = vmatprep.mubr.f32.mxu0 %v512
      %1150 = vmatmul.mubr.f32.gmra.mxu0 %v511
      %v1151 = vpop.f32.mrf.mxu0
      %v1152 = vadd.f32 %v618, %v1151
      %v1153 = vpop.f32.mrf.mxu0
      %1154 = vmatprep.mubr.f32.mxu0 %v514
      %1155 = vmatmul.mubr.f32.gmra.mxu0 %v513
      %v1156 = vpop.f32.mrf.mxu0
      %v1157 = vadd.f32 %v618, %v1156
      %v1158 = vpop.f32.mrf.mxu0
      %1159 = vmatprep.mubr.f32.mxu0 %v516
      %1160 = vmatmul.mubr.f32.gmra.mxu0 %v515
      %v1161 = vpop.f32.mrf.mxu0
      %v1162 = vadd.f32 %v618, %v1161
      %v1163 = vpop.f32.mrf.mxu0
      %1164 = vmatprep.mubr.f32.mxu0 %v518
      %1165 = vmatmul.mubr.f32.gmra.mxu0 %v517
      %v1166 = vpop.f32.mrf.mxu0
      %v1167 = vadd.f32 %v618, %v1166
      %v1168 = vpop.f32.mrf.mxu0
      %1169 = vmatprep.mubr.f32.mxu0 %v520
      %1170 = vmatmul.mubr.f32.gmra.mxu0 %v519
      %v1171 = vpop.f32.mrf.mxu0
      %v1172 = vadd.f32 %v618, %v1171
      %v1173 = vpop.f32.mrf.mxu0
      %1174 = vmatprep.mubr.f32.mxu0 %v522
      %1175 = vmatmul.mubr.f32.gmra.mxu0 %v521
      %v1176 = vpop.f32.mrf.mxu0
      %v1177 = vadd.f32 %v618, %v1176
      %v1178 = vpop.f32.mrf.mxu0
      %1179 = vmatprep.mubr.f32.mxu0 %v524
      %1180 = vmatmul.mubr.f32.gmra.mxu0 %v523
      %v1181 = vpop.f32.mrf.mxu0
      %v1182 = vadd.f32 %v618, %v1181
      %v1183 = vpop.f32.mrf.mxu0
      %1184 = vmatprep.mubr.f32.mxu0 %v526
      %1185 = vmatmul.mubr.f32.gmra.mxu0 %v525
      %v1186 = vpop.f32.mrf.mxu0
      %v1187 = vadd.f32 %v618, %v1186
      %v1188 = vpop.f32.mrf.mxu0
      %1189 = vmatprep.mubr.f32.mxu0 %v528
      %1190 = vmatmul.mubr.f32.gmra.mxu0 %v527
      %v1191 = vpop.f32.mrf.mxu0
      %v1192 = vadd.f32 %v618, %v1191
      %v1193 = vpop.f32.mrf.mxu0
      %1194 = vmatprep.mubr.f32.mxu0 %v530
      %1195 = vmatmul.mubr.f32.gmra.mxu0 %v529
      %v1196 = vpop.f32.mrf.mxu0
      %v1197 = vadd.f32 %v618, %v1196
      %v1198 = vpop.f32.mrf.mxu0
      %1199 = vmatprep.mubr.f32.mxu0 %v532
      %1200 = vmatmul.mubr.f32.gmra.mxu0 %v531
      %v1201 = vpop.f32.mrf.mxu0
      %v1202 = vadd.f32 %v618, %v1201
      %v1203 = vpop.f32.mrf.mxu0
      %1204 = vmatprep.mubr.f32.mxu0 %v534
      %1205 = vmatmul.mubr.f32.gmra.mxu0 %v533
      %v1206 = vpop.f32.mrf.mxu0
      %v1207 = vadd.f32 %v618, %v1206
      %v1208 = vpop.f32.mrf.mxu0
      %1209 = vmatprep.mubr.f32.mxu0 %v536
      %1210 = vmatmul.mubr.f32.gmra.mxu0 %v535
      %v1211 = vpop.f32.mrf.mxu0
      %v1212 = vadd.f32 %v618, %v1211
      %v1213 = vpop.f32.mrf.mxu0
      %1214 = vmatprep.mubr.f32.mxu0 %v538
      %1215 = vmatmul.mubr.f32.gmra.mxu0 %v537
      %v1216 = vpop.f32.mrf.mxu0
      %v1217 = vadd.f32 %v618, %v1216
      %v1218 = vpop.f32.mrf.mxu0
      %1219 = vmatprep.mubr.f32.mxu0 %v540
      %1220 = vmatmul.mubr.f32.gmra.mxu0 %v539
      %v1221 = vpop.f32.mrf.mxu0
      %v1222 = vadd.f32 %v618, %v1221
      %v1223 = vpop.f32.mrf.mxu0
      %1224 = vmatprep.mubr.f32.mxu0 %v542
      %1225 = vmatmul.mubr.f32.gmra.mxu0 %v541
      %v1226 = vpop.f32.mrf.mxu0
      %v1227 = vadd.f32 %v618, %v1226
      %v1228 = vpop.f32.mrf.mxu0
      %1229 = vmatprep.mubr.f32.mxu0 %v544
      %1230 = vmatmul.mubr.f32.gmra.mxu0 %v543
      %v1231 = vpop.f32.mrf.mxu0
      %v1232 = vadd.f32 %v618, %v1231
      %v1233 = vpop.f32.mrf.mxu0
      %1234 = vmatprep.mubr.f32.mxu0 %v546
      %1235 = vmatmul.mubr.f32.gmra.mxu0 %v545
      %v1236 = vpop.f32.mrf.mxu0
      %v1237 = vadd.f32 %v618, %v1236
      %v1238 = vpop.f32.mrf.mxu0
      %1239 = vmatprep.mubr.f32.mxu0 %v548
      %1240 = vmatmul.mubr.f32.gmra.mxu0 %v547
      %v1241 = vpop.f32.mrf.mxu0
      %v1242 = vadd.f32 %v618, %v1241
      %v1243 = vpop.f32.mrf.mxu0
      %1244 = vmatprep.mubr.f32.mxu0 %v550
      %1245 = vmatmul.mubr.f32.gmra.mxu0 %v549
      %v1246 = vpop.f32.mrf.mxu0
      %v1247 = vadd.f32 %v618, %v1246
      %v1248 = vpop.f32.mrf.mxu0
      %1249 = vmatprep.mubr.f32.mxu0 %v552
      %1250 = vmatmul.mubr.f32.gmra.mxu0 %v551
      %v1251 = vpop.f32.mrf.mxu0
      %v1252 = vadd.f32 %v618, %v1251
      %v1253 = vpop.f32.mrf.mxu0
      %1254 = vmatprep.mubr.f32.mxu0 %v554
      %1255 = vmatmul.mubr.f32.gmra.mxu0 %v553
      %v1256 = vpop.f32.mrf.mxu0
      %v1257 = vadd.f32 %v618, %v1256
      %v1258 = vpop.f32.mrf.mxu0
      %1259 = vmatprep.mubr.f32.mxu0 %v556
      %1260 = vmatmul.mubr.f32.gmra.mxu0 %v555
      %v1261 = vpop.f32.mrf.mxu0
      %v1262 = vadd.f32 %v618, %v1261
      %v1263 = vpop.f32.mrf.mxu0
      %1264 = vmatprep.mubr.f32.mxu0 %v558
      %1265 = vmatmul.mubr.f32.gmra.mxu0 %v557
      %v1266 = vpop.f32.mrf.mxu0
      %v1267 = vadd.f32 %v618, %v1266
      %v1268 = vpop.f32.mrf.mxu0
      %1269 = vmatprep.mubr.f32.mxu0 %v560
      %1270 = vmatmul.mubr.f32.gmra.mxu0 %v559
      %v1271 = vpop.f32.mrf.mxu0
      %v1272 = vadd.f32 %v618, %v1271
      %v1273 = vpop.f32.mrf.mxu0
      %1274 = vmatprep.mubr.f32.mxu0 %v562
      %1275 = vmatmul.mubr.f32.gmra.mxu0 %v561
      %v1276 = vpop.f32.mrf.mxu0
      %v1277 = vadd.f32 %v618, %v1276
      %v1278 = vpop.f32.mrf.mxu0
      %1279 = vmatprep.mubr.f32.mxu0 %v564
      %1280 = vmatmul.mubr.f32.gmra.mxu0 %v563
      %v1281 = vpop.f32.mrf.mxu0
      %v1282 = vadd.f32 %v618, %v1281
      %v1283 = vpop.f32.mrf.mxu0
      %1284 = vmatprep.mubr.f32.mxu0 %v566
      %1285 = vmatmul.mubr.f32.gmra.mxu0 %v565
      %v1286 = vpop.f32.mrf.mxu0
      %v1287 = vadd.f32 %v618, %v1286
      %v1288 = vpop.f32.mrf.mxu0
      %1289 = vmatprep.mubr.f32.mxu0 %v568
      %1290 = vmatmul.mubr.f32.gmra.mxu0 %v567
      %v1291 = vpop.f32.mrf.mxu0
      %v1292 = vadd.f32 %v618, %v1291
      %v1293 = vpop.f32.mrf.mxu0
      %1294 = vmatprep.mubr.f32.mxu0 %v570
      %1295 = vmatmul.mubr.f32.gmra.mxu0 %v569
      %v1296 = vpop.f32.mrf.mxu0
      %v1297 = vadd.f32 %v618, %v1296
      %v1298 = vpop.f32.mrf.mxu0
      %1299 = vmatprep.mubr.f32.mxu0 %v572
      %1300 = vmatmul.mubr.f32.gmra.mxu0 %v571
      %v1301 = vpop.f32.mrf.mxu0
      %v1302 = vadd.f32 %v618, %v1301
      %v1303 = vpop.f32.mrf.mxu0
      %1304 = vmatprep.mubr.f32.mxu0 %v574
      %1305 = vmatmul.mubr.f32.gmra.mxu0 %v573
      %v1306 = vpop.f32.mrf.mxu0
      %v1307 = vadd.f32 %v618, %v1306
      %v1308 = vpop.f32.mrf.mxu0
      %1309 = vmatprep.mubr.f32.mxu0 %v576
      %1310 = vmatmul.mubr.f32.gmra.mxu0 %v575
      %v1311 = vpop.f32.mrf.mxu0
      %v1312 = vadd.f32 %v618, %v1311
      %v1313 = vpop.f32.mrf.mxu0
      %1314 = vmatprep.mubr.f32.mxu0 %v578
      %1315 = vmatmul.mubr.f32.gmra.mxu0 %v577
      %v1316 = vpop.f32.mrf.mxu0
      %v1317 = vadd.f32 %v618, %v1316
      %v1318 = vpop.f32.mrf.mxu0
      %1319 = vmatprep.mubr.f32.mxu0 %v580
      %1320 = vmatmul.mubr.f32.gmra.mxu0 %v579
      %v1321 = vpop.f32.mrf.mxu0
      %v1322 = vadd.f32 %v618, %v1321
      %v1323 = vpop.f32.mrf.mxu0
      %1324 = vdwg.mxu0
      %v1325 = vmax.f32 %v687, 0.0
      %v1326 = vmax.f32 %v692, 0.0
      %v1327 = vmax.f32 %v697, 0.0
      %v1328 = vmax.f32 %v702, 0.0
      %v1329 = vmax.f32 %v707, 0.0
      %v1330 = vmax.f32 %v712, 0.0
      %v1331 = vmax.f32 %v717, 0.0
      %v1332 = vmax.f32 %v722, 0.0
      %v1333 = vmax.f32 %v727, 0.0
      %v1334 = vmax.f32 %v732, 0.0
      %v1335 = vmax.f32 %v737, 0.0
      %v1336 = vmax.f32 %v742, 0.0
      %v1337 = vmax.f32 %v747, 0.0
      %v1338 = vmax.f32 %v752, 0.0
      %v1339 = vmax.f32 %v757, 0.0
      %v1340 = vmax.f32 %v762, 0.0
      %v1341 = vmax.f32 %v767, 0.0
      %v1342 = vmax.f32 %v772, 0.0
      %v1343 = vmax.f32 %v777, 0.0
      %v1344 = vmax.f32 %v782, 0.0
      %v1345 = vmax.f32 %v787, 0.0
      %v1346 = vmax.f32 %v792, 0.0
      %v1347 = vmax.f32 %v797, 0.0
      %v1348 = vmax.f32 %v802, 0.0
      %v1349 = vmax.f32 %v807, 0.0
      %v1350 = vmax.f32 %v812, 0.0
      %v1351 = vmax.f32 %v817, 0.0
      %v1352 = vmax.f32 %v822, 0.0
      %v1353 = vmax.f32 %v827, 0.0
      %v1354 = vmax.f32 %v832, 0.0
      %v1355 = vmax.f32 %v837, 0.0
      %v1356 = vmax.f32 %v842, 0.0
      %v1357 = vmax.f32 %v847, 0.0
      %v1358 = vmax.f32 %v852, 0.0
      %v1359 = vmax.f32 %v857, 0.0
      %v1360 = vmax.f32 %v862, 0.0
      %v1361 = vmax.f32 %v867, 0.0
      %v1362 = vmax.f32 %v872, 0.0
      %v1363 = vmax.f32 %v877, 0.0
      %v1364 = vmax.f32 %v882, 0.0
      %v1365 = vmax.f32 %v887, 0.0
      %v1366 = vmax.f32 %v892, 0.0
      %v1367 = vmax.f32 %v897, 0.0
      %v1368 = vmax.f32 %v902, 0.0
      %v1369 = vmax.f32 %v907, 0.0
      %v1370 = vmax.f32 %v912, 0.0
      %v1371 = vmax.f32 %v917, 0.0
      %v1372 = vmax.f32 %v922, 0.0
      %v1373 = vmax.f32 %v927, 0.0
      %v1374 = vmax.f32 %v932, 0.0
      %v1375 = vmax.f32 %v937, 0.0
      %v1376 = vmax.f32 %v942, 0.0
      %v1377 = vmax.f32 %v947, 0.0
      %v1378 = vmax.f32 %v952, 0.0
      %v1379 = vmax.f32 %v957, 0.0
      %v1380 = vmax.f32 %v962, 0.0
      %v1381 = vmax.f32 %v967, 0.0
      %v1382 = vmax.f32 %v972, 0.0
      %v1383 = vmax.f32 %v977, 0.0
      %v1384 = vmax.f32 %v982, 0.0
      %v1385 = vmax.f32 %v987, 0.0
      %v1386 = vmax.f32 %v992, 0.0
      %v1387 = vmax.f32 %v997, 0.0
      %v1388 = vmax.f32 %v1002, 0.0
      %v1389 = vmax.f32 %v1007, 0.0
      %v1390 = vmax.f32 %v1012, 0.0
      %v1391 = vmax.f32 %v1017, 0.0
      %v1392 = vmax.f32 %v1022, 0.0
      %v1393 = vmax.f32 %v1027, 0.0
      %v1394 = vmax.f32 %v1032, 0.0
      %v1395 = vmax.f32 %v1037, 0.0
      %v1396 = vmax.f32 %v1042, 0.0
      %v1397 = vmax.f32 %v1047, 0.0
      %v1398 = vmax.f32 %v1052, 0.0
      %v1399 = vmax.f32 %v1057, 0.0
      %v1400 = vmax.f32 %v1062, 0.0
      %v1401 = vmax.f32 %v1067, 0.0
      %v1402 = vmax.f32 %v1072, 0.0
      %v1403 = vmax.f32 %v1077, 0.0
      %v1404 = vmax.f32 %v1082, 0.0
      %v1405 = vmax.f32 %v1087, 0.0
      %v1406 = vmax.f32 %v1092, 0.0
      %v1407 = vmax.f32 %v1097, 0.0
      %v1408 = vmax.f32 %v1102, 0.0
      %v1409 = vmax.f32 %v1107, 0.0
      %v1410 = vmax.f32 %v1112, 0.0
      %v1411 = vmax.f32 %v1117, 0.0
      %v1412 = vmax.f32 %v1122, 0.0
      %v1413 = vmax.f32 %v1127, 0.0
      %v1414 = vmax.f32 %v1132, 0.0
      %v1415 = vmax.f32 %v1137, 0.0
      %v1416 = vmax.f32 %v1142, 0.0
      %v1417 = vmax.f32 %v1147, 0.0
      %v1418 = vmax.f32 %v1152, 0.0
      %v1419 = vmax.f32 %v1157, 0.0
      %v1420 = vmax.f32 %v1162, 0.0
      %v1421 = vmax.f32 %v1167, 0.0
      %v1422 = vmax.f32 %v1172, 0.0
      %v1423 = vmax.f32 %v1177, 0.0
      %v1424 = vmax.f32 %v1182, 0.0
      %v1425 = vmax.f32 %v1187, 0.0
      %v1426 = vmax.f32 %v1192, 0.0
      %v1427 = vmax.f32 %v1197, 0.0
      %v1428 = vmax.f32 %v1202, 0.0
      %v1429 = vmax.f32 %v1207, 0.0
      %v1430 = vmax.f32 %v1212, 0.0
      %v1431 = vmax.f32 %v1217, 0.0
      %v1432 = vmax.f32 %v1222, 0.0
      %v1433 = vmax.f32 %v1227, 0.0
      %v1434 = vmax.f32 %v1232, 0.0
      %v1435 = vmax.f32 %v1237, 0.0
      %v1436 = vmax.f32 %v1242, 0.0
      %v1437 = vmax.f32 %v1247, 0.0
      %v1438 = vmax.f32 %v1252, 0.0
      %v1439 = vmax.f32 %v1257, 0.0
      %v1440 = vmax.f32 %v1262, 0.0
      %v1441 = vmax.f32 %v1267, 0.0
      %v1442 = vmax.f32 %v1272, 0.0
      %v1443 = vmax.f32 %v1277, 0.0
      %v1444 = vmax.f32 %v1282, 0.0
      %v1445 = vmax.f32 %v1287, 0.0
      %v1446 = vmax.f32 %v1292, 0.0
      %v1447 = vmax.f32 %v1297, 0.0
      %v1448 = vmax.f32 %v1302, 0.0
      %v1449 = vmax.f32 %v1307, 0.0
      %v1450 = vmax.f32 %v1312, 0.0
      %v1451 = vmax.f32 %v1317, 0.0
      %v1452 = vmax.f32 %v1322, 0.0
      %v1453 = vld [vmem:[%s3] sm:$0x1]
      %v1455 = vlaneseq
      %v1456 = vshrl.u32 %v1455, 7
      %v1457 = vsub.s32 0, %v1456
      %v1458 = vrot.slane %v1453, %v1457
      %v1460 = vmul.f32 %v1325, %v1458
      %v1461 = vmul.f32 %v1326, %v1458
      %v1462 = vmul.f32 %v1327, %v1458
      %v1463 = vmul.f32 %v1328, %v1458
      %v1464 = vmul.f32 %v1329, %v1458
      %v1465 = vmul.f32 %v1330, %v1458
      %v1466 = vmul.f32 %v1331, %v1458
      %v1467 = vmul.f32 %v1332, %v1458
      %v1468 = vmul.f32 %v1333, %v1458
      %v1469 = vmul.f32 %v1334, %v1458
      %v1470 = vmul.f32 %v1335, %v1458
      %v1471 = vmul.f32 %v1336, %v1458
      %v1472 = vmul.f32 %v1337, %v1458
      %v1473 = vmul.f32 %v1338, %v1458
      %v1474 = vmul.f32 %v1339, %v1458
      %v1475 = vmul.f32 %v1340, %v1458
      %v1476 = vmul.f32 %v1341, %v1458
      %v1477 = vmul.f32 %v1342, %v1458
      %v1478 = vmul.f32 %v1343, %v1458
      %v1479 = vmul.f32 %v1344, %v1458
      %v1480 = vmul.f32 %v1345, %v1458
      %v1481 = vmul.f32 %v1346, %v1458
      %v1482 = vmul.f32 %v1347, %v1458
      %v1483 = vmul.f32 %v1348, %v1458
      %v1484 = vmul.f32 %v1349, %v1458
      %v1485 = vmul.f32 %v1350, %v1458
      %v1486 = vmul.f32 %v1351, %v1458
      %v1487 = vmul.f32 %v1352, %v1458
      %v1488 = vmul.f32 %v1353, %v1458
      %v1489 = vmul.f32 %v1354, %v1458
      %v1490 = vmul.f32 %v1355, %v1458
      %v1491 = vmul.f32 %v1356, %v1458
      %v1492 = vmul.f32 %v1357, %v1458
      %v1493 = vmul.f32 %v1358, %v1458
      %v1494 = vmul.f32 %v1359, %v1458
      %v1495 = vmul.f32 %v1360, %v1458
      %v1496 = vmul.f32 %v1361, %v1458
      %v1497 = vmul.f32 %v1362, %v1458
      %v1498 = vmul.f32 %v1363, %v1458
      %v1499 = vmul.f32 %v1364, %v1458
      %v1500 = vmul.f32 %v1365, %v1458
      %v1501 = vmul.f32 %v1366, %v1458
      %v1502 = vmul.f32 %v1367, %v1458
      %v1503 = vmul.f32 %v1368, %v1458
      %v1504 = vmul.f32 %v1369, %v1458
      %v1505 = vmul.f32 %v1370, %v1458
      %v1506 = vmul.f32 %v1371, %v1458
      %v1507 = vmul.f32 %v1372, %v1458
      %v1508 = vmul.f32 %v1373, %v1458
      %v1509 = vmul.f32 %v1374, %v1458
      %v1510 = vmul.f32 %v1375, %v1458
      %v1511 = vmul.f32 %v1376, %v1458
      %v1512 = vmul.f32 %v1377, %v1458
      %v1513 = vmul.f32 %v1378, %v1458
      %v1514 = vmul.f32 %v1379, %v1458
      %v1515 = vmul.f32 %v1380, %v1458
      %v1516 = vmul.f32 %v1381, %v1458
      %v1517 = vmul.f32 %v1382, %v1458
      %v1518 = vmul.f32 %v1383, %v1458
      %v1519 = vmul.f32 %v1384, %v1458
      %v1520 = vmul.f32 %v1385, %v1458
      %v1521 = vmul.f32 %v1386, %v1458
      %v1522 = vmul.f32 %v1387, %v1458
      %v1523 = vmul.f32 %v1388, %v1458
      %v1524 = vmul.f32 %v1389, %v1458
      %v1525 = vmul.f32 %v1390, %v1458
      %v1526 = vmul.f32 %v1391, %v1458
      %v1527 = vmul.f32 %v1392, %v1458
      %v1528 = vmul.f32 %v1393, %v1458
      %v1529 = vmul.f32 %v1394, %v1458
      %v1530 = vmul.f32 %v1395, %v1458
      %v1531 = vmul.f32 %v1396, %v1458
      %v1532 = vmul.f32 %v1397, %v1458
      %v1533 = vmul.f32 %v1398, %v1458
      %v1534 = vmul.f32 %v1399, %v1458
      %v1535 = vmul.f32 %v1400, %v1458
      %v1536 = vmul.f32 %v1401, %v1458
      %v1537 = vmul.f32 %v1402, %v1458
      %v1538 = vmul.f32 %v1403, %v1458
      %v1539 = vmul.f32 %v1404, %v1458
      %v1540 = vmul.f32 %v1405, %v1458
      %v1541 = vmul.f32 %v1406, %v1458
      %v1542 = vmul.f32 %v1407, %v1458
      %v1543 = vmul.f32 %v1408, %v1458
      %v1544 = vmul.f32 %v1409, %v1458
      %v1545 = vmul.f32 %v1410, %v1458
      %v1546 = vmul.f32 %v1411, %v1458
      %v1547 = vmul.f32 %v1412, %v1458
      %v1548 = vmul.f32 %v1413, %v1458
      %v1549 = vmul.f32 %v1414, %v1458
      %v1550 = vmul.f32 %v1415, %v1458
      %v1551 = vmul.f32 %v1416, %v1458
      %v1552 = vmul.f32 %v1417, %v1458
      %v1553 = vmul.f32 %v1418, %v1458
      %v1554 = vmul.f32 %v1419, %v1458
      %v1555 = vmul.f32 %v1420, %v1458
      %v1556 = vmul.f32 %v1421, %v1458
      %v1557 = vmul.f32 %v1422, %v1458
      %v1558 = vmul.f32 %v1423, %v1458
      %v1559 = vmul.f32 %v1424, %v1458
      %v1560 = vmul.f32 %v1425, %v1458
      %v1561 = vmul.f32 %v1426, %v1458
      %v1562 = vmul.f32 %v1427, %v1458
      %v1563 = vmul.f32 %v1428, %v1458
      %v1564 = vmul.f32 %v1429, %v1458
      %v1565 = vmul.f32 %v1430, %v1458
      %v1566 = vmul.f32 %v1431, %v1458
      %v1567 = vmul.f32 %v1432, %v1458
      %v1568 = vmul.f32 %v1433, %v1458
      %v1569 = vmul.f32 %v1434, %v1458
      %v1570 = vmul.f32 %v1435, %v1458
      %v1571 = vmul.f32 %v1436, %v1458
      %v1572 = vmul.f32 %v1437, %v1458
      %v1573 = vmul.f32 %v1438, %v1458
      %v1574 = vmul.f32 %v1439, %v1458
      %v1575 = vmul.f32 %v1440, %v1458
      %v1576 = vmul.f32 %v1441, %v1458
      %v1577 = vmul.f32 %v1442, %v1458
      %v1578 = vmul.f32 %v1443, %v1458
      %v1579 = vmul.f32 %v1444, %v1458
      %v1580 = vmul.f32 %v1445, %v1458
      %v1581 = vmul.f32 %v1446, %v1458
      %v1582 = vmul.f32 %v1447, %v1458
      %v1583 = vmul.f32 %v1448, %v1458
      %v1584 = vmul.f32 %v1449, %v1458
      %v1585 = vmul.f32 %v1450, %v1458
      %v1586 = vmul.f32 %v1451, %v1458
      %v1587 = vmul.f32 %v1452, %v1458
      %1588 = vadd.xlane.f32.xlu0 %v1460
      %v1589 = vpop.xlane.xlu0 %1588
      %1590 = vadd.xlane.f32.xlu0 %v1461
      %v1591 = vpop.xlane.xlu0 %1590
      %1592 = vadd.xlane.f32.xlu0 %v1462
      %v1593 = vpop.xlane.xlu0 %1592
      %1594 = vadd.xlane.f32.xlu0 %v1463
      %v1595 = vpop.xlane.xlu0 %1594
      %1596 = vadd.xlane.f32.xlu0 %v1464
      %v1597 = vpop.xlane.xlu0 %1596
      %1598 = vadd.xlane.f32.xlu0 %v1465
      %v1599 = vpop.xlane.xlu0 %1598
      %1600 = vadd.xlane.f32.xlu0 %v1466
      %v1601 = vpop.xlane.xlu0 %1600
      %1602 = vadd.xlane.f32.xlu0 %v1467
      %v1603 = vpop.xlane.xlu0 %1602
      %1604 = vadd.xlane.f32.xlu0 %v1468
      %v1605 = vpop.xlane.xlu0 %1604
      %1606 = vadd.xlane.f32.xlu0 %v1469
      %v1607 = vpop.xlane.xlu0 %1606
      %1608 = vadd.xlane.f32.xlu0 %v1470
      %v1609 = vpop.xlane.xlu0 %1608
      %1610 = vadd.xlane.f32.xlu0 %v1471
      %v1611 = vpop.xlane.xlu0 %1610
      %1612 = vadd.xlane.f32.xlu0 %v1472
      %v1613 = vpop.xlane.xlu0 %1612
      %1614 = vadd.xlane.f32.xlu0 %v1473
      %v1615 = vpop.xlane.xlu0 %1614
      %1616 = vadd.xlane.f32.xlu0 %v1474
      %v1617 = vpop.xlane.xlu0 %1616
      %1618 = vadd.xlane.f32.xlu0 %v1475
      %v1619 = vpop.xlane.xlu0 %1618
      %1620 = vadd.xlane.f32.xlu0 %v1476
      %v1621 = vpop.xlane.xlu0 %1620
      %1622 = vadd.xlane.f32.xlu0 %v1477
      %v1623 = vpop.xlane.xlu0 %1622
      %1624 = vadd.xlane.f32.xlu0 %v1478
      %v1625 = vpop.xlane.xlu0 %1624
      %1626 = vadd.xlane.f32.xlu0 %v1479
      %v1627 = vpop.xlane.xlu0 %1626
      %1628 = vadd.xlane.f32.xlu0 %v1480
      %v1629 = vpop.xlane.xlu0 %1628
      %1630 = vadd.xlane.f32.xlu0 %v1481
      %v1631 = vpop.xlane.xlu0 %1630
      %1632 = vadd.xlane.f32.xlu0 %v1482
      %v1633 = vpop.xlane.xlu0 %1632
      %1634 = vadd.xlane.f32.xlu0 %v1483
      %v1635 = vpop.xlane.xlu0 %1634
      %1636 = vadd.xlane.f32.xlu0 %v1484
      %v1637 = vpop.xlane.xlu0 %1636
      %1638 = vadd.xlane.f32.xlu0 %v1485
      %v1639 = vpop.xlane.xlu0 %1638
      %1640 = vadd.xlane.f32.xlu0 %v1486
      %v1641 = vpop.xlane.xlu0 %1640
      %1642 = vadd.xlane.f32.xlu0 %v1487
      %v1643 = vpop.xlane.xlu0 %1642
      %1644 = vadd.xlane.f32.xlu0 %v1488
      %v1645 = vpop.xlane.xlu0 %1644
      %1646 = vadd.xlane.f32.xlu0 %v1489
      %v1647 = vpop.xlane.xlu0 %1646
      %1648 = vadd.xlane.f32.xlu0 %v1490
      %v1649 = vpop.xlane.xlu0 %1648
      %1650 = vadd.xlane.f32.xlu0 %v1491
      %v1651 = vpop.xlane.xlu0 %1650
      %1652 = vadd.xlane.f32.xlu0 %v1492
      %v1653 = vpop.xlane.xlu0 %1652
      %1654 = vadd.xlane.f32.xlu0 %v1493
      %v1655 = vpop.xlane.xlu0 %1654
      %1656 = vadd.xlane.f32.xlu0 %v1494
      %v1657 = vpop.xlane.xlu0 %1656
      %1658 = vadd.xlane.f32.xlu0 %v1495
      %v1659 = vpop.xlane.xlu0 %1658
      %1660 = vadd.xlane.f32.xlu0 %v1496
      %v1661 = vpop.xlane.xlu0 %1660
      %1662 = vadd.xlane.f32.xlu0 %v1497
      %v1663 = vpop.xlane.xlu0 %1662
      %1664 = vadd.xlane.f32.xlu0 %v1498
      %v1665 = vpop.xlane.xlu0 %1664
      %1666 = vadd.xlane.f32.xlu0 %v1499
      %v1667 = vpop.xlane.xlu0 %1666
      %1668 = vadd.xlane.f32.xlu0 %v1500
      %v1669 = vpop.xlane.xlu0 %1668
      %1670 = vadd.xlane.f32.xlu0 %v1501
      %v1671 = vpop.xlane.xlu0 %1670
      %1672 = vadd.xlane.f32.xlu0 %v1502
      %v1673 = vpop.xlane.xlu0 %1672
      %1674 = vadd.xlane.f32.xlu0 %v1503
      %v1675 = vpop.xlane.xlu0 %1674
      %1676 = vadd.xlane.f32.xlu0 %v1504
      %v1677 = vpop.xlane.xlu0 %1676
      %1678 = vadd.xlane.f32.xlu0 %v1505
      %v1679 = vpop.xlane.xlu0 %1678
      %1680 = vadd.xlane.f32.xlu0 %v1506
      %v1681 = vpop.xlane.xlu0 %1680
      %1682 = vadd.xlane.f32.xlu0 %v1507
      %v1683 = vpop.xlane.xlu0 %1682
      %1684 = vadd.xlane.f32.xlu0 %v1508
      %v1685 = vpop.xlane.xlu0 %1684
      %1686 = vadd.xlane.f32.xlu0 %v1509
      %v1687 = vpop.xlane.xlu0 %1686
      %1688 = vadd.xlane.f32.xlu0 %v1510
      %v1689 = vpop.xlane.xlu0 %1688
      %1690 = vadd.xlane.f32.xlu0 %v1511
      %v1691 = vpop.xlane.xlu0 %1690
      %1692 = vadd.xlane.f32.xlu0 %v1512
      %v1693 = vpop.xlane.xlu0 %1692
      %1694 = vadd.xlane.f32.xlu0 %v1513
      %v1695 = vpop.xlane.xlu0 %1694
      %1696 = vadd.xlane.f32.xlu0 %v1514
      %v1697 = vpop.xlane.xlu0 %1696
      %1698 = vadd.xlane.f32.xlu0 %v1515
      %v1699 = vpop.xlane.xlu0 %1698
      %1700 = vadd.xlane.f32.xlu0 %v1516
      %v1701 = vpop.xlane.xlu0 %1700
      %1702 = vadd.xlane.f32.xlu0 %v1517
      %v1703 = vpop.xlane.xlu0 %1702
      %1704 = vadd.xlane.f32.xlu0 %v1518
      %v1705 = vpop.xlane.xlu0 %1704
      %1706 = vadd.xlane.f32.xlu0 %v1519
      %v1707 = vpop.xlane.xlu0 %1706
      %1708 = vadd.xlane.f32.xlu0 %v1520
      %v1709 = vpop.xlane.xlu0 %1708
      %1710 = vadd.xlane.f32.xlu0 %v1521
      %v1711 = vpop.xlane.xlu0 %1710
      %1712 = vadd.xlane.f32.xlu0 %v1522
      %v1713 = vpop.xlane.xlu0 %1712
      %1714 = vadd.xlane.f32.xlu0 %v1523
      %v1715 = vpop.xlane.xlu0 %1714
      %1716 = vadd.xlane.f32.xlu0 %v1524
      %v1717 = vpop.xlane.xlu0 %1716
      %1718 = vadd.xlane.f32.xlu0 %v1525
      %v1719 = vpop.xlane.xlu0 %1718
      %1720 = vadd.xlane.f32.xlu0 %v1526
      %v1721 = vpop.xlane.xlu0 %1720
      %1722 = vadd.xlane.f32.xlu0 %v1527
      %v1723 = vpop.xlane.xlu0 %1722
      %1724 = vadd.xlane.f32.xlu0 %v1528
      %v1725 = vpop.xlane.xlu0 %1724
      %1726 = vadd.xlane.f32.xlu0 %v1529
      %v1727 = vpop.xlane.xlu0 %1726
      %1728 = vadd.xlane.f32.xlu0 %v1530
      %v1729 = vpop.xlane.xlu0 %1728
      %1730 = vadd.xlane.f32.xlu0 %v1531
      %v1731 = vpop.xlane.xlu0 %1730
      %1732 = vadd.xlane.f32.xlu0 %v1532
      %v1733 = vpop.xlane.xlu0 %1732
      %1734 = vadd.xlane.f32.xlu0 %v1533
      %v1735 = vpop.xlane.xlu0 %1734
      %1736 = vadd.xlane.f32.xlu0 %v1534
      %v1737 = vpop.xlane.xlu0 %1736
      %1738 = vadd.xlane.f32.xlu0 %v1535
      %v1739 = vpop.xlane.xlu0 %1738
      %1740 = vadd.xlane.f32.xlu0 %v1536
      %v1741 = vpop.xlane.xlu0 %1740
      %1742 = vadd.xlane.f32.xlu0 %v1537
      %v1743 = vpop.xlane.xlu0 %1742
      %1744 = vadd.xlane.f32.xlu0 %v1538
      %v1745 = vpop.xlane.xlu0 %1744
      %1746 = vadd.xlane.f32.xlu0 %v1539
      %v1747 = vpop.xlane.xlu0 %1746
      %1748 = vadd.xlane.f32.xlu0 %v1540
      %v1749 = vpop.xlane.xlu0 %1748
      %1750 = vadd.xlane.f32.xlu0 %v1541
      %v1751 = vpop.xlane.xlu0 %1750
      %1752 = vadd.xlane.f32.xlu0 %v1542
      %v1753 = vpop.xlane.xlu0 %1752
      %1754 = vadd.xlane.f32.xlu0 %v1543
      %v1755 = vpop.xlane.xlu0 %1754
      %1756 = vadd.xlane.f32.xlu0 %v1544
      %v1757 = vpop.xlane.xlu0 %1756
      %1758 = vadd.xlane.f32.xlu0 %v1545
      %v1759 = vpop.xlane.xlu0 %1758
      %1760 = vadd.xlane.f32.xlu0 %v1546
      %v1761 = vpop.xlane.xlu0 %1760
      %1762 = vadd.xlane.f32.xlu0 %v1547
      %v1763 = vpop.xlane.xlu0 %1762
      %1764 = vadd.xlane.f32.xlu0 %v1548
      %v1765 = vpop.xlane.xlu0 %1764
      %1766 = vadd.xlane.f32.xlu0 %v1549
      %v1767 = vpop.xlane.xlu0 %1766
      %1768 = vadd.xlane.f32.xlu0 %v1550
      %v1769 = vpop.xlane.xlu0 %1768
      %1770 = vadd.xlane.f32.xlu0 %v1551
      %v1771 = vpop.xlane.xlu0 %1770
      %1772 = vadd.xlane.f32.xlu0 %v1552
      %v1773 = vpop.xlane.xlu0 %1772
      %1774 = vadd.xlane.f32.xlu0 %v1553
      %v1775 = vpop.xlane.xlu0 %1774
      %1776 = vadd.xlane.f32.xlu0 %v1554
      %v1777 = vpop.xlane.xlu0 %1776
      %1778 = vadd.xlane.f32.xlu0 %v1555
      %v1779 = vpop.xlane.xlu0 %1778
      %1780 = vadd.xlane.f32.xlu0 %v1556
      %v1781 = vpop.xlane.xlu0 %1780
      %1782 = vadd.xlane.f32.xlu0 %v1557
      %v1783 = vpop.xlane.xlu0 %1782
      %1784 = vadd.xlane.f32.xlu0 %v1558
      %v1785 = vpop.xlane.xlu0 %1784
      %1786 = vadd.xlane.f32.xlu0 %v1559
      %v1787 = vpop.xlane.xlu0 %1786
      %1788 = vadd.xlane.f32.xlu0 %v1560
      %v1789 = vpop.xlane.xlu0 %1788
      %1790 = vadd.xlane.f32.xlu0 %v1561
      %v1791 = vpop.xlane.xlu0 %1790
      %1792 = vadd.xlane.f32.xlu0 %v1562
      %v1793 = vpop.xlane.xlu0 %1792
      %1794 = vadd.xlane.f32.xlu0 %v1563
      %v1795 = vpop.xlane.xlu0 %1794
      %1796 = vadd.xlane.f32.xlu0 %v1564
      %v1797 = vpop.xlane.xlu0 %1796
      %1798 = vadd.xlane.f32.xlu0 %v1565
      %v1799 = vpop.xlane.xlu0 %1798
      %1800 = vadd.xlane.f32.xlu0 %v1566
      %v1801 = vpop.xlane.xlu0 %1800
      %1802 = vadd.xlane.f32.xlu0 %v1567
      %v1803 = vpop.xlane.xlu0 %1802
      %1804 = vadd.xlane.f32.xlu0 %v1568
      %v1805 = vpop.xlane.xlu0 %1804
      %1806 = vadd.xlane.f32.xlu0 %v1569
      %v1807 = vpop.xlane.xlu0 %1806
      %1808 = vadd.xlane.f32.xlu0 %v1570
      %v1809 = vpop.xlane.xlu0 %1808
      %1810 = vadd.xlane.f32.xlu0 %v1571
      %v1811 = vpop.xlane.xlu0 %1810
      %1812 = vadd.xlane.f32.xlu0 %v1572
      %v1813 = vpop.xlane.xlu0 %1812
      %1814 = vadd.xlane.f32.xlu0 %v1573
      %v1815 = vpop.xlane.xlu0 %1814
      %1816 = vadd.xlane.f32.xlu0 %v1574
      %v1817 = vpop.xlane.xlu0 %1816
      %1818 = vadd.xlane.f32.xlu0 %v1575
      %v1819 = vpop.xlane.xlu0 %1818
      %1820 = vadd.xlane.f32.xlu0 %v1576
      %v1821 = vpop.xlane.xlu0 %1820
      %1822 = vadd.xlane.f32.xlu0 %v1577
      %v1823 = vpop.xlane.xlu0 %1822
      %1824 = vadd.xlane.f32.xlu0 %v1578
      %v1825 = vpop.xlane.xlu0 %1824
      %1826 = vadd.xlane.f32.xlu0 %v1579
      %v1827 = vpop.xlane.xlu0 %1826
      %1828 = vadd.xlane.f32.xlu0 %v1580
      %v1829 = vpop.xlane.xlu0 %1828
      %1830 = vadd.xlane.f32.xlu0 %v1581
      %v1831 = vpop.xlane.xlu0 %1830
      %1832 = vadd.xlane.f32.xlu0 %v1582
      %v1833 = vpop.xlane.xlu0 %1832
      %1834 = vadd.xlane.f32.xlu0 %v1583
      %v1835 = vpop.xlane.xlu0 %1834
      %1836 = vadd.xlane.f32.xlu0 %v1584
      %v1837 = vpop.xlane.xlu0 %1836
      %1838 = vadd.xlane.f32.xlu0 %v1585
      %v1839 = vpop.xlane.xlu0 %1838
      %1840 = vadd.xlane.f32.xlu0 %v1586
      %v1841 = vpop.xlane.xlu0 %1840
      %1842 = vadd.xlane.f32.xlu0 %v1587
      %v1843 = vpop.xlane.xlu0 %1842
      %v1844 = vld [vmem:[%s314] sm:$0xff]
      %v1845 = vld [vmem:[%s314 + $0x8] sm:$0xff]
      %v1846 = vld [vmem:[%s314 + $0x10] sm:$0xff]
      %v1847 = vld [vmem:[%s314 + $0x18] sm:$0xff]
      %v1848 = vld [vmem:[%s314 + $0x20] sm:$0xff]
      %v1849 = vld [vmem:[%s314 + $0x28] sm:$0xff]
      %v1850 = vld [vmem:[%s314 + $0x30] sm:$0xff]
      %v1851 = vld [vmem:[%s314 + $0x38] sm:$0xff]
      %v1852 = vld [vmem:[%s314 + $0x40] sm:$0xff]
      %v1853 = vld [vmem:[%s314 + $0x48] sm:$0xff]
      %v1854 = vld [vmem:[%s314 + $0x50] sm:$0xff]
      %v1855 = vld [vmem:[%s314 + $0x58] sm:$0xff]
      %v1856 = vld [vmem:[%s314 + $0x60] sm:$0xff]
      %v1857 = vld [vmem:[%s314 + $0x68] sm:$0xff]
      %v1858 = vld [vmem:[%s314 + $0x70] sm:$0xff]
      %v1859 = vld [vmem:[%s314 + $0x78] sm:$0xff]
      %v1860 = vld [vmem:[%s314 + $0x80] sm:$0xff]
      %v1861 = vld [vmem:[%s314 + $0x88] sm:$0xff]
      %v1862 = vld [vmem:[%s314 + $0x90] sm:$0xff]
      %v1863 = vld [vmem:[%s314 + $0x98] sm:$0xff]
      %v1864 = vld [vmem:[%s314 + $0xa0] sm:$0xff]
      %v1865 = vld [vmem:[%s314 + $0xa8] sm:$0xff]
      %v1866 = vld [vmem:[%s314 + $0xb0] sm:$0xff]
      %v1867 = vld [vmem:[%s314 + $0xb8] sm:$0xff]
      %v1868 = vld [vmem:[%s314 + $0xc0] sm:$0xff]
      %v1869 = vld [vmem:[%s314 + $0xc8] sm:$0xff]
      %v1870 = vld [vmem:[%s314 + $0xd0] sm:$0xff]
      %v1871 = vld [vmem:[%s314 + $0xd8] sm:$0xff]
      %v1872 = vld [vmem:[%s314 + $0xe0] sm:$0xff]
      %v1873 = vld [vmem:[%s314 + $0xe8] sm:$0xff]
      %v1874 = vld [vmem:[%s314 + $0xf0] sm:$0xff]
      %v1875 = vld [vmem:[%s314 + $0xf8] sm:$0xff]
      %v1876 = vld [vmem:[%s314 + $0x100] sm:$0xff]
      %v1877 = vld [vmem:[%s314 + $0x108] sm:$0xff]
      %v1878 = vld [vmem:[%s314 + $0x110] sm:$0xff]
      %v1879 = vld [vmem:[%s314 + $0x118] sm:$0xff]
      %v1880 = vld [vmem:[%s314 + $0x120] sm:$0xff]
      %v1881 = vld [vmem:[%s314 + $0x128] sm:$0xff]
      %v1882 = vld [vmem:[%s314 + $0x130] sm:$0xff]
      %v1883 = vld [vmem:[%s314 + $0x138] sm:$0xff]
      %v1884 = vld [vmem:[%s314 + $0x140] sm:$0xff]
      %v1885 = vld [vmem:[%s314 + $0x148] sm:$0xff]
      %v1886 = vld [vmem:[%s314 + $0x150] sm:$0xff]
      %v1887 = vld [vmem:[%s314 + $0x158] sm:$0xff]
      %v1888 = vld [vmem:[%s314 + $0x160] sm:$0xff]
      %v1889 = vld [vmem:[%s314 + $0x168] sm:$0xff]
      %v1890 = vld [vmem:[%s314 + $0x170] sm:$0xff]
      %v1891 = vld [vmem:[%s314 + $0x178] sm:$0xff]
      %v1892 = vld [vmem:[%s314 + $0x180] sm:$0xff]
      %v1893 = vld [vmem:[%s314 + $0x188] sm:$0xff]
      %v1894 = vld [vmem:[%s314 + $0x190] sm:$0xff]
      %v1895 = vld [vmem:[%s314 + $0x198] sm:$0xff]
      %v1896 = vld [vmem:[%s314 + $0x1a0] sm:$0xff]
      %v1897 = vld [vmem:[%s314 + $0x1a8] sm:$0xff]
      %v1898 = vld [vmem:[%s314 + $0x1b0] sm:$0xff]
      %v1899 = vld [vmem:[%s314 + $0x1b8] sm:$0xff]
      %v1900 = vld [vmem:[%s314 + $0x1c0] sm:$0xff]
      %v1901 = vld [vmem:[%s314 + $0x1c8] sm:$0xff]
      %v1902 = vld [vmem:[%s314 + $0x1d0] sm:$0xff]
      %v1903 = vld [vmem:[%s314 + $0x1d8] sm:$0xff]
      %v1904 = vld [vmem:[%s314 + $0x1e0] sm:$0xff]
      %v1905 = vld [vmem:[%s314 + $0x1e8] sm:$0xff]
      %v1906 = vld [vmem:[%s314 + $0x1f0] sm:$0xff]
      %v1907 = vld [vmem:[%s314 + $0x1f8] sm:$0xff]
      %v1908 = vld [vmem:[%s314 + $0x200] sm:$0xff]
      %v1909 = vld [vmem:[%s314 + $0x208] sm:$0xff]
      %v1910 = vld [vmem:[%s314 + $0x210] sm:$0xff]
      %v1911 = vld [vmem:[%s314 + $0x218] sm:$0xff]
      %v1912 = vld [vmem:[%s314 + $0x220] sm:$0xff]
      %v1913 = vld [vmem:[%s314 + $0x228] sm:$0xff]
      %v1914 = vld [vmem:[%s314 + $0x230] sm:$0xff]
      %v1915 = vld [vmem:[%s314 + $0x238] sm:$0xff]
      %v1916 = vld [vmem:[%s314 + $0x240] sm:$0xff]
      %v1917 = vld [vmem:[%s314 + $0x248] sm:$0xff]
      %v1918 = vld [vmem:[%s314 + $0x250] sm:$0xff]
      %v1919 = vld [vmem:[%s314 + $0x258] sm:$0xff]
      %v1920 = vld [vmem:[%s314 + $0x260] sm:$0xff]
      %v1921 = vld [vmem:[%s314 + $0x268] sm:$0xff]
      %v1922 = vld [vmem:[%s314 + $0x270] sm:$0xff]
      %v1923 = vld [vmem:[%s314 + $0x278] sm:$0xff]
      %v1924 = vld [vmem:[%s314 + $0x280] sm:$0xff]
      %v1925 = vld [vmem:[%s314 + $0x288] sm:$0xff]
      %v1926 = vld [vmem:[%s314 + $0x290] sm:$0xff]
      %v1927 = vld [vmem:[%s314 + $0x298] sm:$0xff]
      %v1928 = vld [vmem:[%s314 + $0x2a0] sm:$0xff]
      %v1929 = vld [vmem:[%s314 + $0x2a8] sm:$0xff]
      %v1930 = vld [vmem:[%s314 + $0x2b0] sm:$0xff]
      %v1931 = vld [vmem:[%s314 + $0x2b8] sm:$0xff]
      %v1932 = vld [vmem:[%s314 + $0x2c0] sm:$0xff]
      %v1933 = vld [vmem:[%s314 + $0x2c8] sm:$0xff]
      %v1934 = vld [vmem:[%s314 + $0x2d0] sm:$0xff]
      %v1935 = vld [vmem:[%s314 + $0x2d8] sm:$0xff]
      %v1936 = vld [vmem:[%s314 + $0x2e0] sm:$0xff]
      %v1937 = vld [vmem:[%s314 + $0x2e8] sm:$0xff]
      %v1938 = vld [vmem:[%s314 + $0x2f0] sm:$0xff]
      %v1939 = vld [vmem:[%s314 + $0x2f8] sm:$0xff]
      %v1940 = vld [vmem:[%s314 + $0x300] sm:$0xff]
      %v1941 = vld [vmem:[%s314 + $0x308] sm:$0xff]
      %v1942 = vld [vmem:[%s314 + $0x310] sm:$0xff]
      %v1943 = vld [vmem:[%s314 + $0x318] sm:$0xff]
      %v1944 = vld [vmem:[%s314 + $0x320] sm:$0xff]
      %v1945 = vld [vmem:[%s314 + $0x328] sm:$0xff]
      %v1946 = vld [vmem:[%s314 + $0x330] sm:$0xff]
      %v1947 = vld [vmem:[%s314 + $0x338] sm:$0xff]
      %v1948 = vld [vmem:[%s314 + $0x340] sm:$0xff]
      %v1949 = vld [vmem:[%s314 + $0x348] sm:$0xff]
      %v1950 = vld [vmem:[%s314 + $0x350] sm:$0xff]
      %v1951 = vld [vmem:[%s314 + $0x358] sm:$0xff]
      %v1952 = vld [vmem:[%s314 + $0x360] sm:$0xff]
      %v1953 = vld [vmem:[%s314 + $0x368] sm:$0xff]
      %v1954 = vld [vmem:[%s314 + $0x370] sm:$0xff]
      %v1955 = vld [vmem:[%s314 + $0x378] sm:$0xff]
      %v1956 = vld [vmem:[%s314 + $0x380] sm:$0xff]
      %v1957 = vld [vmem:[%s314 + $0x388] sm:$0xff]
      %v1958 = vld [vmem:[%s314 + $0x390] sm:$0xff]
      %v1959 = vld [vmem:[%s314 + $0x398] sm:$0xff]
      %v1960 = vld [vmem:[%s314 + $0x3a0] sm:$0xff]
      %v1961 = vld [vmem:[%s314 + $0x3a8] sm:$0xff]
      %v1962 = vld [vmem:[%s314 + $0x3b0] sm:$0xff]
      %v1963 = vld [vmem:[%s314 + $0x3b8] sm:$0xff]
      %v1964 = vld [vmem:[%s314 + $0x3c0] sm:$0xff]
      %v1965 = vld [vmem:[%s314 + $0x3c8] sm:$0xff]
      %v1966 = vld [vmem:[%s314 + $0x3d0] sm:$0xff]
      %v1967 = vld [vmem:[%s314 + $0x3d8] sm:$0xff]
      %v1968 = vld [vmem:[%s314 + $0x3e0] sm:$0xff]
      %v1969 = vld [vmem:[%s314 + $0x3e8] sm:$0xff]
      %v1970 = vld [vmem:[%s314 + $0x3f0] sm:$0xff]
      %v1971 = vld [vmem:[%s314 + $0x3f8] sm:$0xff]
      %s1972 = sld [smem:[#allocation2]]
      %v1973 = vstv %s1972
      %v1974 = vadd.f32 %v1589, %v1973
      %v1975 = vadd.f32 %v1591, %v1973
      %v1976 = vadd.f32 %v1593, %v1973
      %v1977 = vadd.f32 %v1595, %v1973
      %v1978 = vadd.f32 %v1597, %v1973
      %v1979 = vadd.f32 %v1599, %v1973
      %v1980 = vadd.f32 %v1601, %v1973
      %v1981 = vadd.f32 %v1603, %v1973
      %v1982 = vadd.f32 %v1605, %v1973
      %v1983 = vadd.f32 %v1607, %v1973
      %v1984 = vadd.f32 %v1609, %v1973
      %v1985 = vadd.f32 %v1611, %v1973
      %v1986 = vadd.f32 %v1613, %v1973
      %v1987 = vadd.f32 %v1615, %v1973
      %v1988 = vadd.f32 %v1617, %v1973
      %v1989 = vadd.f32 %v1619, %v1973
      %v1990 = vadd.f32 %v1621, %v1973
      %v1991 = vadd.f32 %v1623, %v1973
      %v1992 = vadd.f32 %v1625, %v1973
      %v1993 = vadd.f32 %v1627, %v1973
      %v1994 = vadd.f32 %v1629, %v1973
      %v1995 = vadd.f32 %v1631, %v1973
      %v1996 = vadd.f32 %v1633, %v1973
      %v1997 = vadd.f32 %v1635, %v1973
      %v1998 = vadd.f32 %v1637, %v1973
      %v1999 = vadd.f32 %v1639, %v1973
      %v2000 = vadd.f32 %v1641, %v1973
      %v2001 = vadd.f32 %v1643, %v1973
      %v2002 = vadd.f32 %v1645, %v1973
      %v2003 = vadd.f32 %v1647, %v1973
      %v2004 = vadd.f32 %v1649, %v1973
      %v2005 = vadd.f32 %v1651, %v1973
      %v2006 = vadd.f32 %v1653, %v1973
      %v2007 = vadd.f32 %v1655, %v1973
      %v2008 = vadd.f32 %v1657, %v1973
      %v2009 = vadd.f32 %v1659, %v1973
      %v2010 = vadd.f32 %v1661, %v1973
      %v2011 = vadd.f32 %v1663, %v1973
      %v2012 = vadd.f32 %v1665, %v1973
      %v2013 = vadd.f32 %v1667, %v1973
      %v2014 = vadd.f32 %v1669, %v1973
      %v2015 = vadd.f32 %v1671, %v1973
      %v2016 = vadd.f32 %v1673, %v1973
      %v2017 = vadd.f32 %v1675, %v1973
      %v2018 = vadd.f32 %v1677, %v1973
      %v2019 = vadd.f32 %v1679, %v1973
      %v2020 = vadd.f32 %v1681, %v1973
      %v2021 = vadd.f32 %v1683, %v1973
      %v2022 = vadd.f32 %v1685, %v1973
      %v2023 = vadd.f32 %v1687, %v1973
      %v2024 = vadd.f32 %v1689, %v1973
      %v2025 = vadd.f32 %v1691, %v1973
      %v2026 = vadd.f32 %v1693, %v1973
      %v2027 = vadd.f32 %v1695, %v1973
      %v2028 = vadd.f32 %v1697, %v1973
      %v2029 = vadd.f32 %v1699, %v1973
      %v2030 = vadd.f32 %v1701, %v1973
      %v2031 = vadd.f32 %v1703, %v1973
      %v2032 = vadd.f32 %v1705, %v1973
      %v2033 = vadd.f32 %v1707, %v1973
      %v2034 = vadd.f32 %v1709, %v1973
      %v2035 = vadd.f32 %v1711, %v1973
      %v2036 = vadd.f32 %v1713, %v1973
      %v2037 = vadd.f32 %v1715, %v1973
      %v2038 = vadd.f32 %v1717, %v1973
      %v2039 = vadd.f32 %v1719, %v1973
      %v2040 = vadd.f32 %v1721, %v1973
      %v2041 = vadd.f32 %v1723, %v1973
      %v2042 = vadd.f32 %v1725, %v1973
      %v2043 = vadd.f32 %v1727, %v1973
      %v2044 = vadd.f32 %v1729, %v1973
      %v2045 = vadd.f32 %v1731, %v1973
      %v2046 = vadd.f32 %v1733, %v1973
      %v2047 = vadd.f32 %v1735, %v1973
      %v2048 = vadd.f32 %v1737, %v1973
      %v2049 = vadd.f32 %v1739, %v1973
      %v2050 = vadd.f32 %v1741, %v1973
      %v2051 = vadd.f32 %v1743, %v1973
      %v2052 = vadd.f32 %v1745, %v1973
      %v2053 = vadd.f32 %v1747, %v1973
      %v2054 = vadd.f32 %v1749, %v1973
      %v2055 = vadd.f32 %v1751, %v1973
      %v2056 = vadd.f32 %v1753, %v1973
      %v2057 = vadd.f32 %v1755, %v1973
      %v2058 = vadd.f32 %v1757, %v1973
      %v2059 = vadd.f32 %v1759, %v1973
      %v2060 = vadd.f32 %v1761, %v1973
      %v2061 = vadd.f32 %v1763, %v1973
      %v2062 = vadd.f32 %v1765, %v1973
      %v2063 = vadd.f32 %v1767, %v1973
      %v2064 = vadd.f32 %v1769, %v1973
      %v2065 = vadd.f32 %v1771, %v1973
      %v2066 = vadd.f32 %v1773, %v1973
      %v2067 = vadd.f32 %v1775, %v1973
      %v2068 = vadd.f32 %v1777, %v1973
      %v2069 = vadd.f32 %v1779, %v1973
      %v2070 = vadd.f32 %v1781, %v1973
      %v2071 = vadd.f32 %v1783, %v1973
      %v2072 = vadd.f32 %v1785, %v1973
      %v2073 = vadd.f32 %v1787, %v1973
      %v2074 = vadd.f32 %v1789, %v1973
      %v2075 = vadd.f32 %v1791, %v1973
      %v2076 = vadd.f32 %v1793, %v1973
      %v2077 = vadd.f32 %v1795, %v1973
      %v2078 = vadd.f32 %v1797, %v1973
      %v2079 = vadd.f32 %v1799, %v1973
      %v2080 = vadd.f32 %v1801, %v1973
      %v2081 = vadd.f32 %v1803, %v1973
      %v2082 = vadd.f32 %v1805, %v1973
      %v2083 = vadd.f32 %v1807, %v1973
      %v2084 = vadd.f32 %v1809, %v1973
      %v2085 = vadd.f32 %v1811, %v1973
      %v2086 = vadd.f32 %v1813, %v1973
      %v2087 = vadd.f32 %v1815, %v1973
      %v2088 = vadd.f32 %v1817, %v1973
      %v2089 = vadd.f32 %v1819, %v1973
      %v2090 = vadd.f32 %v1821, %v1973
      %v2091 = vadd.f32 %v1823, %v1973
      %v2092 = vadd.f32 %v1825, %v1973
      %v2093 = vadd.f32 %v1827, %v1973
      %v2094 = vadd.f32 %v1829, %v1973
      %v2095 = vadd.f32 %v1831, %v1973
      %v2096 = vadd.f32 %v1833, %v1973
      %v2097 = vadd.f32 %v1835, %v1973
      %v2098 = vadd.f32 %v1837, %v1973
      %v2099 = vadd.f32 %v1839, %v1973
      %v2100 = vadd.f32 %v1841, %v1973
      %v2101 = vadd.f32 %v1843, %v1973
      %v2102 = vmul.f32 %v1844, %v1974
      %v2103 = vmul.f32 %v1845, %v1975
      %v2104 = vmul.f32 %v1846, %v1976
      %v2105 = vmul.f32 %v1847, %v1977
      %v2106 = vmul.f32 %v1848, %v1978
      %v2107 = vmul.f32 %v1849, %v1979
      %v2108 = vmul.f32 %v1850, %v1980
      %v2109 = vmul.f32 %v1851, %v1981
      %v2110 = vmul.f32 %v1852, %v1982
      %v2111 = vmul.f32 %v1853, %v1983
      %v2112 = vmul.f32 %v1854, %v1984
      %v2113 = vmul.f32 %v1855, %v1985
      %v2114 = vmul.f32 %v1856, %v1986
      %v2115 = vmul.f32 %v1857, %v1987
      %v2116 = vmul.f32 %v1858, %v1988
      %v2117 = vmul.f32 %v1859, %v1989
      %v2118 = vmul.f32 %v1860, %v1990
      %v2119 = vmul.f32 %v1861, %v1991
      %v2120 = vmul.f32 %v1862, %v1992
      %v2121 = vmul.f32 %v1863, %v1993
      %v2122 = vmul.f32 %v1864, %v1994
      %v2123 = vmul.f32 %v1865, %v1995
      %v2124 = vmul.f32 %v1866, %v1996
      %v2125 = vmul.f32 %v1867, %v1997
      %v2126 = vmul.f32 %v1868, %v1998
      %v2127 = vmul.f32 %v1869, %v1999
      %v2128 = vmul.f32 %v1870, %v2000
      %v2129 = vmul.f32 %v1871, %v2001
      %v2130 = vmul.f32 %v1872, %v2002
      %v2131 = vmul.f32 %v1873, %v2003
      %v2132 = vmul.f32 %v1874, %v2004
      %v2133 = vmul.f32 %v1875, %v2005
      %v2134 = vmul.f32 %v1876, %v2006
      %v2135 = vmul.f32 %v1877, %v2007
      %v2136 = vmul.f32 %v1878, %v2008
      %v2137 = vmul.f32 %v1879, %v2009
      %v2138 = vmul.f32 %v1880, %v2010
      %v2139 = vmul.f32 %v1881, %v2011
      %v2140 = vmul.f32 %v1882, %v2012
      %v2141 = vmul.f32 %v1883, %v2013
      %v2142 = vmul.f32 %v1884, %v2014
      %v2143 = vmul.f32 %v1885, %v2015
      %v2144 = vmul.f32 %v1886, %v2016
      %v2145 = vmul.f32 %v1887, %v2017
      %v2146 = vmul.f32 %v1888, %v2018
      %v2147 = vmul.f32 %v1889, %v2019
      %v2148 = vmul.f32 %v1890, %v2020
      %v2149 = vmul.f32 %v1891, %v2021
      %v2150 = vmul.f32 %v1892, %v2022
      %v2151 = vmul.f32 %v1893, %v2023
      %v2152 = vmul.f32 %v1894, %v2024
      %v2153 = vmul.f32 %v1895, %v2025
      %v2154 = vmul.f32 %v1896, %v2026
      %v2155 = vmul.f32 %v1897, %v2027
      %v2156 = vmul.f32 %v1898, %v2028
      %v2157 = vmul.f32 %v1899, %v2029
      %v2158 = vmul.f32 %v1900, %v2030
      %v2159 = vmul.f32 %v1901, %v2031
      %v2160 = vmul.f32 %v1902, %v2032
      %v2161 = vmul.f32 %v1903, %v2033
      %v2162 = vmul.f32 %v1904, %v2034
      %v2163 = vmul.f32 %v1905, %v2035
      %v2164 = vmul.f32 %v1906, %v2036
      %v2165 = vmul.f32 %v1907, %v2037
      %v2166 = vmul.f32 %v1908, %v2038
      %v2167 = vmul.f32 %v1909, %v2039
      %v2168 = vmul.f32 %v1910, %v2040
      %v2169 = vmul.f32 %v1911, %v2041
      %v2170 = vmul.f32 %v1912, %v2042
      %v2171 = vmul.f32 %v1913, %v2043
      %v2172 = vmul.f32 %v1914, %v2044
      %v2173 = vmul.f32 %v1915, %v2045
      %v2174 = vmul.f32 %v1916, %v2046
      %v2175 = vmul.f32 %v1917, %v2047
      %v2176 = vmul.f32 %v1918, %v2048
      %v2177 = vmul.f32 %v1919, %v2049
      %v2178 = vmul.f32 %v1920, %v2050
      %v2179 = vmul.f32 %v1921, %v2051
      %v2180 = vmul.f32 %v1922, %v2052
      %v2181 = vmul.f32 %v1923, %v2053
      %v2182 = vmul.f32 %v1924, %v2054
      %v2183 = vmul.f32 %v1925, %v2055
      %v2184 = vmul.f32 %v1926, %v2056
      %v2185 = vmul.f32 %v1927, %v2057
      %v2186 = vmul.f32 %v1928, %v2058
      %v2187 = vmul.f32 %v1929, %v2059
      %v2188 = vmul.f32 %v1930, %v2060
      %v2189 = vmul.f32 %v1931, %v2061
      %v2190 = vmul.f32 %v1932, %v2062
      %v2191 = vmul.f32 %v1933, %v2063
      %v2192 = vmul.f32 %v1934, %v2064
      %v2193 = vmul.f32 %v1935, %v2065
      %v2194 = vmul.f32 %v1936, %v2066
      %v2195 = vmul.f32 %v1937, %v2067
      %v2196 = vmul.f32 %v1938, %v2068
      %v2197 = vmul.f32 %v1939, %v2069
      %v2198 = vmul.f32 %v1940, %v2070
      %v2199 = vmul.f32 %v1941, %v2071
      %v2200 = vmul.f32 %v1942, %v2072
      %v2201 = vmul.f32 %v1943, %v2073
      %v2202 = vmul.f32 %v1944, %v2074
      %v2203 = vmul.f32 %v1945, %v2075
      %v2204 = vmul.f32 %v1946, %v2076
      %v2205 = vmul.f32 %v1947, %v2077
      %v2206 = vmul.f32 %v1948, %v2078
      %v2207 = vmul.f32 %v1949, %v2079
      %v2208 = vmul.f32 %v1950, %v2080
      %v2209 = vmul.f32 %v1951, %v2081
      %v2210 = vmul.f32 %v1952, %v2082
      %v2211 = vmul.f32 %v1953, %v2083
      %v2212 = vmul.f32 %v1954, %v2084
      %v2213 = vmul.f32 %v1955, %v2085
      %v2214 = vmul.f32 %v1956, %v2086
      %v2215 = vmul.f32 %v1957, %v2087
      %v2216 = vmul.f32 %v1958, %v2088
      %v2217 = vmul.f32 %v1959, %v2089
      %v2218 = vmul.f32 %v1960, %v2090
      %v2219 = vmul.f32 %v1961, %v2091
      %v2220 = vmul.f32 %v1962, %v2092
      %v2221 = vmul.f32 %v1963, %v2093
      %v2222 = vmul.f32 %v1964, %v2094
      %v2223 = vmul.f32 %v1965, %v2095
      %v2224 = vmul.f32 %v1966, %v2096
      %v2225 = vmul.f32 %v1967, %v2097
      %v2226 = vmul.f32 %v1968, %v2098
      %v2227 = vmul.f32 %v1969, %v2099
      %v2228 = vmul.f32 %v1970, %v2100
      %v2229 = vmul.f32 %v1971, %v2101
      %v2230 = vlaneseq
      %v2231 = vand.u32 %v2230, 127
      %v2232 = vld [vmem:[%s320] sm:$0xff]
      %v2233 = vld [vmem:[%s320 + $0x8] sm:$0xff]
      %v2234 = vld [vmem:[%s320 + $0x10] sm:$0xff]
      %v2235 = vld [vmem:[%s320 + $0x18] sm:$0xff]
      %v2236 = vld [vmem:[%s320 + $0x20] sm:$0xff]
      %v2237 = vld [vmem:[%s320 + $0x28] sm:$0xff]
      %v2238 = vld [vmem:[%s320 + $0x30] sm:$0xff]
      %v2239 = vld [vmem:[%s320 + $0x38] sm:$0xff]
      %v2240 = vld [vmem:[%s320 + $0x40] sm:$0xff]
      %v2241 = vld [vmem:[%s320 + $0x48] sm:$0xff]
      %v2242 = vld [vmem:[%s320 + $0x50] sm:$0xff]
      %v2243 = vld [vmem:[%s320 + $0x58] sm:$0xff]
      %v2244 = vld [vmem:[%s320 + $0x60] sm:$0xff]
      %v2245 = vld [vmem:[%s320 + $0x68] sm:$0xff]
      %v2246 = vld [vmem:[%s320 + $0x70] sm:$0xff]
      %v2247 = vld [vmem:[%s320 + $0x78] sm:$0xff]
      %v2248 = vld [vmem:[%s320 + $0x80] sm:$0xff]
      %v2249 = vld [vmem:[%s320 + $0x88] sm:$0xff]
      %v2250 = vld [vmem:[%s320 + $0x90] sm:$0xff]
      %v2251 = vld [vmem:[%s320 + $0x98] sm:$0xff]
      %v2252 = vld [vmem:[%s320 + $0xa0] sm:$0xff]
      %v2253 = vld [vmem:[%s320 + $0xa8] sm:$0xff]
      %v2254 = vld [vmem:[%s320 + $0xb0] sm:$0xff]
      %v2255 = vld [vmem:[%s320 + $0xb8] sm:$0xff]
      %v2256 = vld [vmem:[%s320 + $0xc0] sm:$0xff]
      %v2257 = vld [vmem:[%s320 + $0xc8] sm:$0xff]
      %v2258 = vld [vmem:[%s320 + $0xd0] sm:$0xff]
      %v2259 = vld [vmem:[%s320 + $0xd8] sm:$0xff]
      %v2260 = vld [vmem:[%s320 + $0xe0] sm:$0xff]
      %v2261 = vld [vmem:[%s320 + $0xe8] sm:$0xff]
      %v2262 = vld [vmem:[%s320 + $0xf0] sm:$0xff]
      %v2263 = vld [vmem:[%s320 + $0xf8] sm:$0xff]
      %v2264 = vld [vmem:[%s320 + $0x100] sm:$0xff]
      %v2265 = vld [vmem:[%s320 + $0x108] sm:$0xff]
      %v2266 = vld [vmem:[%s320 + $0x110] sm:$0xff]
      %v2267 = vld [vmem:[%s320 + $0x118] sm:$0xff]
      %v2268 = vld [vmem:[%s320 + $0x120] sm:$0xff]
      %v2269 = vld [vmem:[%s320 + $0x128] sm:$0xff]
      %v2270 = vld [vmem:[%s320 + $0x130] sm:$0xff]
      %v2271 = vld [vmem:[%s320 + $0x138] sm:$0xff]
      %v2272 = vld [vmem:[%s320 + $0x140] sm:$0xff]
      %v2273 = vld [vmem:[%s320 + $0x148] sm:$0xff]
      %v2274 = vld [vmem:[%s320 + $0x150] sm:$0xff]
      %v2275 = vld [vmem:[%s320 + $0x158] sm:$0xff]
      %v2276 = vld [vmem:[%s320 + $0x160] sm:$0xff]
      %v2277 = vld [vmem:[%s320 + $0x168] sm:$0xff]
      %v2278 = vld [vmem:[%s320 + $0x170] sm:$0xff]
      %v2279 = vld [vmem:[%s320 + $0x178] sm:$0xff]
      %v2280 = vld [vmem:[%s320 + $0x180] sm:$0xff]
      %v2281 = vld [vmem:[%s320 + $0x188] sm:$0xff]
      %v2282 = vld [vmem:[%s320 + $0x190] sm:$0xff]
      %v2283 = vld [vmem:[%s320 + $0x198] sm:$0xff]
      %v2284 = vld [vmem:[%s320 + $0x1a0] sm:$0xff]
      %v2285 = vld [vmem:[%s320 + $0x1a8] sm:$0xff]
      %v2286 = vld [vmem:[%s320 + $0x1b0] sm:$0xff]
      %v2287 = vld [vmem:[%s320 + $0x1b8] sm:$0xff]
      %v2288 = vld [vmem:[%s320 + $0x1c0] sm:$0xff]
      %v2289 = vld [vmem:[%s320 + $0x1c8] sm:$0xff]
      %v2290 = vld [vmem:[%s320 + $0x1d0] sm:$0xff]
      %v2291 = vld [vmem:[%s320 + $0x1d8] sm:$0xff]
      %v2292 = vld [vmem:[%s320 + $0x1e0] sm:$0xff]
      %v2293 = vld [vmem:[%s320 + $0x1e8] sm:$0xff]
      %v2294 = vld [vmem:[%s320 + $0x1f0] sm:$0xff]
      %v2295 = vld [vmem:[%s320 + $0x1f8] sm:$0xff]
      %v2296 = vld [vmem:[%s320 + $0x200] sm:$0xff]
      %v2297 = vld [vmem:[%s320 + $0x208] sm:$0xff]
      %v2298 = vld [vmem:[%s320 + $0x210] sm:$0xff]
      %v2299 = vld [vmem:[%s320 + $0x218] sm:$0xff]
      %v2300 = vld [vmem:[%s320 + $0x220] sm:$0xff]
      %v2301 = vld [vmem:[%s320 + $0x228] sm:$0xff]
      %v2302 = vld [vmem:[%s320 + $0x230] sm:$0xff]
      %v2303 = vld [vmem:[%s320 + $0x238] sm:$0xff]
      %v2304 = vld [vmem:[%s320 + $0x240] sm:$0xff]
      %v2305 = vld [vmem:[%s320 + $0x248] sm:$0xff]
      %v2306 = vld [vmem:[%s320 + $0x250] sm:$0xff]
      %v2307 = vld [vmem:[%s320 + $0x258] sm:$0xff]
      %v2308 = vld [vmem:[%s320 + $0x260] sm:$0xff]
      %v2309 = vld [vmem:[%s320 + $0x268] sm:$0xff]
      %v2310 = vld [vmem:[%s320 + $0x270] sm:$0xff]
      %v2311 = vld [vmem:[%s320 + $0x278] sm:$0xff]
      %v2312 = vld [vmem:[%s320 + $0x280] sm:$0xff]
      %v2313 = vld [vmem:[%s320 + $0x288] sm:$0xff]
      %v2314 = vld [vmem:[%s320 + $0x290] sm:$0xff]
      %v2315 = vld [vmem:[%s320 + $0x298] sm:$0xff]
      %v2316 = vld [vmem:[%s320 + $0x2a0] sm:$0xff]
      %v2317 = vld [vmem:[%s320 + $0x2a8] sm:$0xff]
      %v2318 = vld [vmem:[%s320 + $0x2b0] sm:$0xff]
      %v2319 = vld [vmem:[%s320 + $0x2b8] sm:$0xff]
      %v2320 = vld [vmem:[%s320 + $0x2c0] sm:$0xff]
      %v2321 = vld [vmem:[%s320 + $0x2c8] sm:$0xff]
      %v2322 = vld [vmem:[%s320 + $0x2d0] sm:$0xff]
      %v2323 = vld [vmem:[%s320 + $0x2d8] sm:$0xff]
      %v2324 = vld [vmem:[%s320 + $0x2e0] sm:$0xff]
      %v2325 = vld [vmem:[%s320 + $0x2e8] sm:$0xff]
      %v2326 = vld [vmem:[%s320 + $0x2f0] sm:$0xff]
      %v2327 = vld [vmem:[%s320 + $0x2f8] sm:$0xff]
      %v2328 = vld [vmem:[%s320 + $0x300] sm:$0xff]
      %v2329 = vld [vmem:[%s320 + $0x308] sm:$0xff]
      %v2330 = vld [vmem:[%s320 + $0x310] sm:$0xff]
      %v2331 = vld [vmem:[%s320 + $0x318] sm:$0xff]
      %v2332 = vld [vmem:[%s320 + $0x320] sm:$0xff]
      %v2333 = vld [vmem:[%s320 + $0x328] sm:$0xff]
      %v2334 = vld [vmem:[%s320 + $0x330] sm:$0xff]
      %v2335 = vld [vmem:[%s320 + $0x338] sm:$0xff]
      %v2336 = vld [vmem:[%s320 + $0x340] sm:$0xff]
      %v2337 = vld [vmem:[%s320 + $0x348] sm:$0xff]
      %v2338 = vld [vmem:[%s320 + $0x350] sm:$0xff]
      %v2339 = vld [vmem:[%s320 + $0x358] sm:$0xff]
      %v2340 = vld [vmem:[%s320 + $0x360] sm:$0xff]
      %v2341 = vld [vmem:[%s320 + $0x368] sm:$0xff]
      %v2342 = vld [vmem:[%s320 + $0x370] sm:$0xff]
      %v2343 = vld [vmem:[%s320 + $0x378] sm:$0xff]
      %v2344 = vld [vmem:[%s320 + $0x380] sm:$0xff]
      %v2345 = vld [vmem:[%s320 + $0x388] sm:$0xff]
      %v2346 = vld [vmem:[%s320 + $0x390] sm:$0xff]
      %v2347 = vld [vmem:[%s320 + $0x398] sm:$0xff]
      %v2348 = vld [vmem:[%s320 + $0x3a0] sm:$0xff]
      %v2349 = vld [vmem:[%s320 + $0x3a8] sm:$0xff]
      %v2350 = vld [vmem:[%s320 + $0x3b0] sm:$0xff]
      %v2351 = vld [vmem:[%s320 + $0x3b8] sm:$0xff]
      %v2352 = vld [vmem:[%s320 + $0x3c0] sm:$0xff]
      %v2353 = vld [vmem:[%s320 + $0x3c8] sm:$0xff]
      %v2354 = vld [vmem:[%s320 + $0x3d0] sm:$0xff]
      %v2355 = vld [vmem:[%s320 + $0x3d8] sm:$0xff]
      %v2356 = vld [vmem:[%s320 + $0x3e0] sm:$0xff]
      %v2357 = vld [vmem:[%s320 + $0x3e8] sm:$0xff]
      %v2358 = vld [vmem:[%s320 + $0x3f0] sm:$0xff]
      %v2359 = vld [vmem:[%s320 + $0x3f8] sm:$0xff]
      %2360 = vset.pattern.permute.xlu0 0
      %2361 = vperm.xlu0 %2360, %v2232
      %v2362 = vpop.permute.xlu0 %2361
      %2363 = vset.pattern.permute.xlu0 0
      %2364 = vperm.xlu0 %2363, %v2233
      %v2365 = vpop.permute.xlu0 %2364
      %2366 = vset.pattern.permute.xlu0 0
      %2367 = vperm.xlu0 %2366, %v2234
      %v2368 = vpop.permute.xlu0 %2367
      %2369 = vset.pattern.permute.xlu0 0
      %2370 = vperm.xlu0 %2369, %v2235
      %v2371 = vpop.permute.xlu0 %2370
      %2372 = vset.pattern.permute.xlu0 0
      %2373 = vperm.xlu0 %2372, %v2236
      %v2374 = vpop.permute.xlu0 %2373
      %2375 = vset.pattern.permute.xlu0 0
      %2376 = vperm.xlu0 %2375, %v2237
      %v2377 = vpop.permute.xlu0 %2376
      %2378 = vset.pattern.permute.xlu0 0
      %2379 = vperm.xlu0 %2378, %v2238
      %v2380 = vpop.permute.xlu0 %2379
      %2381 = vset.pattern.permute.xlu0 0
      %2382 = vperm.xlu0 %2381, %v2239
      %v2383 = vpop.permute.xlu0 %2382
      %2384 = vset.pattern.permute.xlu0 0
      %2385 = vperm.xlu0 %2384, %v2240
      %v2386 = vpop.permute.xlu0 %2385
      %2387 = vset.pattern.permute.xlu0 0
      %2388 = vperm.xlu0 %2387, %v2241
      %v2389 = vpop.permute.xlu0 %2388
      %2390 = vset.pattern.permute.xlu0 0
      %2391 = vperm.xlu0 %2390, %v2242
      %v2392 = vpop.permute.xlu0 %2391
      %2393 = vset.pattern.permute.xlu0 0
      %2394 = vperm.xlu0 %2393, %v2243
      %v2395 = vpop.permute.xlu0 %2394
      %2396 = vset.pattern.permute.xlu0 0
      %2397 = vperm.xlu0 %2396, %v2244
      %v2398 = vpop.permute.xlu0 %2397
      %2399 = vset.pattern.permute.xlu0 0
      %2400 = vperm.xlu0 %2399, %v2245
      %v2401 = vpop.permute.xlu0 %2400
      %2402 = vset.pattern.permute.xlu0 0
      %2403 = vperm.xlu0 %2402, %v2246
      %v2404 = vpop.permute.xlu0 %2403
      %2405 = vset.pattern.permute.xlu0 0
      %2406 = vperm.xlu0 %2405, %v2247
      %v2407 = vpop.permute.xlu0 %2406
      %2408 = vset.pattern.permute.xlu0 0
      %2409 = vperm.xlu0 %2408, %v2248
      %v2410 = vpop.permute.xlu0 %2409
      %2411 = vset.pattern.permute.xlu0 0
      %2412 = vperm.xlu0 %2411, %v2249
      %v2413 = vpop.permute.xlu0 %2412
      %2414 = vset.pattern.permute.xlu0 0
      %2415 = vperm.xlu0 %2414, %v2250
      %v2416 = vpop.permute.xlu0 %2415
      %2417 = vset.pattern.permute.xlu0 0
      %2418 = vperm.xlu0 %2417, %v2251
      %v2419 = vpop.permute.xlu0 %2418
      %2420 = vset.pattern.permute.xlu0 0
      %2421 = vperm.xlu0 %2420, %v2252
      %v2422 = vpop.permute.xlu0 %2421
      %2423 = vset.pattern.permute.xlu0 0
      %2424 = vperm.xlu0 %2423, %v2253
      %v2425 = vpop.permute.xlu0 %2424
      %2426 = vset.pattern.permute.xlu0 0
      %2427 = vperm.xlu0 %2426, %v2254
      %v2428 = vpop.permute.xlu0 %2427
      %2429 = vset.pattern.permute.xlu0 0
      %2430 = vperm.xlu0 %2429, %v2255
      %v2431 = vpop.permute.xlu0 %2430
      %2432 = vset.pattern.permute.xlu0 0
      %2433 = vperm.xlu0 %2432, %v2256
      %v2434 = vpop.permute.xlu0 %2433
      %2435 = vset.pattern.permute.xlu0 0
      %2436 = vperm.xlu0 %2435, %v2257
      %v2437 = vpop.permute.xlu0 %2436
      %2438 = vset.pattern.permute.xlu0 0
      %2439 = vperm.xlu0 %2438, %v2258
      %v2440 = vpop.permute.xlu0 %2439
      %2441 = vset.pattern.permute.xlu0 0
      %2442 = vperm.xlu0 %2441, %v2259
      %v2443 = vpop.permute.xlu0 %2442
      %2444 = vset.pattern.permute.xlu0 0
      %2445 = vperm.xlu0 %2444, %v2260
      %v2446 = vpop.permute.xlu0 %2445
      %2447 = vset.pattern.permute.xlu0 0
      %2448 = vperm.xlu0 %2447, %v2261
      %v2449 = vpop.permute.xlu0 %2448
      %2450 = vset.pattern.permute.xlu0 0
      %2451 = vperm.xlu0 %2450, %v2262
      %v2452 = vpop.permute.xlu0 %2451
      %2453 = vset.pattern.permute.xlu0 0
      %2454 = vperm.xlu0 %2453, %v2263
      %v2455 = vpop.permute.xlu0 %2454
      %2456 = vset.pattern.permute.xlu0 0
      %2457 = vperm.xlu0 %2456, %v2264
      %v2458 = vpop.permute.xlu0 %2457
      %2459 = vset.pattern.permute.xlu0 0
      %2460 = vperm.xlu0 %2459, %v2265
      %v2461 = vpop.permute.xlu0 %2460
      %2462 = vset.pattern.permute.xlu0 0
      %2463 = vperm.xlu0 %2462, %v2266
      %v2464 = vpop.permute.xlu0 %2463
      %2465 = vset.pattern.permute.xlu0 0
      %2466 = vperm.xlu0 %2465, %v2267
      %v2467 = vpop.permute.xlu0 %2466
      %2468 = vset.pattern.permute.xlu0 0
      %2469 = vperm.xlu0 %2468, %v2268
      %v2470 = vpop.permute.xlu0 %2469
      %2471 = vset.pattern.permute.xlu0 0
      %2472 = vperm.xlu0 %2471, %v2269
      %v2473 = vpop.permute.xlu0 %2472
      %2474 = vset.pattern.permute.xlu0 0
      %2475 = vperm.xlu0 %2474, %v2270
      %v2476 = vpop.permute.xlu0 %2475
      %2477 = vset.pattern.permute.xlu0 0
      %2478 = vperm.xlu0 %2477, %v2271
      %v2479 = vpop.permute.xlu0 %2478
      %2480 = vset.pattern.permute.xlu0 0
      %2481 = vperm.xlu0 %2480, %v2272
      %v2482 = vpop.permute.xlu0 %2481
      %2483 = vset.pattern.permute.xlu0 0
      %2484 = vperm.xlu0 %2483, %v2273
      %v2485 = vpop.permute.xlu0 %2484
      %2486 = vset.pattern.permute.xlu0 0
      %2487 = vperm.xlu0 %2486, %v2274
      %v2488 = vpop.permute.xlu0 %2487
      %2489 = vset.pattern.permute.xlu0 0
      %2490 = vperm.xlu0 %2489, %v2275
      %v2491 = vpop.permute.xlu0 %2490
      %2492 = vset.pattern.permute.xlu0 0
      %2493 = vperm.xlu0 %2492, %v2276
      %v2494 = vpop.permute.xlu0 %2493
      %2495 = vset.pattern.permute.xlu0 0
      %2496 = vperm.xlu0 %2495, %v2277
      %v2497 = vpop.permute.xlu0 %2496
      %2498 = vset.pattern.permute.xlu0 0
      %2499 = vperm.xlu0 %2498, %v2278
      %v2500 = vpop.permute.xlu0 %2499
      %2501 = vset.pattern.permute.xlu0 0
      %2502 = vperm.xlu0 %2501, %v2279
      %v2503 = vpop.permute.xlu0 %2502
      %2504 = vset.pattern.permute.xlu0 0
      %2505 = vperm.xlu0 %2504, %v2280
      %v2506 = vpop.permute.xlu0 %2505
      %2507 = vset.pattern.permute.xlu0 0
      %2508 = vperm.xlu0 %2507, %v2281
      %v2509 = vpop.permute.xlu0 %2508
      %2510 = vset.pattern.permute.xlu0 0
      %2511 = vperm.xlu0 %2510, %v2282
      %v2512 = vpop.permute.xlu0 %2511
      %2513 = vset.pattern.permute.xlu0 0
      %2514 = vperm.xlu0 %2513, %v2283
      %v2515 = vpop.permute.xlu0 %2514
      %2516 = vset.pattern.permute.xlu0 0
      %2517 = vperm.xlu0 %2516, %v2284
      %v2518 = vpop.permute.xlu0 %2517
      %2519 = vset.pattern.permute.xlu0 0
      %2520 = vperm.xlu0 %2519, %v2285
      %v2521 = vpop.permute.xlu0 %2520
      %2522 = vset.pattern.permute.xlu0 0
      %2523 = vperm.xlu0 %2522, %v2286
      %v2524 = vpop.permute.xlu0 %2523
      %2525 = vset.pattern.permute.xlu0 0
      %2526 = vperm.xlu0 %2525, %v2287
      %v2527 = vpop.permute.xlu0 %2526
      %2528 = vset.pattern.permute.xlu0 0
      %2529 = vperm.xlu0 %2528, %v2288
      %v2530 = vpop.permute.xlu0 %2529
      %2531 = vset.pattern.permute.xlu0 0
      %2532 = vperm.xlu0 %2531, %v2289
      %v2533 = vpop.permute.xlu0 %2532
      %2534 = vset.pattern.permute.xlu0 0
      %2535 = vperm.xlu0 %2534, %v2290
      %v2536 = vpop.permute.xlu0 %2535
      %2537 = vset.pattern.permute.xlu0 0
      %2538 = vperm.xlu0 %2537, %v2291
      %v2539 = vpop.permute.xlu0 %2538
      %2540 = vset.pattern.permute.xlu0 0
      %2541 = vperm.xlu0 %2540, %v2292
      %v2542 = vpop.permute.xlu0 %2541
      %2543 = vset.pattern.permute.xlu0 0
      %2544 = vperm.xlu0 %2543, %v2293
      %v2545 = vpop.permute.xlu0 %2544
      %2546 = vset.pattern.permute.xlu0 0
      %2547 = vperm.xlu0 %2546, %v2294
      %v2548 = vpop.permute.xlu0 %2547
      %2549 = vset.pattern.permute.xlu0 0
      %2550 = vperm.xlu0 %2549, %v2295
      %v2551 = vpop.permute.xlu0 %2550
      %2552 = vset.pattern.permute.xlu0 0
      %2553 = vperm.xlu0 %2552, %v2296
      %v2554 = vpop.permute.xlu0 %2553
      %2555 = vset.pattern.permute.xlu0 0
      %2556 = vperm.xlu0 %2555, %v2297
      %v2557 = vpop.permute.xlu0 %2556
      %2558 = vset.pattern.permute.xlu0 0
      %2559 = vperm.xlu0 %2558, %v2298
      %v2560 = vpop.permute.xlu0 %2559
      %2561 = vset.pattern.permute.xlu0 0
      %2562 = vperm.xlu0 %2561, %v2299
      %v2563 = vpop.permute.xlu0 %2562
      %2564 = vset.pattern.permute.xlu0 0
      %2565 = vperm.xlu0 %2564, %v2300
      %v2566 = vpop.permute.xlu0 %2565
      %2567 = vset.pattern.permute.xlu0 0
      %2568 = vperm.xlu0 %2567, %v2301
      %v2569 = vpop.permute.xlu0 %2568
      %2570 = vset.pattern.permute.xlu0 0
      %2571 = vperm.xlu0 %2570, %v2302
      %v2572 = vpop.permute.xlu0 %2571
      %2573 = vset.pattern.permute.xlu0 0
      %2574 = vperm.xlu0 %2573, %v2303
      %v2575 = vpop.permute.xlu0 %2574
      %2576 = vset.pattern.permute.xlu0 0
      %2577 = vperm.xlu0 %2576, %v2304
      %v2578 = vpop.permute.xlu0 %2577
      %2579 = vset.pattern.permute.xlu0 0
      %2580 = vperm.xlu0 %2579, %v2305
      %v2581 = vpop.permute.xlu0 %2580
      %2582 = vset.pattern.permute.xlu0 0
      %2583 = vperm.xlu0 %2582, %v2306
      %v2584 = vpop.permute.xlu0 %2583
      %2585 = vset.pattern.permute.xlu0 0
      %2586 = vperm.xlu0 %2585, %v2307
      %v2587 = vpop.permute.xlu0 %2586
      %2588 = vset.pattern.permute.xlu0 0
      %2589 = vperm.xlu0 %2588, %v2308
      %v2590 = vpop.permute.xlu0 %2589
      %2591 = vset.pattern.permute.xlu0 0
      %2592 = vperm.xlu0 %2591, %v2309
      %v2593 = vpop.permute.xlu0 %2592
      %2594 = vset.pattern.permute.xlu0 0
      %2595 = vperm.xlu0 %2594, %v2310
      %v2596 = vpop.permute.xlu0 %2595
      %2597 = vset.pattern.permute.xlu0 0
      %2598 = vperm.xlu0 %2597, %v2311
      %v2599 = vpop.permute.xlu0 %2598
      %2600 = vset.pattern.permute.xlu0 0
      %2601 = vperm.xlu0 %2600, %v2312
      %v2602 = vpop.permute.xlu0 %2601
      %2603 = vset.pattern.permute.xlu0 0
      %2604 = vperm.xlu0 %2603, %v2313
      %v2605 = vpop.permute.xlu0 %2604
      %2606 = vset.pattern.permute.xlu0 0
      %2607 = vperm.xlu0 %2606, %v2314
      %v2608 = vpop.permute.xlu0 %2607
      %2609 = vset.pattern.permute.xlu0 0
      %2610 = vperm.xlu0 %2609, %v2315
      %v2611 = vpop.permute.xlu0 %2610
      %2612 = vset.pattern.permute.xlu0 0
      %2613 = vperm.xlu0 %2612, %v2316
      %v2614 = vpop.permute.xlu0 %2613
      %2615 = vset.pattern.permute.xlu0 0
      %2616 = vperm.xlu0 %2615, %v2317
      %v2617 = vpop.permute.xlu0 %2616
      %2618 = vset.pattern.permute.xlu0 0
      %2619 = vperm.xlu0 %2618, %v2318
      %v2620 = vpop.permute.xlu0 %2619
      %2621 = vset.pattern.permute.xlu0 0
      %2622 = vperm.xlu0 %2621, %v2319
      %v2623 = vpop.permute.xlu0 %2622
      %2624 = vset.pattern.permute.xlu0 0
      %2625 = vperm.xlu0 %2624, %v2320
      %v2626 = vpop.permute.xlu0 %2625
      %2627 = vset.pattern.permute.xlu0 0
      %2628 = vperm.xlu0 %2627, %v2321
      %v2629 = vpop.permute.xlu0 %2628
      %2630 = vset.pattern.permute.xlu0 0
      %2631 = vperm.xlu0 %2630, %v2322
      %v2632 = vpop.permute.xlu0 %2631
      %2633 = vset.pattern.permute.xlu0 0
      %2634 = vperm.xlu0 %2633, %v2323
      %v2635 = vpop.permute.xlu0 %2634
      %2636 = vset.pattern.permute.xlu0 0
      %2637 = vperm.xlu0 %2636, %v2324
      %v2638 = vpop.permute.xlu0 %2637
      %2639 = vset.pattern.permute.xlu0 0
      %2640 = vperm.xlu0 %2639, %v2325
      %v2641 = vpop.permute.xlu0 %2640
      %2642 = vset.pattern.permute.xlu0 0
      %2643 = vperm.xlu0 %2642, %v2326
      %v2644 = vpop.permute.xlu0 %2643
      %2645 = vset.pattern.permute.xlu0 0
      %2646 = vperm.xlu0 %2645, %v2327
      %v2647 = vpop.permute.xlu0 %2646
      %2648 = vset.pattern.permute.xlu0 0
      %2649 = vperm.xlu0 %2648, %v2328
      %v2650 = vpop.permute.xlu0 %2649
      %2651 = vset.pattern.permute.xlu0 0
      %2652 = vperm.xlu0 %2651, %v2329
      %v2653 = vpop.permute.xlu0 %2652
      %2654 = vset.pattern.permute.xlu0 0
      %2655 = vperm.xlu0 %2654, %v2330
      %v2656 = vpop.permute.xlu0 %2655
      %2657 = vset.pattern.permute.xlu0 0
      %2658 = vperm.xlu0 %2657, %v2331
      %v2659 = vpop.permute.xlu0 %2658
      %2660 = vset.pattern.permute.xlu0 0
      %2661 = vperm.xlu0 %2660, %v2332
      %v2662 = vpop.permute.xlu0 %2661
      %2663 = vset.pattern.permute.xlu0 0
      %2664 = vperm.xlu0 %2663, %v2333
      %v2665 = vpop.permute.xlu0 %2664
      %2666 = vset.pattern.permute.xlu0 0
      %2667 = vperm.xlu0 %2666, %v2334
      %v2668 = vpop.permute.xlu0 %2667
      %2669 = vset.pattern.permute.xlu0 0
      %2670 = vperm.xlu0 %2669, %v2335
      %v2671 = vpop.permute.xlu0 %2670
      %2672 = vset.pattern.permute.xlu0 0
      %2673 = vperm.xlu0 %2672, %v2336
      %v2674 = vpop.permute.xlu0 %2673
      %2675 = vset.pattern.permute.xlu0 0
      %2676 = vperm.xlu0 %2675, %v2337
      %v2677 = vpop.permute.xlu0 %2676
      %2678 = vset.pattern.permute.xlu0 0
      %2679 = vperm.xlu0 %2678, %v2338
      %v2680 = vpop.permute.xlu0 %2679
      %2681 = vset.pattern.permute.xlu0 0
      %2682 = vperm.xlu0 %2681, %v2339
      %v2683 = vpop.permute.xlu0 %2682
      %2684 = vset.pattern.permute.xlu0 0
      %2685 = vperm.xlu0 %2684, %v2340
      %v2686 = vpop.permute.xlu0 %2685
      %2687 = vset.pattern.permute.xlu0 0
      %2688 = vperm.xlu0 %2687, %v2341
      %v2689 = vpop.permute.xlu0 %2688
      %2690 = vset.pattern.permute.xlu0 0
      %2691 = vperm.xlu0 %2690, %v2342
      %v2692 = vpop.permute.xlu0 %2691
      %2693 = vset.pattern.permute.xlu0 0
      %2694 = vperm.xlu0 %2693, %v2343
      %v2695 = vpop.permute.xlu0 %2694
      %2696 = vset.pattern.permute.xlu0 0
      %2697 = vperm.xlu0 %2696, %v2344
      %v2698 = vpop.permute.xlu0 %2697
      %2699 = vset.pattern.permute.xlu0 0
      %2700 = vperm.xlu0 %2699, %v2345
      %v2701 = vpop.permute.xlu0 %2700
      %2702 = vset.pattern.permute.xlu0 0
      %2703 = vperm.xlu0 %2702, %v2346
      %v2704 = vpop.permute.xlu0 %2703
      %2705 = vset.pattern.permute.xlu0 0
      %2706 = vperm.xlu0 %2705, %v2347
      %v2707 = vpop.permute.xlu0 %2706
      %2708 = vset.pattern.permute.xlu0 0
      %2709 = vperm.xlu0 %2708, %v2348
      %v2710 = vpop.permute.xlu0 %2709
      %2711 = vset.pattern.permute.xlu0 0
      %2712 = vperm.xlu0 %2711, %v2349
      %v2713 = vpop.permute.xlu0 %2712
      %2714 = vset.pattern.permute.xlu0 0
      %2715 = vperm.xlu0 %2714, %v2350
      %v2716 = vpop.permute.xlu0 %2715
      %2717 = vset.pattern.permute.xlu0 0
      %2718 = vperm.xlu0 %2717, %v2351
      %v2719 = vpop.permute.xlu0 %2718
      %2720 = vset.pattern.permute.xlu0 0
      %2721 = vperm.xlu0 %2720, %v2352
      %v2722 = vpop.permute.xlu0 %2721
      %2723 = vset.pattern.permute.xlu0 0
      %2724 = vperm.xlu0 %2723, %v2353
      %v2725 = vpop.permute.xlu0 %2724
      %2726 = vset.pattern.permute.xlu0 0
      %2727 = vperm.xlu0 %2726, %v2354
      %v2728 = vpop.permute.xlu0 %2727
      %2729 = vset.pattern.permute.xlu0 0
      %2730 = vperm.xlu0 %2729, %v2355
      %v2731 = vpop.permute.xlu0 %2730
      %2732 = vset.pattern.permute.xlu0 0
      %2733 = vperm.xlu0 %2732, %v2356
      %v2734 = vpop.permute.xlu0 %2733
      %2735 = vset.pattern.permute.xlu0 0
      %2736 = vperm.xlu0 %2735, %v2357
      %v2737 = vpop.permute.xlu0 %2736
      %2738 = vset.pattern.permute.xlu0 0
      %2739 = vperm.xlu0 %2738, %v2358
      %v2740 = vpop.permute.xlu0 %2739
      %2741 = vset.pattern.permute.xlu0 0
      %2742 = vperm.xlu0 %2741, %v2359
      %v2743 = vpop.permute.xlu0 %2742
      %vm2744 = vcmp.eq.s32.totalorder %v2362, %v2231
      %vm2745 = vcmp.eq.s32.totalorder %v2365, %v2231
      %vm2746 = vcmp.eq.s32.totalorder %v2368, %v2231
      %vm2747 = vcmp.eq.s32.totalorder %v2371, %v2231
      %vm2748 = vcmp.eq.s32.totalorder %v2374, %v2231
      %vm2749 = vcmp.eq.s32.totalorder %v2377, %v2231
      %vm2750 = vcmp.eq.s32.totalorder %v2380, %v2231
      %vm2751 = vcmp.eq.s32.totalorder %v2383, %v2231
      %vm2752 = vcmp.eq.s32.totalorder %v2386, %v2231
      %vm2753 = vcmp.eq.s32.totalorder %v2389, %v2231
      %vm2754 = vcmp.eq.s32.totalorder %v2392, %v2231
      %vm2755 = vcmp.eq.s32.totalorder %v2395, %v2231
      %vm2756 = vcmp.eq.s32.totalorder %v2398, %v2231
      %vm2757 = vcmp.eq.s32.totalorder %v2401, %v2231
      %vm2758 = vcmp.eq.s32.totalorder %v2404, %v2231
      %vm2759 = vcmp.eq.s32.totalorder %v2407, %v2231
      %vm2760 = vcmp.eq.s32.totalorder %v2410, %v2231
      %vm2761 = vcmp.eq.s32.totalorder %v2413, %v2231
      %vm2762 = vcmp.eq.s32.totalorder %v2416, %v2231
      %vm2763 = vcmp.eq.s32.totalorder %v2419, %v2231
      %vm2764 = vcmp.eq.s32.totalorder %v2422, %v2231
      %vm2765 = vcmp.eq.s32.totalorder %v2425, %v2231
      %vm2766 = vcmp.eq.s32.totalorder %v2428, %v2231
      %vm2767 = vcmp.eq.s32.totalorder %v2431, %v2231
      %vm2768 = vcmp.eq.s32.totalorder %v2434, %v2231
      %vm2769 = vcmp.eq.s32.totalorder %v2437, %v2231
      %vm2770 = vcmp.eq.s32.totalorder %v2440, %v2231
      %vm2771 = vcmp.eq.s32.totalorder %v2443, %v2231
      %vm2772 = vcmp.eq.s32.totalorder %v2446, %v2231
      %vm2773 = vcmp.eq.s32.totalorder %v2449, %v2231
      %vm2774 = vcmp.eq.s32.totalorder %v2452, %v2231
      %vm2775 = vcmp.eq.s32.totalorder %v2455, %v2231
      %vm2776 = vcmp.eq.s32.totalorder %v2458, %v2231
      %vm2777 = vcmp.eq.s32.totalorder %v2461, %v2231
      %vm2778 = vcmp.eq.s32.totalorder %v2464, %v2231
      %vm2779 = vcmp.eq.s32.totalorder %v2467, %v2231
      %vm2780 = vcmp.eq.s32.totalorder %v2470, %v2231
      %vm2781 = vcmp.eq.s32.totalorder %v2473, %v2231
      %vm2782 = vcmp.eq.s32.totalorder %v2476, %v2231
      %vm2783 = vcmp.eq.s32.totalorder %v2479, %v2231
      %vm2784 = vcmp.eq.s32.totalorder %v2482, %v2231
      %vm2785 = vcmp.eq.s32.totalorder %v2485, %v2231
      %vm2786 = vcmp.eq.s32.totalorder %v2488, %v2231
      %vm2787 = vcmp.eq.s32.totalorder %v2491, %v2231
      %vm2788 = vcmp.eq.s32.totalorder %v2494, %v2231
      %vm2789 = vcmp.eq.s32.totalorder %v2497, %v2231
      %vm2790 = vcmp.eq.s32.totalorder %v2500, %v2231
      %vm2791 = vcmp.eq.s32.totalorder %v2503, %v2231
      %vm2792 = vcmp.eq.s32.totalorder %v2506, %v2231
      %vm2793 = vcmp.eq.s32.totalorder %v2509, %v2231
      %vm2794 = vcmp.eq.s32.totalorder %v2512, %v2231
      %vm2795 = vcmp.eq.s32.totalorder %v2515, %v2231
      %vm2796 = vcmp.eq.s32.totalorder %v2518, %v2231
      %vm2797 = vcmp.eq.s32.totalorder %v2521, %v2231
      %vm2798 = vcmp.eq.s32.totalorder %v2524, %v2231
      %vm2799 = vcmp.eq.s32.totalorder %v2527, %v2231
      %vm2800 = vcmp.eq.s32.totalorder %v2530, %v2231
      %vm2801 = vcmp.eq.s32.totalorder %v2533, %v2231
      %vm2802 = vcmp.eq.s32.totalorder %v2536, %v2231
      %vm2803 = vcmp.eq.s32.totalorder %v2539, %v2231
      %vm2804 = vcmp.eq.s32.totalorder %v2542, %v2231
      %vm2805 = vcmp.eq.s32.totalorder %v2545, %v2231
      %vm2806 = vcmp.eq.s32.totalorder %v2548, %v2231
      %vm2807 = vcmp.eq.s32.totalorder %v2551, %v2231
      %vm2808 = vcmp.eq.s32.totalorder %v2554, %v2231
      %vm2809 = vcmp.eq.s32.totalorder %v2557, %v2231
      %vm2810 = vcmp.eq.s32.totalorder %v2560, %v2231
      %vm2811 = vcmp.eq.s32.totalorder %v2563, %v2231
      %vm2812 = vcmp.eq.s32.totalorder %v2566, %v2231
      %vm2813 = vcmp.eq.s32.totalorder %v2569, %v2231
      %vm2814 = vcmp.eq.s32.totalorder %v2572, %v2231
      %vm2815 = vcmp.eq.s32.totalorder %v2575, %v2231
      %vm2816 = vcmp.eq.s32.totalorder %v2578, %v2231
      %vm2817 = vcmp.eq.s32.totalorder %v2581, %v2231
      %vm2818 = vcmp.eq.s32.totalorder %v2584, %v2231
      %vm2819 = vcmp.eq.s32.totalorder %v2587, %v2231
      %vm2820 = vcmp.eq.s32.totalorder %v2590, %v2231
      %vm2821 = vcmp.eq.s32.totalorder %v2593, %v2231
      %vm2822 = vcmp.eq.s32.totalorder %v2596, %v2231
      %vm2823 = vcmp.eq.s32.totalorder %v2599, %v2231
      %vm2824 = vcmp.eq.s32.totalorder %v2602, %v2231
      %vm2825 = vcmp.eq.s32.totalorder %v2605, %v2231
      %vm2826 = vcmp.eq.s32.totalorder %v2608, %v2231
      %vm2827 = vcmp.eq.s32.totalorder %v2611, %v2231
      %vm2828 = vcmp.eq.s32.totalorder %v2614, %v2231
      %vm2829 = vcmp.eq.s32.totalorder %v2617, %v2231
      %vm2830 = vcmp.eq.s32.totalorder %v2620, %v2231
      %vm2831 = vcmp.eq.s32.totalorder %v2623, %v2231
      %vm2832 = vcmp.eq.s32.totalorder %v2626, %v2231
      %vm2833 = vcmp.eq.s32.totalorder %v2629, %v2231
      %vm2834 = vcmp.eq.s32.totalorder %v2632, %v2231
      %vm2835 = vcmp.eq.s32.totalorder %v2635, %v2231
      %vm2836 = vcmp.eq.s32.totalorder %v2638, %v2231
      %vm2837 = vcmp.eq.s32.totalorder %v2641, %v2231
      %vm2838 = vcmp.eq.s32.totalorder %v2644, %v2231
      %vm2839 = vcmp.eq.s32.totalorder %v2647, %v2231
      %vm2840 = vcmp.eq.s32.totalorder %v2650, %v2231
      %vm2841 = vcmp.eq.s32.totalorder %v2653, %v2231
      %vm2842 = vcmp.eq.s32.totalorder %v2656, %v2231
      %vm2843 = vcmp.eq.s32.totalorder %v2659, %v2231
      %vm2844 = vcmp.eq.s32.totalorder %v2662, %v2231
      %vm2845 = vcmp.eq.s32.totalorder %v2665, %v2231
      %vm2846 = vcmp.eq.s32.totalorder %v2668, %v2231
      %vm2847 = vcmp.eq.s32.totalorder %v2671, %v2231
      %vm2848 = vcmp.eq.s32.totalorder %v2674, %v2231
      %vm2849 = vcmp.eq.s32.totalorder %v2677, %v2231
      %vm2850 = vcmp.eq.s32.totalorder %v2680, %v2231
      %vm2851 = vcmp.eq.s32.totalorder %v2683, %v2231
      %vm2852 = vcmp.eq.s32.totalorder %v2686, %v2231
      %vm2853 = vcmp.eq.s32.totalorder %v2689, %v2231
      %vm2854 = vcmp.eq.s32.totalorder %v2692, %v2231
      %vm2855 = vcmp.eq.s32.totalorder %v2695, %v2231
      %vm2856 = vcmp.eq.s32.totalorder %v2698, %v2231
      %vm2857 = vcmp.eq.s32.totalorder %v2701, %v2231
      %vm2858 = vcmp.eq.s32.totalorder %v2704, %v2231
      %vm2859 = vcmp.eq.s32.totalorder %v2707, %v2231
      %vm2860 = vcmp.eq.s32.totalorder %v2710, %v2231
      %vm2861 = vcmp.eq.s32.totalorder %v2713, %v2231
      %vm2862 = vcmp.eq.s32.totalorder %v2716, %v2231
      %vm2863 = vcmp.eq.s32.totalorder %v2719, %v2231
      %vm2864 = vcmp.eq.s32.totalorder %v2722, %v2231
      %vm2865 = vcmp.eq.s32.totalorder %v2725, %v2231
      %vm2866 = vcmp.eq.s32.totalorder %v2728, %v2231
      %vm2867 = vcmp.eq.s32.totalorder %v2731, %v2231
      %vm2868 = vcmp.eq.s32.totalorder %v2734, %v2231
      %vm2869 = vcmp.eq.s32.totalorder %v2737, %v2231
      %vm2870 = vcmp.eq.s32.totalorder %v2740, %v2231
      %vm2871 = vcmp.eq.s32.totalorder %v2743, %v2231
      %v2872 = vsel %vm2744, 1, 0
      %v2873 = vsel %vm2745, 1, 0
      %v2874 = vsel %vm2746, 1, 0
      %v2875 = vsel %vm2747, 1, 0
      %v2876 = vsel %vm2748, 1, 0
      %v2877 = vsel %vm2749, 1, 0
      %v2878 = vsel %vm2750, 1, 0
      %v2879 = vsel %vm2751, 1, 0
      %v2880 = vsel %vm2752, 1, 0
      %v2881 = vsel %vm2753, 1, 0
      %v2882 = vsel %vm2754, 1, 0
      %v2883 = vsel %vm2755, 1, 0
      %v2884 = vsel %vm2756, 1, 0
      %v2885 = vsel %vm2757, 1, 0
      %v2886 = vsel %vm2758, 1, 0
      %v2887 = vsel %vm2759, 1, 0
      %v2888 = vsel %vm2760, 1, 0
      %v2889 = vsel %vm2761, 1, 0
      %v2890 = vsel %vm2762, 1, 0
      %v2891 = vsel %vm2763, 1, 0
      %v2892 = vsel %vm2764, 1, 0
      %v2893 = vsel %vm2765, 1, 0
      %v2894 = vsel %vm2766, 1, 0
      %v2895 = vsel %vm2767, 1, 0
      %v2896 = vsel %vm2768, 1, 0
      %v2897 = vsel %vm2769, 1, 0
      %v2898 = vsel %vm2770, 1, 0
      %v2899 = vsel %vm2771, 1, 0
      %v2900 = vsel %vm2772, 1, 0
      %v2901 = vsel %vm2773, 1, 0
      %v2902 = vsel %vm2774, 1, 0
      %v2903 = vsel %vm2775, 1, 0
      %v2904 = vsel %vm2776, 1, 0
      %v2905 = vsel %vm2777, 1, 0
      %v2906 = vsel %vm2778, 1, 0
      %v2907 = vsel %vm2779, 1, 0
      %v2908 = vsel %vm2780, 1, 0
      %v2909 = vsel %vm2781, 1, 0
      %v2910 = vsel %vm2782, 1, 0
      %v2911 = vsel %vm2783, 1, 0
      %v2912 = vsel %vm2784, 1, 0
      %v2913 = vsel %vm2785, 1, 0
      %v2914 = vsel %vm2786, 1, 0
      %v2915 = vsel %vm2787, 1, 0
      %v2916 = vsel %vm2788, 1, 0
      %v2917 = vsel %vm2789, 1, 0
      %v2918 = vsel %vm2790, 1, 0
      %v2919 = vsel %vm2791, 1, 0
      %v2920 = vsel %vm2792, 1, 0
      %v2921 = vsel %vm2793, 1, 0
      %v2922 = vsel %vm2794, 1, 0
      %v2923 = vsel %vm2795, 1, 0
      %v2924 = vsel %vm2796, 1, 0
      %v2925 = vsel %vm2797, 1, 0
      %v2926 = vsel %vm2798, 1, 0
      %v2927 = vsel %vm2799, 1, 0
      %v2928 = vsel %vm2800, 1, 0
      %v2929 = vsel %vm2801, 1, 0
      %v2930 = vsel %vm2802, 1, 0
      %v2931 = vsel %vm2803, 1, 0
      %v2932 = vsel %vm2804, 1, 0
      %v2933 = vsel %vm2805, 1, 0
      %v2934 = vsel %vm2806, 1, 0
      %v2935 = vsel %vm2807, 1, 0
      %v2936 = vsel %vm2808, 1, 0
      %v2937 = vsel %vm2809, 1, 0
      %v2938 = vsel %vm2810, 1, 0
      %v2939 = vsel %vm2811, 1, 0
      %v2940 = vsel %vm2812, 1, 0
      %v2941 = vsel %vm2813, 1, 0
      %v2942 = vsel %vm2814, 1, 0
      %v2943 = vsel %vm2815, 1, 0
      %v2944 = vsel %vm2816, 1, 0
      %v2945 = vsel %vm2817, 1, 0
      %v2946 = vsel %vm2818, 1, 0
      %v2947 = vsel %vm2819, 1, 0
      %v2948 = vsel %vm2820, 1, 0
      %v2949 = vsel %vm2821, 1, 0
      %v2950 = vsel %vm2822, 1, 0
      %v2951 = vsel %vm2823, 1, 0
      %v2952 = vsel %vm2824, 1, 0
      %v2953 = vsel %vm2825, 1, 0
      %v2954 = vsel %vm2826, 1, 0
      %v2955 = vsel %vm2827, 1, 0
      %v2956 = vsel %vm2828, 1, 0
      %v2957 = vsel %vm2829, 1, 0
      %v2958 = vsel %vm2830, 1, 0
      %v2959 = vsel %vm2831, 1, 0
      %v2960 = vsel %vm2832, 1, 0
      %v2961 = vsel %vm2833, 1, 0
      %v2962 = vsel %vm2834, 1, 0
      %v2963 = vsel %vm2835, 1, 0
      %v2964 = vsel %vm2836, 1, 0
      %v2965 = vsel %vm2837, 1, 0
      %v2966 = vsel %vm2838, 1, 0
      %v2967 = vsel %vm2839, 1, 0
      %v2968 = vsel %vm2840, 1, 0
      %v2969 = vsel %vm2841, 1, 0
      %v2970 = vsel %vm2842, 1, 0
      %v2971 = vsel %vm2843, 1, 0
      %v2972 = vsel %vm2844, 1, 0
      %v2973 = vsel %vm2845, 1, 0
      %v2974 = vsel %vm2846, 1, 0
      %v2975 = vsel %vm2847, 1, 0
      %v2976 = vsel %vm2848, 1, 0
      %v2977 = vsel %vm2849, 1, 0
      %v2978 = vsel %vm2850, 1, 0
      %v2979 = vsel %vm2851, 1, 0
      %v2980 = vsel %vm2852, 1, 0
      %v2981 = vsel %vm2853, 1, 0
      %v2982 = vsel %vm2854, 1, 0
      %v2983 = vsel %vm2855, 1, 0
      %v2984 = vsel %vm2856, 1, 0
      %v2985 = vsel %vm2857, 1, 0
      %v2986 = vsel %vm2858, 1, 0
      %v2987 = vsel %vm2859, 1, 0
      %v2988 = vsel %vm2860, 1, 0
      %v2989 = vsel %vm2861, 1, 0
      %v2990 = vsel %vm2862, 1, 0
      %v2991 = vsel %vm2863, 1, 0
      %v2992 = vsel %vm2864, 1, 0
      %v2993 = vsel %vm2865, 1, 0
      %v2994 = vsel %vm2866, 1, 0
      %v2995 = vsel %vm2867, 1, 0
      %v2996 = vsel %vm2868, 1, 0
      %v2997 = vsel %vm2869, 1, 0
      %v2998 = vsel %vm2870, 1, 0
      %v2999 = vsel %vm2871, 1, 0
      %v3000 = vcvt.s32.f32 %v2872
      %v3001 = vcvt.s32.f32 %v2873
      %v3002 = vcvt.s32.f32 %v2874
      %v3003 = vcvt.s32.f32 %v2875
      %v3004 = vcvt.s32.f32 %v2876
      %v3005 = vcvt.s32.f32 %v2877
      %v3006 = vcvt.s32.f32 %v2878
      %v3007 = vcvt.s32.f32 %v2879
      %v3008 = vcvt.s32.f32 %v2880
      %v3009 = vcvt.s32.f32 %v2881
      %v3010 = vcvt.s32.f32 %v2882
      %v3011 = vcvt.s32.f32 %v2883
      %v3012 = vcvt.s32.f32 %v2884
      %v3013 = vcvt.s32.f32 %v2885
      %v3014 = vcvt.s32.f32 %v2886
      %v3015 = vcvt.s32.f32 %v2887
      %v3016 = vcvt.s32.f32 %v2888
      %v3017 = vcvt.s32.f32 %v2889
      %v3018 = vcvt.s32.f32 %v2890
      %v3019 = vcvt.s32.f32 %v2891
      %v3020 = vcvt.s32.f32 %v2892
      %v3021 = vcvt.s32.f32 %v2893
      %v3022 = vcvt.s32.f32 %v2894
      %v3023 = vcvt.s32.f32 %v2895
      %v3024 = vcvt.s32.f32 %v2896
      %v3025 = vcvt.s32.f32 %v2897
      %v3026 = vcvt.s32.f32 %v2898
      %v3027 = vcvt.s32.f32 %v2899
      %v3028 = vcvt.s32.f32 %v2900
      %v3029 = vcvt.s32.f32 %v2901
      %v3030 = vcvt.s32.f32 %v2902
      %v3031 = vcvt.s32.f32 %v2903
      %v3032 = vcvt.s32.f32 %v2904
      %v3033 = vcvt.s32.f32 %v2905
      %v3034 = vcvt.s32.f32 %v2906
      %v3035 = vcvt.s32.f32 %v2907
      %v3036 = vcvt.s32.f32 %v2908
      %v3037 = vcvt.s32.f32 %v2909
      %v3038 = vcvt.s32.f32 %v2910
      %v3039 = vcvt.s32.f32 %v2911
      %v3040 = vcvt.s32.f32 %v2912
      %v3041 = vcvt.s32.f32 %v2913
      %v3042 = vcvt.s32.f32 %v2914
      %v3043 = vcvt.s32.f32 %v2915
      %v3044 = vcvt.s32.f32 %v2916
      %v3045 = vcvt.s32.f32 %v2917
      %v3046 = vcvt.s32.f32 %v2918
      %v3047 = vcvt.s32.f32 %v2919
      %v3048 = vcvt.s32.f32 %v2920
      %v3049 = vcvt.s32.f32 %v2921
      %v3050 = vcvt.s32.f32 %v2922
      %v3051 = vcvt.s32.f32 %v2923
      %v3052 = vcvt.s32.f32 %v2924
      %v3053 = vcvt.s32.f32 %v2925
      %v3054 = vcvt.s32.f32 %v2926
      %v3055 = vcvt.s32.f32 %v2927
      %v3056 = vcvt.s32.f32 %v2928
      %v3057 = vcvt.s32.f32 %v2929
      %v3058 = vcvt.s32.f32 %v2930
      %v3059 = vcvt.s32.f32 %v2931
      %v3060 = vcvt.s32.f32 %v2932
      %v3061 = vcvt.s32.f32 %v2933
      %v3062 = vcvt.s32.f32 %v2934
      %v3063 = vcvt.s32.f32 %v2935
      %v3064 = vcvt.s32.f32 %v2936
      %v3065 = vcvt.s32.f32 %v2937
      %v3066 = vcvt.s32.f32 %v2938
      %v3067 = vcvt.s32.f32 %v2939
      %v3068 = vcvt.s32.f32 %v2940
      %v3069 = vcvt.s32.f32 %v2941
      %v3070 = vcvt.s32.f32 %v2942
      %v3071 = vcvt.s32.f32 %v2943
      %v3072 = vcvt.s32.f32 %v2944
      %v3073 = vcvt.s32.f32 %v2945
      %v3074 = vcvt.s32.f32 %v2946
      %v3075 = vcvt.s32.f32 %v2947
      %v3076 = vcvt.s32.f32 %v2948
      %v3077 = vcvt.s32.f32 %v2949
      %v3078 = vcvt.s32.f32 %v2950
      %v3079 = vcvt.s32.f32 %v2951
      %v3080 = vcvt.s32.f32 %v2952
      %v3081 = vcvt.s32.f32 %v2953
      %v3082 = vcvt.s32.f32 %v2954
      %v3083 = vcvt.s32.f32 %v2955
      %v3084 = vcvt.s32.f32 %v2956
      %v3085 = vcvt.s32.f32 %v2957
      %v3086 = vcvt.s32.f32 %v2958
      %v3087 = vcvt.s32.f32 %v2959
      %v3088 = vcvt.s32.f32 %v2960
      %v3089 = vcvt.s32.f32 %v2961
      %v3090 = vcvt.s32.f32 %v2962
      %v3091 = vcvt.s32.f32 %v2963
      %v3092 = vcvt.s32.f32 %v2964
      %v3093 = vcvt.s32.f32 %v2965
      %v3094 = vcvt.s32.f32 %v2966
      %v3095 = vcvt.s32.f32 %v2967
      %v3096 = vcvt.s32.f32 %v2968
      %v3097 = vcvt.s32.f32 %v2969
      %v3098 = vcvt.s32.f32 %v2970
      %v3099 = vcvt.s32.f32 %v2971
      %v3100 = vcvt.s32.f32 %v2972
      %v3101 = vcvt.s32.f32 %v2973
      %v3102 = vcvt.s32.f32 %v2974
      %v3103 = vcvt.s32.f32 %v2975
      %v3104 = vcvt.s32.f32 %v2976
      %v3105 = vcvt.s32.f32 %v2977
      %v3106 = vcvt.s32.f32 %v2978
      %v3107 = vcvt.s32.f32 %v2979
      %v3108 = vcvt.s32.f32 %v2980
      %v3109 = vcvt.s32.f32 %v2981
      %v3110 = vcvt.s32.f32 %v2982
      %v3111 = vcvt.s32.f32 %v2983
      %v3112 = vcvt.s32.f32 %v2984
      %v3113 = vcvt.s32.f32 %v2985
      %v3114 = vcvt.s32.f32 %v2986
      %v3115 = vcvt.s32.f32 %v2987
      %v3116 = vcvt.s32.f32 %v2988
      %v3117 = vcvt.s32.f32 %v2989
      %v3118 = vcvt.s32.f32 %v2990
      %v3119 = vcvt.s32.f32 %v2991
      %v3120 = vcvt.s32.f32 %v2992
      %v3121 = vcvt.s32.f32 %v2993
      %v3122 = vcvt.s32.f32 %v2994
      %v3123 = vcvt.s32.f32 %v2995
      %v3124 = vcvt.s32.f32 %v2996
      %v3125 = vcvt.s32.f32 %v2997
      %v3126 = vcvt.s32.f32 %v2998
      %v3127 = vcvt.s32.f32 %v2999
      %3129 = vset.pattern.permute.xlu0 0
      %3130 = vperm.xlu0 %3129, %v2102
      %v3131 = vpop.permute.xlu0 %3130
      %3134 = vset.pattern.permute.xlu0 0
      %3135 = vperm.xlu0 %3134, %v2103
      %v3136 = vpop.permute.xlu0 %3135
      %3139 = vset.pattern.permute.xlu0 0
      %3140 = vperm.xlu0 %3139, %v2104
      %v3141 = vpop.permute.xlu0 %3140
      %3144 = vset.pattern.permute.xlu0 0
      %3145 = vperm.xlu0 %3144, %v2105
      %v3146 = vpop.permute.xlu0 %3145
      %3149 = vset.pattern.permute.xlu0 0
      %3150 = vperm.xlu0 %3149, %v2106
      %v3151 = vpop.permute.xlu0 %3150
      %3154 = vset.pattern.permute.xlu0 0
      %3155 = vperm.xlu0 %3154, %v2107
      %v3156 = vpop.permute.xlu0 %3155
      %3159 = vset.pattern.permute.xlu0 0
      %3160 = vperm.xlu0 %3159, %v2108
      %v3161 = vpop.permute.xlu0 %3160
      %3164 = vset.pattern.permute.xlu0 0
      %3165 = vperm.xlu0 %3164, %v2109
      %v3166 = vpop.permute.xlu0 %3165
      %3169 = vset.pattern.permute.xlu0 0
      %3170 = vperm.xlu0 %3169, %v2110
      %v3171 = vpop.permute.xlu0 %3170
      %3174 = vset.pattern.permute.xlu0 0
      %3175 = vperm.xlu0 %3174, %v2111
      %v3176 = vpop.permute.xlu0 %3175
      %3179 = vset.pattern.permute.xlu0 0
      %3180 = vperm.xlu0 %3179, %v2112
      %v3181 = vpop.permute.xlu0 %3180
      %3184 = vset.pattern.permute.xlu0 0
      %3185 = vperm.xlu0 %3184, %v2113
      %v3186 = vpop.permute.xlu0 %3185
      %3189 = vset.pattern.permute.xlu0 0
      %3190 = vperm.xlu0 %3189, %v2114
      %v3191 = vpop.permute.xlu0 %3190
      %3194 = vset.pattern.permute.xlu0 0
      %3195 = vperm.xlu0 %3194, %v2115
      %v3196 = vpop.permute.xlu0 %3195
      %3199 = vset.pattern.permute.xlu0 0
      %3200 = vperm.xlu0 %3199, %v2116
      %v3201 = vpop.permute.xlu0 %3200
      %3204 = vset.pattern.permute.xlu0 0
      %3205 = vperm.xlu0 %3204, %v2117
      %v3206 = vpop.permute.xlu0 %3205
      %3209 = vset.pattern.permute.xlu0 0
      %3210 = vperm.xlu0 %3209, %v2118
      %v3211 = vpop.permute.xlu0 %3210
      %3214 = vset.pattern.permute.xlu0 0
      %3215 = vperm.xlu0 %3214, %v2119
      %v3216 = vpop.permute.xlu0 %3215
      %3219 = vset.pattern.permute.xlu0 0
      %3220 = vperm.xlu0 %3219, %v2120
      %v3221 = vpop.permute.xlu0 %3220
      %3224 = vset.pattern.permute.xlu0 0
      %3225 = vperm.xlu0 %3224, %v2121
      %v3226 = vpop.permute.xlu0 %3225
      %3229 = vset.pattern.permute.xlu0 0
      %3230 = vperm.xlu0 %3229, %v2122
      %v3231 = vpop.permute.xlu0 %3230
      %3234 = vset.pattern.permute.xlu0 0
      %3235 = vperm.xlu0 %3234, %v2123
      %v3236 = vpop.permute.xlu0 %3235
      %3239 = vset.pattern.permute.xlu0 0
      %3240 = vperm.xlu0 %3239, %v2124
      %v3241 = vpop.permute.xlu0 %3240
      %3244 = vset.pattern.permute.xlu0 0
      %3245 = vperm.xlu0 %3244, %v2125
      %v3246 = vpop.permute.xlu0 %3245
      %3249 = vset.pattern.permute.xlu0 0
      %3250 = vperm.xlu0 %3249, %v2126
      %v3251 = vpop.permute.xlu0 %3250
      %3254 = vset.pattern.permute.xlu0 0
      %3255 = vperm.xlu0 %3254, %v2127
      %v3256 = vpop.permute.xlu0 %3255
      %3259 = vset.pattern.permute.xlu0 0
      %3260 = vperm.xlu0 %3259, %v2128
      %v3261 = vpop.permute.xlu0 %3260
      %3264 = vset.pattern.permute.xlu0 0
      %3265 = vperm.xlu0 %3264, %v2129
      %v3266 = vpop.permute.xlu0 %3265
      %3269 = vset.pattern.permute.xlu0 0
      %3270 = vperm.xlu0 %3269, %v2130
      %v3271 = vpop.permute.xlu0 %3270
      %3274 = vset.pattern.permute.xlu0 0
      %3275 = vperm.xlu0 %3274, %v2131
      %v3276 = vpop.permute.xlu0 %3275
      %3279 = vset.pattern.permute.xlu0 0
      %3280 = vperm.xlu0 %3279, %v2132
      %v3281 = vpop.permute.xlu0 %3280
      %3284 = vset.pattern.permute.xlu0 0
      %3285 = vperm.xlu0 %3284, %v2133
      %v3286 = vpop.permute.xlu0 %3285
      %3289 = vset.pattern.permute.xlu0 0
      %3290 = vperm.xlu0 %3289, %v2134
      %v3291 = vpop.permute.xlu0 %3290
      %3294 = vset.pattern.permute.xlu0 0
      %3295 = vperm.xlu0 %3294, %v2135
      %v3296 = vpop.permute.xlu0 %3295
      %3299 = vset.pattern.permute.xlu0 0
      %3300 = vperm.xlu0 %3299, %v2136
      %v3301 = vpop.permute.xlu0 %3300
      %3304 = vset.pattern.permute.xlu0 0
      %3305 = vperm.xlu0 %3304, %v2137
      %v3306 = vpop.permute.xlu0 %3305
      %3309 = vset.pattern.permute.xlu0 0
      %3310 = vperm.xlu0 %3309, %v2138
      %v3311 = vpop.permute.xlu0 %3310
      %3314 = vset.pattern.permute.xlu0 0
      %3315 = vperm.xlu0 %3314, %v2139
      %v3316 = vpop.permute.xlu0 %3315
      %3319 = vset.pattern.permute.xlu0 0
      %3320 = vperm.xlu0 %3319, %v2140
      %v3321 = vpop.permute.xlu0 %3320
      %3324 = vset.pattern.permute.xlu0 0
      %3325 = vperm.xlu0 %3324, %v2141
      %v3326 = vpop.permute.xlu0 %3325
      %3329 = vset.pattern.permute.xlu0 0
      %3330 = vperm.xlu0 %3329, %v2142
      %v3331 = vpop.permute.xlu0 %3330
      %3334 = vset.pattern.permute.xlu0 0
      %3335 = vperm.xlu0 %3334, %v2143
      %v3336 = vpop.permute.xlu0 %3335
      %3339 = vset.pattern.permute.xlu0 0
      %3340 = vperm.xlu0 %3339, %v2144
      %v3341 = vpop.permute.xlu0 %3340
      %3344 = vset.pattern.permute.xlu0 0
      %3345 = vperm.xlu0 %3344, %v2145
      %v3346 = vpop.permute.xlu0 %3345
      %3349 = vset.pattern.permute.xlu0 0
      %3350 = vperm.xlu0 %3349, %v2146
      %v3351 = vpop.permute.xlu0 %3350
      %3354 = vset.pattern.permute.xlu0 0
      %3355 = vperm.xlu0 %3354, %v2147
      %v3356 = vpop.permute.xlu0 %3355
      %3359 = vset.pattern.permute.xlu0 0
      %3360 = vperm.xlu0 %3359, %v2148
      %v3361 = vpop.permute.xlu0 %3360
      %3364 = vset.pattern.permute.xlu0 0
      %3365 = vperm.xlu0 %3364, %v2149
      %v3366 = vpop.permute.xlu0 %3365
      %3369 = vset.pattern.permute.xlu0 0
      %3370 = vperm.xlu0 %3369, %v2150
      %v3371 = vpop.permute.xlu0 %3370
      %3374 = vset.pattern.permute.xlu0 0
      %3375 = vperm.xlu0 %3374, %v2151
      %v3376 = vpop.permute.xlu0 %3375
      %3379 = vset.pattern.permute.xlu0 0
      %3380 = vperm.xlu0 %3379, %v2152
      %v3381 = vpop.permute.xlu0 %3380
      %3384 = vset.pattern.permute.xlu0 0
      %3385 = vperm.xlu0 %3384, %v2153
      %v3386 = vpop.permute.xlu0 %3385
      %3389 = vset.pattern.permute.xlu0 0
      %3390 = vperm.xlu0 %3389, %v2154
      %v3391 = vpop.permute.xlu0 %3390
      %3394 = vset.pattern.permute.xlu0 0
      %3395 = vperm.xlu0 %3394, %v2155
      %v3396 = vpop.permute.xlu0 %3395
      %3399 = vset.pattern.permute.xlu0 0
      %3400 = vperm.xlu0 %3399, %v2156
      %v3401 = vpop.permute.xlu0 %3400
      %3404 = vset.pattern.permute.xlu0 0
      %3405 = vperm.xlu0 %3404, %v2157
      %v3406 = vpop.permute.xlu0 %3405
      %3409 = vset.pattern.permute.xlu0 0
      %3410 = vperm.xlu0 %3409, %v2158
      %v3411 = vpop.permute.xlu0 %3410
      %3414 = vset.pattern.permute.xlu0 0
      %3415 = vperm.xlu0 %3414, %v2159
      %v3416 = vpop.permute.xlu0 %3415
      %3419 = vset.pattern.permute.xlu0 0
      %3420 = vperm.xlu0 %3419, %v2160
      %v3421 = vpop.permute.xlu0 %3420
      %3424 = vset.pattern.permute.xlu0 0
      %3425 = vperm.xlu0 %3424, %v2161
      %v3426 = vpop.permute.xlu0 %3425
      %3429 = vset.pattern.permute.xlu0 0
      %3430 = vperm.xlu0 %3429, %v2162
      %v3431 = vpop.permute.xlu0 %3430
      %3434 = vset.pattern.permute.xlu0 0
      %3435 = vperm.xlu0 %3434, %v2163
      %v3436 = vpop.permute.xlu0 %3435
      %3439 = vset.pattern.permute.xlu0 0
      %3440 = vperm.xlu0 %3439, %v2164
      %v3441 = vpop.permute.xlu0 %3440
      %3444 = vset.pattern.permute.xlu0 0
      %3445 = vperm.xlu0 %3444, %v2165
      %v3446 = vpop.permute.xlu0 %3445
      %3449 = vset.pattern.permute.xlu0 0
      %3450 = vperm.xlu0 %3449, %v2166
      %v3451 = vpop.permute.xlu0 %3450
      %3454 = vset.pattern.permute.xlu0 0
      %3455 = vperm.xlu0 %3454, %v2167
      %v3456 = vpop.permute.xlu0 %3455
      %3459 = vset.pattern.permute.xlu0 0
      %3460 = vperm.xlu0 %3459, %v2168
      %v3461 = vpop.permute.xlu0 %3460
      %3464 = vset.pattern.permute.xlu0 0
      %3465 = vperm.xlu0 %3464, %v2169
      %v3466 = vpop.permute.xlu0 %3465
      %3469 = vset.pattern.permute.xlu0 0
      %3470 = vperm.xlu0 %3469, %v2170
      %v3471 = vpop.permute.xlu0 %3470
      %3474 = vset.pattern.permute.xlu0 0
      %3475 = vperm.xlu0 %3474, %v2171
      %v3476 = vpop.permute.xlu0 %3475
      %3479 = vset.pattern.permute.xlu0 0
      %3480 = vperm.xlu0 %3479, %v2172
      %v3481 = vpop.permute.xlu0 %3480
      %3484 = vset.pattern.permute.xlu0 0
      %3485 = vperm.xlu0 %3484, %v2173
      %v3486 = vpop.permute.xlu0 %3485
      %3489 = vset.pattern.permute.xlu0 0
      %3490 = vperm.xlu0 %3489, %v2174
      %v3491 = vpop.permute.xlu0 %3490
      %3494 = vset.pattern.permute.xlu0 0
      %3495 = vperm.xlu0 %3494, %v2175
      %v3496 = vpop.permute.xlu0 %3495
      %3499 = vset.pattern.permute.xlu0 0
      %3500 = vperm.xlu0 %3499, %v2176
      %v3501 = vpop.permute.xlu0 %3500
      %3504 = vset.pattern.permute.xlu0 0
      %3505 = vperm.xlu0 %3504, %v2177
      %v3506 = vpop.permute.xlu0 %3505
      %3509 = vset.pattern.permute.xlu0 0
      %3510 = vperm.xlu0 %3509, %v2178
      %v3511 = vpop.permute.xlu0 %3510
      %3514 = vset.pattern.permute.xlu0 0
      %3515 = vperm.xlu0 %3514, %v2179
      %v3516 = vpop.permute.xlu0 %3515
      %3519 = vset.pattern.permute.xlu0 0
      %3520 = vperm.xlu0 %3519, %v2180
      %v3521 = vpop.permute.xlu0 %3520
      %3524 = vset.pattern.permute.xlu0 0
      %3525 = vperm.xlu0 %3524, %v2181
      %v3526 = vpop.permute.xlu0 %3525
      %3529 = vset.pattern.permute.xlu0 0
      %3530 = vperm.xlu0 %3529, %v2182
      %v3531 = vpop.permute.xlu0 %3530
      %3534 = vset.pattern.permute.xlu0 0
      %3535 = vperm.xlu0 %3534, %v2183
      %v3536 = vpop.permute.xlu0 %3535
      %3539 = vset.pattern.permute.xlu0 0
      %3540 = vperm.xlu0 %3539, %v2184
      %v3541 = vpop.permute.xlu0 %3540
      %3544 = vset.pattern.permute.xlu0 0
      %3545 = vperm.xlu0 %3544, %v2185
      %v3546 = vpop.permute.xlu0 %3545
      %3549 = vset.pattern.permute.xlu0 0
      %3550 = vperm.xlu0 %3549, %v2186
      %v3551 = vpop.permute.xlu0 %3550
      %3554 = vset.pattern.permute.xlu0 0
      %3555 = vperm.xlu0 %3554, %v2187
      %v3556 = vpop.permute.xlu0 %3555
      %3559 = vset.pattern.permute.xlu0 0
      %3560 = vperm.xlu0 %3559, %v2188
      %v3561 = vpop.permute.xlu0 %3560
      %3564 = vset.pattern.permute.xlu0 0
      %3565 = vperm.xlu0 %3564, %v2189
      %v3566 = vpop.permute.xlu0 %3565
      %3569 = vset.pattern.permute.xlu0 0
      %3570 = vperm.xlu0 %3569, %v2190
      %v3571 = vpop.permute.xlu0 %3570
      %3574 = vset.pattern.permute.xlu0 0
      %3575 = vperm.xlu0 %3574, %v2191
      %v3576 = vpop.permute.xlu0 %3575
      %3579 = vset.pattern.permute.xlu0 0
      %3580 = vperm.xlu0 %3579, %v2192
      %v3581 = vpop.permute.xlu0 %3580
      %3584 = vset.pattern.permute.xlu0 0
      %3585 = vperm.xlu0 %3584, %v2193
      %v3586 = vpop.permute.xlu0 %3585
      %3589 = vset.pattern.permute.xlu0 0
      %3590 = vperm.xlu0 %3589, %v2194
      %v3591 = vpop.permute.xlu0 %3590
      %3594 = vset.pattern.permute.xlu0 0
      %3595 = vperm.xlu0 %3594, %v2195
      %v3596 = vpop.permute.xlu0 %3595
      %3599 = vset.pattern.permute.xlu0 0
      %3600 = vperm.xlu0 %3599, %v2196
      %v3601 = vpop.permute.xlu0 %3600
      %3604 = vset.pattern.permute.xlu0 0
      %3605 = vperm.xlu0 %3604, %v2197
      %v3606 = vpop.permute.xlu0 %3605
      %3609 = vset.pattern.permute.xlu0 0
      %3610 = vperm.xlu0 %3609, %v2198
      %v3611 = vpop.permute.xlu0 %3610
      %3614 = vset.pattern.permute.xlu0 0
      %3615 = vperm.xlu0 %3614, %v2199
      %v3616 = vpop.permute.xlu0 %3615
      %3619 = vset.pattern.permute.xlu0 0
      %3620 = vperm.xlu0 %3619, %v2200
      %v3621 = vpop.permute.xlu0 %3620
      %3624 = vset.pattern.permute.xlu0 0
      %3625 = vperm.xlu0 %3624, %v2201
      %v3626 = vpop.permute.xlu0 %3625
      %3629 = vset.pattern.permute.xlu0 0
      %3630 = vperm.xlu0 %3629, %v2202
      %v3631 = vpop.permute.xlu0 %3630
      %3634 = vset.pattern.permute.xlu0 0
      %3635 = vperm.xlu0 %3634, %v2203
      %v3636 = vpop.permute.xlu0 %3635
      %3639 = vset.pattern.permute.xlu0 0
      %3640 = vperm.xlu0 %3639, %v2204
      %v3641 = vpop.permute.xlu0 %3640
      %3644 = vset.pattern.permute.xlu0 0
      %3645 = vperm.xlu0 %3644, %v2205
      %v3646 = vpop.permute.xlu0 %3645
      %3649 = vset.pattern.permute.xlu0 0
      %3650 = vperm.xlu0 %3649, %v2206
      %v3651 = vpop.permute.xlu0 %3650
      %3654 = vset.pattern.permute.xlu0 0
      %3655 = vperm.xlu0 %3654, %v2207
      %v3656 = vpop.permute.xlu0 %3655
      %3659 = vset.pattern.permute.xlu0 0
      %3660 = vperm.xlu0 %3659, %v2208
      %v3661 = vpop.permute.xlu0 %3660
      %3664 = vset.pattern.permute.xlu0 0
      %3665 = vperm.xlu0 %3664, %v2209
      %v3666 = vpop.permute.xlu0 %3665
      %3669 = vset.pattern.permute.xlu0 0
      %3670 = vperm.xlu0 %3669, %v2210
      %v3671 = vpop.permute.xlu0 %3670
      %3674 = vset.pattern.permute.xlu0 0
      %3675 = vperm.xlu0 %3674, %v2211
      %v3676 = vpop.permute.xlu0 %3675
      %3679 = vset.pattern.permute.xlu0 0
      %3680 = vperm.xlu0 %3679, %v2212
      %v3681 = vpop.permute.xlu0 %3680
      %3684 = vset.pattern.permute.xlu0 0
      %3685 = vperm.xlu0 %3684, %v2213
      %v3686 = vpop.permute.xlu0 %3685
      %3689 = vset.pattern.permute.xlu0 0
      %3690 = vperm.xlu0 %3689, %v2214
      %v3691 = vpop.permute.xlu0 %3690
      %3694 = vset.pattern.permute.xlu0 0
      %3695 = vperm.xlu0 %3694, %v2215
      %v3696 = vpop.permute.xlu0 %3695
      %3699 = vset.pattern.permute.xlu0 0
      %3700 = vperm.xlu0 %3699, %v2216
      %v3701 = vpop.permute.xlu0 %3700
      %3704 = vset.pattern.permute.xlu0 0
      %3705 = vperm.xlu0 %3704, %v2217
      %v3706 = vpop.permute.xlu0 %3705
      %3709 = vset.pattern.permute.xlu0 0
      %3710 = vperm.xlu0 %3709, %v2218
      %v3711 = vpop.permute.xlu0 %3710
      %3714 = vset.pattern.permute.xlu0 0
      %3715 = vperm.xlu0 %3714, %v2219
      %v3716 = vpop.permute.xlu0 %3715
      %3719 = vset.pattern.permute.xlu0 0
      %3720 = vperm.xlu0 %3719, %v2220
      %v3721 = vpop.permute.xlu0 %3720
      %3724 = vset.pattern.permute.xlu0 0
      %3725 = vperm.xlu0 %3724, %v2221
      %v3726 = vpop.permute.xlu0 %3725
      %3729 = vset.pattern.permute.xlu0 0
      %3730 = vperm.xlu0 %3729, %v2222
      %v3731 = vpop.permute.xlu0 %3730
      %3734 = vset.pattern.permute.xlu0 0
      %3735 = vperm.xlu0 %3734, %v2223
      %v3736 = vpop.permute.xlu0 %3735
      %3739 = vset.pattern.permute.xlu0 0
      %3740 = vperm.xlu0 %3739, %v2224
      %v3741 = vpop.permute.xlu0 %3740
      %3744 = vset.pattern.permute.xlu0 0
      %3745 = vperm.xlu0 %3744, %v2225
      %v3746 = vpop.permute.xlu0 %3745
      %3749 = vset.pattern.permute.xlu0 0
      %3750 = vperm.xlu0 %3749, %v2226
      %v3751 = vpop.permute.xlu0 %3750
      %3754 = vset.pattern.permute.xlu0 0
      %3755 = vperm.xlu0 %3754, %v2227
      %v3756 = vpop.permute.xlu0 %3755
      %3759 = vset.pattern.permute.xlu0 0
      %3760 = vperm.xlu0 %3759, %v2228
      %v3761 = vpop.permute.xlu0 %3760
      %3764 = vset.pattern.permute.xlu0 0
      %3765 = vperm.xlu0 %3764, %v2229
      %v3766 = vpop.permute.xlu0 %3765
      %v3768 = vmul.f32 %v3131, %v3000
      %v3769 = vmul.f32 %v3136, %v3001
      %v3770 = vmul.f32 %v3141, %v3002
      %v3771 = vmul.f32 %v3146, %v3003
      %v3772 = vmul.f32 %v3151, %v3004
      %v3773 = vmul.f32 %v3156, %v3005
      %v3774 = vmul.f32 %v3161, %v3006
      %v3775 = vmul.f32 %v3166, %v3007
      %v3776 = vmul.f32 %v3171, %v3008
      %v3777 = vmul.f32 %v3176, %v3009
      %v3778 = vmul.f32 %v3181, %v3010
      %v3779 = vmul.f32 %v3186, %v3011
      %v3780 = vmul.f32 %v3191, %v3012
      %v3781 = vmul.f32 %v3196, %v3013
      %v3782 = vmul.f32 %v3201, %v3014
      %v3783 = vmul.f32 %v3206, %v3015
      %v3784 = vmul.f32 %v3211, %v3016
      %v3785 = vmul.f32 %v3216, %v3017
      %v3786 = vmul.f32 %v3221, %v3018
      %v3787 = vmul.f32 %v3226, %v3019
      %v3788 = vmul.f32 %v3231, %v3020
      %v3789 = vmul.f32 %v3236, %v3021
      %v3790 = vmul.f32 %v3241, %v3022
      %v3791 = vmul.f32 %v3246, %v3023
      %v3792 = vmul.f32 %v3251, %v3024
      %v3793 = vmul.f32 %v3256, %v3025
      %v3794 = vmul.f32 %v3261, %v3026
      %v3795 = vmul.f32 %v3266, %v3027
      %v3796 = vmul.f32 %v3271, %v3028
      %v3797 = vmul.f32 %v3276, %v3029
      %v3798 = vmul.f32 %v3281, %v3030
      %v3799 = vmul.f32 %v3286, %v3031
      %v3800 = vmul.f32 %v3291, %v3032
      %v3801 = vmul.f32 %v3296, %v3033
      %v3802 = vmul.f32 %v3301, %v3034
      %v3803 = vmul.f32 %v3306, %v3035
      %v3804 = vmul.f32 %v3311, %v3036
      %v3805 = vmul.f32 %v3316, %v3037
      %v3806 = vmul.f32 %v3321, %v3038
      %v3807 = vmul.f32 %v3326, %v3039
      %v3808 = vmul.f32 %v3331, %v3040
      %v3809 = vmul.f32 %v3336, %v3041
      %v3810 = vmul.f32 %v3341, %v3042
      %v3811 = vmul.f32 %v3346, %v3043
      %v3812 = vmul.f32 %v3351, %v3044
      %v3813 = vmul.f32 %v3356, %v3045
      %v3814 = vmul.f32 %v3361, %v3046
      %v3815 = vmul.f32 %v3366, %v3047
      %v3816 = vmul.f32 %v3371, %v3048
      %v3817 = vmul.f32 %v3376, %v3049
      %v3818 = vmul.f32 %v3381, %v3050
      %v3819 = vmul.f32 %v3386, %v3051
      %v3820 = vmul.f32 %v3391, %v3052
      %v3821 = vmul.f32 %v3396, %v3053
      %v3822 = vmul.f32 %v3401, %v3054
      %v3823 = vmul.f32 %v3406, %v3055
      %v3824 = vmul.f32 %v3411, %v3056
      %v3825 = vmul.f32 %v3416, %v3057
      %v3826 = vmul.f32 %v3421, %v3058
      %v3827 = vmul.f32 %v3426, %v3059
      %v3828 = vmul.f32 %v3431, %v3060
      %v3829 = vmul.f32 %v3436, %v3061
      %v3830 = vmul.f32 %v3441, %v3062
      %v3831 = vmul.f32 %v3446, %v3063
      %v3832 = vmul.f32 %v3451, %v3064
      %v3833 = vmul.f32 %v3456, %v3065
      %v3834 = vmul.f32 %v3461, %v3066
      %v3835 = vmul.f32 %v3466, %v3067
      %v3836 = vmul.f32 %v3471, %v3068
      %v3837 = vmul.f32 %v3476, %v3069
      %v3838 = vmul.f32 %v3481, %v3070
      %v3839 = vmul.f32 %v3486, %v3071
      %v3840 = vmul.f32 %v3491, %v3072
      %v3841 = vmul.f32 %v3496, %v3073
      %v3842 = vmul.f32 %v3501, %v3074
      %v3843 = vmul.f32 %v3506, %v3075
      %v3844 = vmul.f32 %v3511, %v3076
      %v3845 = vmul.f32 %v3516, %v3077
      %v3846 = vmul.f32 %v3521, %v3078
      %v3847 = vmul.f32 %v3526, %v3079
      %v3848 = vmul.f32 %v3531, %v3080
      %v3849 = vmul.f32 %v3536, %v3081
      %v3850 = vmul.f32 %v3541, %v3082
      %v3851 = vmul.f32 %v3546, %v3083
      %v3852 = vmul.f32 %v3551, %v3084
      %v3853 = vmul.f32 %v3556, %v3085
      %v3854 = vmul.f32 %v3561, %v3086
      %v3855 = vmul.f32 %v3566, %v3087
      %v3856 = vmul.f32 %v3571, %v3088
      %v3857 = vmul.f32 %v3576, %v3089
      %v3858 = vmul.f32 %v3581, %v3090
      %v3859 = vmul.f32 %v3586, %v3091
      %v3860 = vmul.f32 %v3591, %v3092
      %v3861 = vmul.f32 %v3596, %v3093
      %v3862 = vmul.f32 %v3601, %v3094
      %v3863 = vmul.f32 %v3606, %v3095
      %v3864 = vmul.f32 %v3611, %v3096
      %v3865 = vmul.f32 %v3616, %v3097
      %v3866 = vmul.f32 %v3621, %v3098
      %v3867 = vmul.f32 %v3626, %v3099
      %v3868 = vmul.f32 %v3631, %v3100
      %v3869 = vmul.f32 %v3636, %v3101
      %v3870 = vmul.f32 %v3641, %v3102
      %v3871 = vmul.f32 %v3646, %v3103
      %v3872 = vmul.f32 %v3651, %v3104
      %v3873 = vmul.f32 %v3656, %v3105
      %v3874 = vmul.f32 %v3661, %v3106
      %v3875 = vmul.f32 %v3666, %v3107
      %v3876 = vmul.f32 %v3671, %v3108
      %v3877 = vmul.f32 %v3676, %v3109
      %v3878 = vmul.f32 %v3681, %v3110
      %v3879 = vmul.f32 %v3686, %v3111
      %v3880 = vmul.f32 %v3691, %v3112
      %v3881 = vmul.f32 %v3696, %v3113
      %v3882 = vmul.f32 %v3701, %v3114
      %v3883 = vmul.f32 %v3706, %v3115
      %v3884 = vmul.f32 %v3711, %v3116
      %v3885 = vmul.f32 %v3716, %v3117
      %v3886 = vmul.f32 %v3721, %v3118
      %v3887 = vmul.f32 %v3726, %v3119
      %v3888 = vmul.f32 %v3731, %v3120
      %v3889 = vmul.f32 %v3736, %v3121
      %v3890 = vmul.f32 %v3741, %v3122
      %v3891 = vmul.f32 %v3746, %v3123
      %v3892 = vmul.f32 %v3751, %v3124
      %v3893 = vmul.f32 %v3756, %v3125
      %v3894 = vmul.f32 %v3761, %v3126
      %v3895 = vmul.f32 %v3766, %v3127
      %v3896 = vadd.f32 %v3768, %v3769
      %v3897 = vadd.f32 %v3896, %v3770
      %v3898 = vadd.f32 %v3897, %v3771
      %v3899 = vadd.f32 %v3898, %v3772
      %v3900 = vadd.f32 %v3899, %v3773
      %v3901 = vadd.f32 %v3900, %v3774
      %v3902 = vadd.f32 %v3901, %v3775
      %v3903 = vadd.f32 %v3902, %v3776
      %v3904 = vadd.f32 %v3903, %v3777
      %v3905 = vadd.f32 %v3904, %v3778
      %v3906 = vadd.f32 %v3905, %v3779
      %v3907 = vadd.f32 %v3906, %v3780
      %v3908 = vadd.f32 %v3907, %v3781
      %v3909 = vadd.f32 %v3908, %v3782
      %v3910 = vadd.f32 %v3909, %v3783
      %v3911 = vadd.f32 %v3910, %v3784
      %v3912 = vadd.f32 %v3911, %v3785
      %v3913 = vadd.f32 %v3912, %v3786
      %v3914 = vadd.f32 %v3913, %v3787
      %v3915 = vadd.f32 %v3914, %v3788
      %v3916 = vadd.f32 %v3915, %v3789
      %v3917 = vadd.f32 %v3916, %v3790
      %v3918 = vadd.f32 %v3917, %v3791
      %v3919 = vadd.f32 %v3918, %v3792
      %v3920 = vadd.f32 %v3919, %v3793
      %v3921 = vadd.f32 %v3920, %v3794
      %v3922 = vadd.f32 %v3921, %v3795
      %v3923 = vadd.f32 %v3922, %v3796
      %v3924 = vadd.f32 %v3923, %v3797
      %v3925 = vadd.f32 %v3924, %v3798
      %v3926 = vadd.f32 %v3925, %v3799
      %v3927 = vadd.f32 %v3926, %v3800
      %v3928 = vadd.f32 %v3927, %v3801
      %v3929 = vadd.f32 %v3928, %v3802
      %v3930 = vadd.f32 %v3929, %v3803
      %v3931 = vadd.f32 %v3930, %v3804
      %v3932 = vadd.f32 %v3931, %v3805
      %v3933 = vadd.f32 %v3932, %v3806
      %v3934 = vadd.f32 %v3933, %v3807
      %v3935 = vadd.f32 %v3934, %v3808
      %v3936 = vadd.f32 %v3935, %v3809
      %v3937 = vadd.f32 %v3936, %v3810
      %v3938 = vadd.f32 %v3937, %v3811
      %v3939 = vadd.f32 %v3938, %v3812
      %v3940 = vadd.f32 %v3939, %v3813
      %v3941 = vadd.f32 %v3940, %v3814
      %v3942 = vadd.f32 %v3941, %v3815
      %v3943 = vadd.f32 %v3942, %v3816
      %v3944 = vadd.f32 %v3943, %v3817
      %v3945 = vadd.f32 %v3944, %v3818
      %v3946 = vadd.f32 %v3945, %v3819
      %v3947 = vadd.f32 %v3946, %v3820
      %v3948 = vadd.f32 %v3947, %v3821
      %v3949 = vadd.f32 %v3948, %v3822
      %v3950 = vadd.f32 %v3949, %v3823
      %v3951 = vadd.f32 %v3950, %v3824
      %v3952 = vadd.f32 %v3951, %v3825
      %v3953 = vadd.f32 %v3952, %v3826
      %v3954 = vadd.f32 %v3953, %v3827
      %v3955 = vadd.f32 %v3954, %v3828
      %v3956 = vadd.f32 %v3955, %v3829
      %v3957 = vadd.f32 %v3956, %v3830
      %v3958 = vadd.f32 %v3957, %v3831
      %v3959 = vadd.f32 %v3958, %v3832
      %v3960 = vadd.f32 %v3959, %v3833
      %v3961 = vadd.f32 %v3960, %v3834
      %v3962 = vadd.f32 %v3961, %v3835
      %v3963 = vadd.f32 %v3962, %v3836
      %v3964 = vadd.f32 %v3963, %v3837
      %v3965 = vadd.f32 %v3964, %v3838
      %v3966 = vadd.f32 %v3965, %v3839
      %v3967 = vadd.f32 %v3966, %v3840
      %v3968 = vadd.f32 %v3967, %v3841
      %v3969 = vadd.f32 %v3968, %v3842
      %v3970 = vadd.f32 %v3969, %v3843
      %v3971 = vadd.f32 %v3970, %v3844
      %v3972 = vadd.f32 %v3971, %v3845
      %v3973 = vadd.f32 %v3972, %v3846
      %v3974 = vadd.f32 %v3973, %v3847
      %v3975 = vadd.f32 %v3974, %v3848
      %v3976 = vadd.f32 %v3975, %v3849
      %v3977 = vadd.f32 %v3976, %v3850
      %v3978 = vadd.f32 %v3977, %v3851
      %v3979 = vadd.f32 %v3978, %v3852
      %v3980 = vadd.f32 %v3979, %v3853
      %v3981 = vadd.f32 %v3980, %v3854
      %v3982 = vadd.f32 %v3981, %v3855
      %v3983 = vadd.f32 %v3982, %v3856
      %v3984 = vadd.f32 %v3983, %v3857
      %v3985 = vadd.f32 %v3984, %v3858
      %v3986 = vadd.f32 %v3985, %v3859
      %v3987 = vadd.f32 %v3986, %v3860
      %v3988 = vadd.f32 %v3987, %v3861
      %v3989 = vadd.f32 %v3988, %v3862
      %v3990 = vadd.f32 %v3989, %v3863
      %v3991 = vadd.f32 %v3990, %v3864
      %v3992 = vadd.f32 %v3991, %v3865
      %v3993 = vadd.f32 %v3992, %v3866
      %v3994 = vadd.f32 %v3993, %v3867
      %v3995 = vadd.f32 %v3994, %v3868
      %v3996 = vadd.f32 %v3995, %v3869
      %v3997 = vadd.f32 %v3996, %v3870
      %v3998 = vadd.f32 %v3997, %v3871
      %v3999 = vadd.f32 %v3998, %v3872
      %v4000 = vadd.f32 %v3999, %v3873
      %v4001 = vadd.f32 %v4000, %v3874
      %v4002 = vadd.f32 %v4001, %v3875
      %v4003 = vadd.f32 %v4002, %v3876
      %v4004 = vadd.f32 %v4003, %v3877
      %v4005 = vadd.f32 %v4004, %v3878
      %v4006 = vadd.f32 %v4005, %v3879
      %v4007 = vadd.f32 %v4006, %v3880
      %v4008 = vadd.f32 %v4007, %v3881
      %v4009 = vadd.f32 %v4008, %v3882
      %v4010 = vadd.f32 %v4009, %v3883
      %v4011 = vadd.f32 %v4010, %v3884
      %v4012 = vadd.f32 %v4011, %v3885
      %v4013 = vadd.f32 %v4012, %v3886
      %v4014 = vadd.f32 %v4013, %v3887
      %v4015 = vadd.f32 %v4014, %v3888
      %v4016 = vadd.f32 %v4015, %v3889
      %v4017 = vadd.f32 %v4016, %v3890
      %v4018 = vadd.f32 %v4017, %v3891
      %v4019 = vadd.f32 %v4018, %v3892
      %v4020 = vadd.f32 %v4019, %v3893
      %v4021 = vadd.f32 %v4020, %v3894
      %v4022 = vadd.f32 %v4021, %v3895
      %v4023 = vrot.slane %v4022, 4
      %v4024 = vadd.f32 %v4022, %v4023
      %v4025 = vrot.slane %v4024, 2
      %v4026 = vadd.f32 %v4024, %v4025
      %v4027 = vrot.slane %v4026, 1
      %v4028 = vadd.f32 %v4026, %v4027
      %4029 = vst [vmem:[%s324] sm:$0x1] %v4028
      %p4030 = scmp.lt.s32.totalorder %s19, 1
      %s4031 = scalar_select %p4030, %s19, 1
      %s4032 = scalar_lea.vmem %s7, %s4031
      // Predicated region
      $region49: #{_forward_core.1} parent=47 // pred_check
        %p4033 = pneg %p199
      $region50: #{_forward_core.1} parent=47 // pred_check_branch
        %4035 = sbr.rel (%p4033) target = $region52
      $region51: #{_forward_core.1} parent=47 // pred_region
        _
      $region52: #{_forward_core.1} parent=47 // pred_fallthru
        _
    $region48: #{_forward_core.1} parent=5 // pred_fallthru
      _
    %p4036 = scmp.le.s32.totalorder 2, %s14
    // Predicated region
    $region53: #{_forward_core.1} parent=5 // pred_check
      %p4037 = pneg %p4036
    $region54: #{_forward_core.1} parent=5 // pred_check_branch
      %4039 = sbr.rel (%p4037) target = $region56
    $region55: #{_forward_core.1} parent=5 // pred_region
      %s4040 = ssub.s32 %s14, 2
      // Predicated region
      $region57: #{_forward_core.1} parent=55 // pred_check
        %p4041 = pneg %p205
      $region58: #{_forward_core.1} parent=55 // pred_check_branch
        %4043 = sbr.rel (%p4041) target = $region60
      $region59: #{_forward_core.1} parent=55 // pred_region
        %p4044 = scmp.lt.s32.totalorder %s20, 1
        %s4045 = scalar_select %p4044, %s20, 1
        %s4046 = scalar_lea.vmem %s7, %s4045
      $region60: #{_forward_core.1} parent=55 // pred_fallthru
        _
    $region56: #{_forward_core.1} parent=5 // pred_fallthru
      _
  $region6: #{_forward_core.1} parent=0 // loop_footer
    %s18 = sadd.s32 1, %s14
  $region7: #{_forward_core.1} parent=0 // loop_footer_branch
    %13 = sbr.rel target = $region3
  $region8: #{_forward_core.1} parent=0 // loop_exit
    _

</llo_original>
